<compile_context>
chip_gen: v6e
topology: v6e:2x2x1
jax: 0.10.0
libtpu: 0.0.40
codegen_flags: <defaults>
</compile_context>

<pallas_src>
import functools

import jax
import jax.numpy as jnp
from jax import lax
from jax.experimental import pallas as pl
from jax.experimental.pallas import tpu as pltpu


# ----------------------------------------------------------------------------
# Pallas kernel: attention for one block of `b_blk` batch elements.
# ----------------------------------------------------------------------------
def _attention_kernel(x_ref, wqkv_ref, bqkv_ref, wp_ref, bp_ref, bias_ref,
                      out_ref, *rest, b_blk, n_tokens, num_heads, head_dim,
                      return_attn):
    if return_attn:
        attn_ref, qkv_ref = rest
    else:
        attn_ref = None
        (qkv_ref,) = rest

    N = n_tokens
    C = num_heads * head_dim

    # Fused QKV projection over the whole batch block: [M, C] x [C, 3C]
    # (bf16 MXU operands, f32 accumulation, scale pre-folded into Wq / bq).
    # Stashed in a VMEM scratch so the batch loop can slice it dynamically.
    qkv = jnp.dot(x_ref[...], wqkv_ref[...],
                  preferred_element_type=jnp.float32) + bqkv_ref[...]
    qkv_ref[...] = qkv.astype(jnp.bfloat16)

    # contract last dim of q with last dim of k (q @ k^T, no explicit .T)
    qk_dims = (((1,), (1,)), ((), ()))

    def per_batch(b, carry):
        row0 = pl.multiple_of(b * N, N)
        qkv_b = qkv_ref[pl.ds(row0, N), :]                  # [N, 3C] bf16

        acc = jnp.zeros((N, C), jnp.float32)
        attn_parts = []
        for h in range(num_heads):                          # small static unroll
            lo = h * head_dim
            qh = qkv_b[:, lo:lo + head_dim]                 # [N, hd] bf16
            kh = qkv_b[:, C + lo:C + lo + head_dim]
            vh = qkv_b[:, 2 * C + lo:2 * C + lo + head_dim]

            # scores + relative position bias (f32)
            s = lax.dot_general(qh, kh, dimension_numbers=qk_dims,
                                preferred_element_type=jnp.float32)  # [N, N]
            s = s + bias_ref[h].astype(jnp.float32)

            # numerically stable softmax in f32; divide via EUP reciprocal
            m = jnp.max(s, axis=-1, keepdims=True)
            p = jnp.exp(s - m)
            l = jnp.sum(p, axis=-1, keepdims=True)
            a = (p * pl.reciprocal(l, approx=True)).astype(jnp.bfloat16)
            if return_attn:
                attn_parts.append(a)

            # Fold the per-head attention output straight into the output
            # projection: acc += (a @ v_h) @ Wp[h].  No head concatenation,
            # no width-8 lane stores, no f32 o-scratch.
            oh = jnp.dot(a, vh, preferred_element_type=jnp.float32)  # [N, hd]
            acc = acc + jnp.dot(oh.astype(jnp.bfloat16),
                                wp_ref[lo:lo + head_dim, :],
                                preferred_element_type=jnp.float32)

        if return_attn:
            # One lane-dense [N, heads*N] store (unmasked when heads*N % 128 == 0).
            attn_ref[pl.ds(row0, N), :] = jnp.concatenate(attn_parts, axis=-1)

        out_ref[pl.ds(row0, N), :] = (acc + bp_ref[...]).astype(out_ref.dtype)
        return carry

    lax.fori_loop(0, b_blk, per_batch, 0)


# ----------------------------------------------------------------------------
# VMEM budgeting for the batch-block size
# ----------------------------------------------------------------------------
_VMEM_BUDGET_BYTES = 40 * 1024 * 1024   # fits v7x's 64 MiB VMEM with headroom


def _block_vmem_bytes(b_blk, N, C, num_heads, return_attn):
    """Rough per-grid-step VMEM footprint (pipeline blocks double-buffered)."""
    M = b_blk * N
    total = 2 * M * C * 2                       # x block (bf16), 2 buffers
    total += 2 * M * C * 4                      # out block (<= f32)
    if return_attn:
        total += 2 * M * num_heads * N * 2      # attn block (bf16, lane-dense)
    total += M * 3 * C * 2                      # fused-QKV VMEM scratch (bf16)
    # grid-invariant operands (conservatively counted double-buffered)
    total += 2 * (C * 3 * C * 2 + 3 * C * 4 + C * C * 2 + C * 4
                  + num_heads * N * N * 2)
    return total


def _pick_b_blk(B, N, C, num_heads, return_attn):
    """Largest divisor of B that fits the VMEM budget while keeping >= 2 grid
    steps when B >= 2 (software pipelining + both v7x TensorCores)."""
    best = 1
    for cand in range(1, B + 1):
        if B % cand != 0:
            continue
        if B >= 2 and B // cand < 2:
            continue
        if _block_vmem_bytes(cand, N, C, num_heads, return_attn) <= _VMEM_BUDGET_BYTES:
            best = cand
    return best


# ----------------------------------------------------------------------------
# Wrapper
# ----------------------------------------------------------------------------
def efficient_self_attention(x, params, rel_bias, num_heads, *,
                             return_attn=True, out_dtype=jnp.float32):
    """x: [B, N, C] f32; rel_bias: [num_heads, N, N] f32.

    Returns (out [B, N, C], attn [B, num_heads, N, N] bf16) when return_attn,
    else just out.  Implements the sr_ratio == 1 path of the module."""
    B, N, C = x.shape
    head_dim = C // num_heads
    scale = head_dim ** (-0.5)

    b_blk = _pick_b_blk(B, N, C, num_heads, return_attn)
    grid = (B // b_blk,)
    M = b_blk * N

    # ---- wrapper-side parameter prep (runs once, outside the hot kernel) ----
    wq = params["wq"] * scale                                  # fold 1/sqrt(hd)
    bq = params["bq"][0] * scale
    wk = params["wkv"][:, :C]
    wv = params["wkv"][:, C:]
    bk = params["bkv"][0, :C]
    bv = params["bkv"][0, C:]
    wqkv = jnp.concatenate([wq, wk, wv], axis=1).astype(jnp.bfloat16)  # [C, 3C]
    bqkv = jnp.concatenate([bq, bk, bv]).reshape(1, 3 * C).astype(jnp.float32)
    wp = params["wp"].astype(jnp.bfloat16)                     # [C, C]
    bp = params["bp"].reshape(1, C).astype(jnp.float32)
    bias = rel_bias.astype(jnp.bfloat16)                       # resident, bf16

    x2 = x.reshape(B * N, C).astype(jnp.bfloat16)              # token-major slab

    kernel = functools.partial(_attention_kernel, b_blk=b_blk, n_tokens=N,
                               num_heads=num_heads, head_dim=head_dim,
                               return_attn=return_attn)

    vmem_limit = int(min(64 * 1024 * 1024,
                         max(32 * 1024 * 1024,
                             2 * _block_vmem_bytes(b_blk, N, C, num_heads,
                                                   return_attn))))

    out_shape = [jax.ShapeDtypeStruct((B * N, C), out_dtype)]
    if return_attn:
        out_shape.append(jax.ShapeDtypeStruct((B * N, num_heads * N),
                                               jnp.bfloat16))

    def run(single_buffer_invariants):
        # Grid-invariant operands: their block index never changes, so a
        # second pipeline buffer is pure VMEM waste -> request Buffered(1).
        inv_kw = ({"pipeline_mode": pl.Buffered(1)}
                  if single_buffer_invariants else {})
        const2 = lambda b: (0, 0)
        const3 = lambda b: (0, 0, 0)
        in_specs = [
            pl.BlockSpec((M, C), lambda b: (b, 0)),                   # x (bf16)
            pl.BlockSpec((C, 3 * C), const2, **inv_kw),               # W_qkv
            pl.BlockSpec((1, 3 * C), const2, **inv_kw),               # b_qkv
            pl.BlockSpec((C, C), const2, **inv_kw),                   # W_proj
            pl.BlockSpec((1, C), const2, **inv_kw),                   # b_proj
            pl.BlockSpec((num_heads, N, N), const3, **inv_kw),        # rel bias
        ]
        out_specs = [pl.BlockSpec((M, C), lambda b: (b, 0))]          # out
        if return_attn:
            out_specs.append(
                pl.BlockSpec((M, num_heads * N), lambda b: (b, 0)))   # attn

        fn = pl.pallas_call(
            kernel,
            out_shape=tuple(out_shape),
            grid_spec=pltpu.PrefetchScalarGridSpec(
                num_scalar_prefetch=0,
                grid=grid,
                in_specs=in_specs,
                out_specs=tuple(out_specs),
                scratch_shapes=[pltpu.VMEM((M, 3 * C), jnp.bfloat16)]),
            compiler_params=pltpu.CompilerParams(
                dimension_semantics=("parallel",),
                vmem_limit_bytes=vmem_limit),
        )
        return jax.block_until_ready(fn(x2, wqkv, bqkv, wp, bp, bias))

    try:
        results = run(True)
    except Exception:
        # pipeline_mode=pl.Buffered(1) not supported by this jax/libtpu build;
        # fall back to the default double-buffered weight blocks.
        results = run(False)

    if return_attn:
        out2, attn2 = results
        attn = attn2.reshape(B, N, num_heads, N).transpose(0, 2, 1, 3)
        return out2.reshape(B, N, C), attn
    (out2,) = results
    return out2.reshape(B, N, C)


# ----------------------------------------------------------------------------
# Glue: relative position index / bias (mirrors the PyTorch __init__ buffers)
# ----------------------------------------------------------------------------
def make_relative_position_index(H, W):
    coords_h = jnp.arange(H)
    coords_w = jnp.arange(W)
    coords = jnp.stack(jnp.meshgrid(coords_h, coords_w, indexing="ij"))  # [2,H,W]
    coords_flat = coords.reshape(2, -1)                                   # [2,N]
    rel = coords_flat[:, :, None] - coords_flat[:, None, :]               # [2,N,N]
    rel = jnp.transpose(rel, (1, 2, 0))                                   # [N,N,2]
    rel = rel.at[:, :, 0].add(H - 1)
    rel = rel.at[:, :, 1].add(W - 1)
    rel = rel.at[:, :, 0].multiply(2 * W - 1)
    return rel.sum(-1)                                                    # [N,N]


def make_rel_bias(table, index, num_heads):
    N = index.shape[0]
    bias = jnp.take(table, index.reshape(-1), axis=0)          # [N*N, heads]
    bias = bias.reshape(N, N, num_heads)
    return jnp.transpose(bias, (2, 0, 1)).astype(jnp.float32)  # [heads, N, N]


# ----------------------------------------------------------------------------
# Pure-JAX f32 reference (same math as the PyTorch module, for validation)
# ----------------------------------------------------------------------------
def reference(x, params, rel_bias, num_heads):
    B, N, C = x.shape
    hd = C // num_heads
    scale = hd ** (-0.5)
    q = x @ params["wq"] + params["bq"][0]
    kv = x @ params["wkv"] + params["bkv"][0]
    k, v = kv[..., :C], kv[..., C:]
    q = q.reshape(B, N, num_heads, hd).transpose(0, 2, 1, 3)
    k = k.reshape(B, N, num_heads, hd).transpose(0, 2, 1, 3)
    v = v.reshape(B, N, num_heads, hd).transpose(0, 2, 1, 3)
    attn = (q @ jnp.swapaxes(k, -2, -1)) * scale + rel_bias[None]
    attn = jax.nn.softmax(attn, axis=-1)
    o = (attn @ v).transpose(0, 2, 1, 3).reshape(B, N, C)
    out = o @ params["wp"] + params["bp"][0]
    return out, attn


# ----------------------------------------------------------------------------
# Main
# ----------------------------------------------------------------------------
if __name__ == "__main__":
    # Small shapes: dim=32, num_heads=4, H=W=8 -> N=64, B=2, sr_ratio=1.
    B, H, W = 2, 8, 8
    C, num_heads = 32, 4
    N = H * W

    key = jax.random.PRNGKey(0)
    ks = jax.random.split(key, 8)

    params = {
        "wq":  0.05 * jax.random.normal(ks[0], (C, C), jnp.float32),
        "bq":  0.01 * jax.random.normal(ks[1], (1, C), jnp.float32),
        "wkv": 0.05 * jax.random.normal(ks[2], (C, 2 * C), jnp.float32),
        "bkv": 0.01 * jax.random.normal(ks[3], (1, 2 * C), jnp.float32),
        "wp":  0.05 * jax.random.normal(ks[4], (C, C), jnp.float32),
        "bp":  0.01 * jax.random.normal(ks[5], (1, C), jnp.float32),
    }
    # relative_position_bias_table: trunc_normal(std=0.02) -> deterministic normal*0.02
    table = 0.02 * jax.random.normal(ks[6], ((2 * H - 1) * (2 * W - 1), num_heads),
                                     jnp.float32)
    rel_index = make_relative_position_index(H, W)
    rel_bias = make_rel_bias(table, rel_index, num_heads)

    x = jax.random.normal(ks[7], (B, N, C), jnp.float32)

    # Full path (matches the PyTorch forward: returns (x, attn)).
    out, attn = efficient_self_attention(x, params, rel_bias, num_heads,
                                         return_attn=True)
    out = jax.block_until_ready(out)
    attn = jax.block_until_ready(attn)

    out_ref, attn_ref = reference(x, params, rel_bias, num_heads)
    assert out.shape == (B, N, C)
    assert attn.shape == (B, num_heads, N, N) and attn.dtype == jnp.bfloat16
    # bf16 MXU operands + bf16 attn storage -> compare at bf16-level tolerance
    assert jnp.allclose(out, out_ref, atol=1e-2, rtol=1e-2)
    assert jnp.allclose(attn.astype(jnp.float32), attn_ref, atol=1e-2, rtol=1e-2)

    # Fast path: skip the (dominant) attention-probability writeback entirely.
    out_only = efficient_self_attention(x, params, rel_bias, num_heads,
                                        return_attn=False)
    out_only = jax.block_until_ready(out_only)
    assert out_only.shape == (B, N, C)
    assert jnp.allclose(out_only, out_ref, atol=1e-2, rtol=1e-2)

    print("KERNEL_OK")
</pallas_src>

<mosaic_0001>
module attributes {stable_mosaic.version = 11 : i64} {
  func.func @_attention_kernel(%arg0: i32, %arg1: memref<64x32xbf16, #tpu.memory_space<vmem>>, %arg2: memref<32x96xbf16, #tpu.memory_space<vmem>>, %arg3: memref<1x96xf32, #tpu.memory_space<vmem>>, %arg4: memref<32x32xbf16, #tpu.memory_space<vmem>>, %arg5: memref<1x32xf32, #tpu.memory_space<vmem>>, %arg6: memref<4x64x64xbf16, #tpu.memory_space<vmem>>, %arg7: memref<64x32xf32, #tpu.memory_space<vmem>>, %arg8: memref<64x256xbf16, #tpu.memory_space<vmem>>, %arg9: memref<64x96xbf16, #tpu.memory_space<vmem>>) attributes {dimension_semantics = [#tpu.dimension_semantics<parallel>], iteration_bounds = array<i64: 2>, scalar_prefetch = 0 : i64, scratch_operands = 1 : i64, tpu.core_type = #tpu.core_type<tc>, window_params = [{transform_indices = @transform_0, window_bounds = array<i64: 64, 32>}, {pipeline_mode = #tpu.pipeline_mode<synchronous>, transform_indices = @transform_1, window_bounds = array<i64: 32, 96>}, {pipeline_mode = #tpu.pipeline_mode<synchronous>, transform_indices = @transform_2, window_bounds = array<i64: 1, 96>}, {pipeline_mode = #tpu.pipeline_mode<synchronous>, transform_indices = @transform_3, window_bounds = array<i64: 32, 32>}, {pipeline_mode = #tpu.pipeline_mode<synchronous>, transform_indices = @transform_4, window_bounds = array<i64: 1, 32>}, {pipeline_mode = #tpu.pipeline_mode<synchronous>, transform_indices = @transform_5, window_bounds = array<i64: 4, 64, 64>}, {transform_indices = @transform_6, window_bounds = array<i64: 64, 32>}, {transform_indices = @transform_7, window_bounds = array<i64: 64, 256>}]} {
    %c0 = arith.constant 0 : index
    %c0_0 = arith.constant 0 : index
    %0 = vector.load %arg1[%c0, %c0_0] : memref<64x32xbf16, #tpu.memory_space<vmem>>, vector<64x32xbf16>
    %c0_1 = arith.constant 0 : index
    %c0_2 = arith.constant 0 : index
    %1 = vector.load %arg2[%c0_1, %c0_2] : memref<32x96xbf16, #tpu.memory_space<vmem>>, vector<32x96xbf16>
    %cst = arith.constant dense<0.000000e+00> : vector<64x96xf32>
    %2 = tpu.matmul %0, %1, %cst {dimension_numbers = #tpu.dot_dimension_numbers<[1], [0], [0], [1], [0, 0, 1, 1], [], []>} : vector<64x32xbf16>, vector<32x96xbf16>, vector<64x96xf32> -> vector<64x96xf32>
    %c0_3 = arith.constant 0 : index
    %c0_4 = arith.constant 0 : index
    %3 = vector.load %arg3[%c0_3, %c0_4] : memref<1x96xf32, #tpu.memory_space<vmem>>, vector<1x96xf32>
    %4 = vector.broadcast %3 : vector<1x96xf32> to vector<64x96xf32>
    %5 = arith.addf %2, %4 : vector<64x96xf32>
    %6 = arith.truncf %5 : vector<64x96xf32> to vector<64x96xbf16>
    %c0_5 = arith.constant 0 : index
    %c0_6 = arith.constant 0 : index
    %7 = vector.load %arg9[%c0_5, %c0_6] : memref<64x96xbf16, #tpu.memory_space<vmem>>, vector<64x96xbf16>
    tpu.vector_store %arg9[%c0_5, %c0_6], %6 {strides = array<i32>} : memref<64x96xbf16, #tpu.memory_space<vmem>>, vector<64x96xbf16>,
    %c0_i32 = arith.constant 0 : i32
    %c64_i32 = arith.constant 64 : i32
    %8 = arith.muli %c0_i32, %c64_i32 : i32
    %9 = tpu.assume_multiple %8, 64 : i32
    %10 = arith.index_cast %9 : i32 to index
    %c0_7 = arith.constant 0 : index
    %11 = vector.load %arg9[%10, %c0_7] : memref<64x96xbf16, #tpu.memory_space<vmem>>, vector<64x96xbf16>
    %cst_8 = arith.constant 0.000000e+00 : f32
    %12 = vector.broadcast %cst_8 : f32 to vector<64x32xf32>
    %13 = vector.extract_strided_slice %11 {offsets = [0, 0], sizes = [64, 8], strides = [1, 1]} : vector<64x96xbf16> to vector<64x8xbf16>
    %14 = vector.extract_strided_slice %11 {offsets = [0, 32], sizes = [64, 8], strides = [1, 1]} : vector<64x96xbf16> to vector<64x8xbf16>
    %15 = vector.extract_strided_slice %11 {offsets = [0, 64], sizes = [64, 8], strides = [1, 1]} : vector<64x96xbf16> to vector<64x8xbf16>
    %cst_9 = arith.constant dense<0.000000e+00> : vector<64x64xf32>
    %16 = tpu.matmul %13, %14, %cst_9 {dimension_numbers = #tpu.dot_dimension_numbers<[1], [1], [0], [0], [0, 0, 1, 0], [], []>} : vector<64x8xbf16>, vector<64x8xbf16>, vector<64x64xf32> -> vector<64x64xf32>
    %c0_10 = arith.constant 0 : index
    %c0_11 = arith.constant 0 : index
    %c0_12 = arith.constant 0 : index
    %17 = vector.load %arg6[%c0_10, %c0_11, %c0_12] : memref<4x64x64xbf16, #tpu.memory_space<vmem>>, vector<1x64x64xbf16>
    %18 = vector.shape_cast %17 : vector<1x64x64xbf16> to vector<64x64xbf16>
    %19 = arith.extf %18 : vector<64x64xbf16> to vector<64x64xf32>
    %20 = arith.addf %16, %19 : vector<64x64xf32>
    %cst_13 = arith.constant dense<0xFF800000> : vector<64xf32>
    %21 = vector.multi_reduction <maximumf>, %20, %cst_13 [1] : vector<64x64xf32> to vector<64xf32>
    %22 = vector.shape_cast %21 : vector<64xf32> to vector<64x1xf32>
    %23 = vector.broadcast %22 : vector<64x1xf32> to vector<64x64xf32>
    %24 = arith.subf %20, %23 : vector<64x64xf32>
    %25 = math.exp %24 : vector<64x64xf32>
    %cst_14 = arith.constant dense<0.000000e+00> : vector<64xf32>
    %26 = vector.multi_reduction <add>, %25, %cst_14 [1] : vector<64x64xf32> to vector<64xf32>
    %27 = vector.shape_cast %26 : vector<64xf32> to vector<64x1xf32>
    %28 = tpu.reciprocal %27 {approx = true} : vector<64x1xf32> -> vector<64x1xf32>
    %29 = vector.broadcast %28 : vector<64x1xf32> to vector<64x64xf32>
    %30 = arith.mulf %25, %29 : vector<64x64xf32>
    %31 = arith.truncf %30 : vector<64x64xf32> to vector<64x64xbf16>
    %cst_15 = arith.constant dense<0.000000e+00> : vector<64x8xf32>
    %32 = tpu.matmul %31, %15, %cst_15 {dimension_numbers = #tpu.dot_dimension_numbers<[1], [0], [0], [1], [0, 0, 1, 1], [], []>} : vector<64x64xbf16>, vector<64x8xbf16>, vector<64x8xf32> -> vector<64x8xf32>
    %33 = arith.truncf %32 : vector<64x8xf32> to vector<64x8xbf16>
    %c0_16 = arith.constant 0 : index
    %c0_17 = arith.constant 0 : index
    %34 = vector.load %arg4[%c0_16, %c0_17] : memref<32x32xbf16, #tpu.memory_space<vmem>>, vector<8x32xbf16>
    %cst_18 = arith.constant dense<0.000000e+00> : vector<64x32xf32>
    %35 = tpu.matmul %33, %34, %cst_18 {dimension_numbers = #tpu.dot_dimension_numbers<[1], [0], [0], [1], [0, 0, 1, 1], [], []>} : vector<64x8xbf16>, vector<8x32xbf16>, vector<64x32xf32> -> vector<64x32xf32>
    %36 = arith.addf %12, %35 : vector<64x32xf32>
    %37 = vector.extract_strided_slice %11 {offsets = [0, 8], sizes = [64, 8], strides = [1, 1]} : vector<64x96xbf16> to vector<64x8xbf16>
    %38 = vector.extract_strided_slice %11 {offsets = [0, 40], sizes = [64, 8], strides = [1, 1]} : vector<64x96xbf16> to vector<64x8xbf16>
    %39 = vector.extract_strided_slice %11 {offsets = [0, 72], sizes = [64, 8], strides = [1, 1]} : vector<64x96xbf16> to vector<64x8xbf16>
    %cst_19 = arith.constant dense<0.000000e+00> : vector<64x64xf32>
    %40 = tpu.matmul %37, %38, %cst_19 {dimension_numbers = #tpu.dot_dimension_numbers<[1], [1], [0], [0], [0, 0, 1, 0], [], []>} : vector<64x8xbf16>, vector<64x8xbf16>, vector<64x64xf32> -> vector<64x64xf32>
    %c1 = arith.constant 1 : index
    %c0_20 = arith.constant 0 : index
    %c0_21 = arith.constant 0 : index
    %41 = vector.load %arg6[%c1, %c0_20, %c0_21] : memref<4x64x64xbf16, #tpu.memory_space<vmem>>, vector<1x64x64xbf16>
    %42 = vector.shape_cast %41 : vector<1x64x64xbf16> to vector<64x64xbf16>
    %43 = arith.extf %42 : vector<64x64xbf16> to vector<64x64xf32>
    %44 = arith.addf %40, %43 : vector<64x64xf32>
    %cst_22 = arith.constant dense<0xFF800000> : vector<64xf32>
    %45 = vector.multi_reduction <maximumf>, %44, %cst_22 [1] : vector<64x64xf32> to vector<64xf32>
    %46 = vector.shape_cast %45 : vector<64xf32> to vector<64x1xf32>
    %47 = vector.broadcast %46 : vector<64x1xf32> to vector<64x64xf32>
    %48 = arith.subf %44, %47 : vector<64x64xf32>
    %49 = math.exp %48 : vector<64x64xf32>
    %cst_23 = arith.constant dense<0.000000e+00> : vector<64xf32>
    %50 = vector.multi_reduction <add>, %49, %cst_23 [1] : vector<64x64xf32> to vector<64xf32>
    %51 = vector.shape_cast %50 : vector<64xf32> to vector<64x1xf32>
    %52 = tpu.reciprocal %51 {approx = true} : vector<64x1xf32> -> vector<64x1xf32>
    %53 = vector.broadcast %52 : vector<64x1xf32> to vector<64x64xf32>
    %54 = arith.mulf %49, %53 : vector<64x64xf32>
    %55 = arith.truncf %54 : vector<64x64xf32> to vector<64x64xbf16>
    %cst_24 = arith.constant dense<0.000000e+00> : vector<64x8xf32>
    %56 = tpu.matmul %55, %39, %cst_24 {dimension_numbers = #tpu.dot_dimension_numbers<[1], [0], [0], [1], [0, 0, 1, 1], [], []>} : vector<64x64xbf16>, vector<64x8xbf16>, vector<64x8xf32> -> vector<64x8xf32>
    %57 = arith.truncf %56 : vector<64x8xf32> to vector<64x8xbf16>
    %c8 = arith.constant 8 : index
    %c0_25 = arith.constant 0 : index
    %58 = vector.load %arg4[%c8, %c0_25] : memref<32x32xbf16, #tpu.memory_space<vmem>>, vector<8x32xbf16>
    %cst_26 = arith.constant dense<0.000000e+00> : vector<64x32xf32>
    %59 = tpu.matmul %57, %58, %cst_26 {dimension_numbers = #tpu.dot_dimension_numbers<[1], [0], [0], [1], [0, 0, 1, 1], [], []>} : vector<64x8xbf16>, vector<8x32xbf16>, vector<64x32xf32> -> vector<64x32xf32>
    %60 = arith.addf %36, %59 : vector<64x32xf32>
    %61 = vector.extract_strided_slice %11 {offsets = [0, 16], sizes = [64, 8], strides = [1, 1]} : vector<64x96xbf16> to vector<64x8xbf16>
    %62 = vector.extract_strided_slice %11 {offsets = [0, 48], sizes = [64, 8], strides = [1, 1]} : vector<64x96xbf16> to vector<64x8xbf16>
    %63 = vector.extract_strided_slice %11 {offsets = [0, 80], sizes = [64, 8], strides = [1, 1]} : vector<64x96xbf16> to vector<64x8xbf16>
    %cst_27 = arith.constant dense<0.000000e+00> : vector<64x64xf32>
    %64 = tpu.matmul %61, %62, %cst_27 {dimension_numbers = #tpu.dot_dimension_numbers<[1], [1], [0], [0], [0, 0, 1, 0], [], []>} : vector<64x8xbf16>, vector<64x8xbf16>, vector<64x64xf32> -> vector<64x64xf32>
    %c2 = arith.constant 2 : index
    %c0_28 = arith.constant 0 : index
    %c0_29 = arith.constant 0 : index
    %65 = vector.load %arg6[%c2, %c0_28, %c0_29] : memref<4x64x64xbf16, #tpu.memory_space<vmem>>, vector<1x64x64xbf16>
    %66 = vector.shape_cast %65 : vector<1x64x64xbf16> to vector<64x64xbf16>
    %67 = arith.extf %66 : vector<64x64xbf16> to vector<64x64xf32>
    %68 = arith.addf %64, %67 : vector<64x64xf32>
    %cst_30 = arith.constant dense<0xFF800000> : vector<64xf32>
    %69 = vector.multi_reduction <maximumf>, %68, %cst_30 [1] : vector<64x64xf32> to vector<64xf32>
    %70 = vector.shape_cast %69 : vector<64xf32> to vector<64x1xf32>
    %71 = vector.broadcast %70 : vector<64x1xf32> to vector<64x64xf32>
    %72 = arith.subf %68, %71 : vector<64x64xf32>
    %73 = math.exp %72 : vector<64x64xf32>
    %cst_31 = arith.constant dense<0.000000e+00> : vector<64xf32>
    %74 = vector.multi_reduction <add>, %73, %cst_31 [1] : vector<64x64xf32> to vector<64xf32>
    %75 = vector.shape_cast %74 : vector<64xf32> to vector<64x1xf32>
    %76 = tpu.reciprocal %75 {approx = true} : vector<64x1xf32> -> vector<64x1xf32>
    %77 = vector.broadcast %76 : vector<64x1xf32> to vector<64x64xf32>
    %78 = arith.mulf %73, %77 : vector<64x64xf32>
    %79 = arith.truncf %78 : vector<64x64xf32> to vector<64x64xbf16>
    %cst_32 = arith.constant dense<0.000000e+00> : vector<64x8xf32>
    %80 = tpu.matmul %79, %63, %cst_32 {dimension_numbers = #tpu.dot_dimension_numbers<[1], [0], [0], [1], [0, 0, 1, 1], [], []>} : vector<64x64xbf16>, vector<64x8xbf16>, vector<64x8xf32> -> vector<64x8xf32>
    %81 = arith.truncf %80 : vector<64x8xf32> to vector<64x8xbf16>
    %c16 = arith.constant 16 : index
    %c0_33 = arith.constant 0 : index
    %82 = vector.load %arg4[%c16, %c0_33] : memref<32x32xbf16, #tpu.memory_space<vmem>>, vector<8x32xbf16>
    %cst_34 = arith.constant dense<0.000000e+00> : vector<64x32xf32>
    %83 = tpu.matmul %81, %82, %cst_34 {dimension_numbers = #tpu.dot_dimension_numbers<[1], [0], [0], [1], [0, 0, 1, 1], [], []>} : vector<64x8xbf16>, vector<8x32xbf16>, vector<64x32xf32> -> vector<64x32xf32>
    %84 = arith.addf %60, %83 : vector<64x32xf32>
    %85 = vector.extract_strided_slice %11 {offsets = [0, 24], sizes = [64, 8], strides = [1, 1]} : vector<64x96xbf16> to vector<64x8xbf16>
    %86 = vector.extract_strided_slice %11 {offsets = [0, 56], sizes = [64, 8], strides = [1, 1]} : vector<64x96xbf16> to vector<64x8xbf16>
    %87 = vector.extract_strided_slice %11 {offsets = [0, 88], sizes = [64, 8], strides = [1, 1]} : vector<64x96xbf16> to vector<64x8xbf16>
    %cst_35 = arith.constant dense<0.000000e+00> : vector<64x64xf32>
    %88 = tpu.matmul %85, %86, %cst_35 {dimension_numbers = #tpu.dot_dimension_numbers<[1], [1], [0], [0], [0, 0, 1, 0], [], []>} : vector<64x8xbf16>, vector<64x8xbf16>, vector<64x64xf32> -> vector<64x64xf32>
    %c3 = arith.constant 3 : index
    %c0_36 = arith.constant 0 : index
    %c0_37 = arith.constant 0 : index
    %89 = vector.load %arg6[%c3, %c0_36, %c0_37] : memref<4x64x64xbf16, #tpu.memory_space<vmem>>, vector<1x64x64xbf16>
    %90 = vector.shape_cast %89 : vector<1x64x64xbf16> to vector<64x64xbf16>
    %91 = arith.extf %90 : vector<64x64xbf16> to vector<64x64xf32>
    %92 = arith.addf %88, %91 : vector<64x64xf32>
    %cst_38 = arith.constant dense<0xFF800000> : vector<64xf32>
    %93 = vector.multi_reduction <maximumf>, %92, %cst_38 [1] : vector<64x64xf32> to vector<64xf32>
    %94 = vector.shape_cast %93 : vector<64xf32> to vector<64x1xf32>
    %95 = vector.broadcast %94 : vector<64x1xf32> to vector<64x64xf32>
    %96 = arith.subf %92, %95 : vector<64x64xf32>
    %97 = math.exp %96 : vector<64x64xf32>
    %cst_39 = arith.constant dense<0.000000e+00> : vector<64xf32>
    %98 = vector.multi_reduction <add>, %97, %cst_39 [1] : vector<64x64xf32> to vector<64xf32>
    %99 = vector.shape_cast %98 : vector<64xf32> to vector<64x1xf32>
    %100 = tpu.reciprocal %99 {approx = true} : vector<64x1xf32> -> vector<64x1xf32>
    %101 = vector.broadcast %100 : vector<64x1xf32> to vector<64x64xf32>
    %102 = arith.mulf %97, %101 : vector<64x64xf32>
    %103 = arith.truncf %102 : vector<64x64xf32> to vector<64x64xbf16>
    %cst_40 = arith.constant dense<0.000000e+00> : vector<64x8xf32>
    %104 = tpu.matmul %103, %87, %cst_40 {dimension_numbers = #tpu.dot_dimension_numbers<[1], [0], [0], [1], [0, 0, 1, 1], [], []>} : vector<64x64xbf16>, vector<64x8xbf16>, vector<64x8xf32> -> vector<64x8xf32>
    %105 = arith.truncf %104 : vector<64x8xf32> to vector<64x8xbf16>
    %c24 = arith.constant 24 : index
    %c0_41 = arith.constant 0 : index
    %106 = vector.load %arg4[%c24, %c0_41] : memref<32x32xbf16, #tpu.memory_space<vmem>>, vector<8x32xbf16>
    %cst_42 = arith.constant dense<0.000000e+00> : vector<64x32xf32>
    %107 = tpu.matmul %105, %106, %cst_42 {dimension_numbers = #tpu.dot_dimension_numbers<[1], [0], [0], [1], [0, 0, 1, 1], [], []>} : vector<64x8xbf16>, vector<8x32xbf16>, vector<64x32xf32> -> vector<64x32xf32>
    %108 = arith.addf %84, %107 : vector<64x32xf32>
    %109 = tpu.concatenate %31, %55, %79, %103 in 1 : vector<64x64xbf16>, vector<64x64xbf16>, vector<64x64xbf16>, vector<64x64xbf16> -> vector<64x256xbf16>
    %110 = arith.index_cast %9 : i32 to index
    %c0_43 = arith.constant 0 : index
    %111 = vector.load %arg8[%110, %c0_43] : memref<64x256xbf16, #tpu.memory_space<vmem>>, vector<64x256xbf16>
    tpu.vector_store %arg8[%110, %c0_43], %109 {strides = array<i32>} : memref<64x256xbf16, #tpu.memory_space<vmem>>, vector<64x256xbf16>,
    %c0_44 = arith.constant 0 : index
    %c0_45 = arith.constant 0 : index
    %112 = vector.load %arg5[%c0_44, %c0_45] : memref<1x32xf32, #tpu.memory_space<vmem>>, vector<1x32xf32>
    %113 = vector.broadcast %112 : vector<1x32xf32> to vector<64x32xf32>
    %114 = arith.addf %108, %113 : vector<64x32xf32>
    %115 = arith.index_cast %9 : i32 to index
    %c0_46 = arith.constant 0 : index
    %116 = vector.load %arg7[%115, %c0_46] : memref<64x32xf32, #tpu.memory_space<vmem>>, vector<64x32xf32>
    tpu.vector_store %arg7[%115, %c0_46], %114 {strides = array<i32>} : memref<64x32xf32, #tpu.memory_space<vmem>>, vector<64x32xf32>,
    %c1_i32 = arith.constant 1 : i32
    return
  }
  func.func @transform_0(%arg0: i32) -> (i32, i32) {
    %c0_i32 = arith.constant 0 : i32
    %c0_i32_0 = arith.constant 0 : i32
    return %arg0, %c0_i32 : i32, i32
  }
  func.func @transform_1(%arg0: i32) -> (i32, i32) {
    %c0_i32 = arith.constant 0 : i32
    %c0_i32_0 = arith.constant 0 : i32
    %c0_i32_1 = arith.constant 0 : i32
    return %c0_i32, %c0_i32_0 : i32, i32
  }
  func.func @transform_2(%arg0: i32) -> (i32, i32) {
    %c0_i32 = arith.constant 0 : i32
    %c0_i32_0 = arith.constant 0 : i32
    %c0_i32_1 = arith.constant 0 : i32
    return %c0_i32, %c0_i32_0 : i32, i32
  }
  func.func @transform_3(%arg0: i32) -> (i32, i32) {
    %c0_i32 = arith.constant 0 : i32
    %c0_i32_0 = arith.constant 0 : i32
    %c0_i32_1 = arith.constant 0 : i32
    return %c0_i32, %c0_i32_0 : i32, i32
  }
  func.func @transform_4(%arg0: i32) -> (i32, i32) {
    %c0_i32 = arith.constant 0 : i32
    %c0_i32_0 = arith.constant 0 : i32
    %c0_i32_1 = arith.constant 0 : i32
    return %c0_i32, %c0_i32_0 : i32, i32
  }
  func.func @transform_5(%arg0: i32) -> (i32, i32, i32) {
    %c0_i32 = arith.constant 0 : i32
    %c0_i32_0 = arith.constant 0 : i32
    %c0_i32_1 = arith.constant 0 : i32
    %c0_i32_2 = arith.constant 0 : i32
    return %c0_i32, %c0_i32_0, %c0_i32_1 : i32, i32, i32
  }
  func.func @transform_6(%arg0: i32) -> (i32, i32) {
    %c0_i32 = arith.constant 0 : i32
    %c0_i32_0 = arith.constant 0 : i32
    return %arg0, %c0_i32 : i32, i32
  }
  func.func @transform_7(%arg0: i32) -> (i32, i32) {
    %c0_i32 = arith.constant 0 : i32
    %c0_i32_0 = arith.constant 0 : i32
    return %arg0, %c0_i32 : i32, i32
  }
}

module attributes {stable_mosaic.version = 11 : i64} {
  func.func @_attention_kernel(%arg0: i32, %arg1: memref<64x32xbf16, #tpu.memory_space<vmem>>, %arg2: memref<32x96xbf16, #tpu.memory_space<vmem>>, %arg3: memref<1x96xf32, #tpu.memory_space<vmem>>, %arg4: memref<32x32xbf16, #tpu.memory_space<vmem>>, %arg5: memref<1x32xf32, #tpu.memory_space<vmem>>, %arg6: memref<4x64x64xbf16, #tpu.memory_space<vmem>>, %arg7: memref<64x32xf32, #tpu.memory_space<vmem>>, %arg8: memref<64x256xbf16, #tpu.memory_space<vmem>>, %arg9: memref<64x96xbf16, #tpu.memory_space<vmem>>) attributes {dimension_semantics = [#tpu.dimension_semantics<parallel>], iteration_bounds = array<i64: 2>, scalar_prefetch = 0 : i64, scratch_operands = 1 : i64, tpu.core_type = #tpu.core_type<tc>, window_params = [{transform_indices = @transform_0, window_bounds = array<i64: 64, 32>}, {pipeline_mode = #tpu.pipeline_mode<synchronous>, transform_indices = @transform_1, window_bounds = array<i64: 32, 96>}, {pipeline_mode = #tpu.pipeline_mode<synchronous>, transform_indices = @transform_2, window_bounds = array<i64: 1, 96>}, {pipeline_mode = #tpu.pipeline_mode<synchronous>, transform_indices = @transform_3, window_bounds = array<i64: 32, 32>}, {pipeline_mode = #tpu.pipeline_mode<synchronous>, transform_indices = @transform_4, window_bounds = array<i64: 1, 32>}, {pipeline_mode = #tpu.pipeline_mode<synchronous>, transform_indices = @transform_5, window_bounds = array<i64: 4, 64, 64>}, {transform_indices = @transform_6, window_bounds = array<i64: 64, 32>}, {transform_indices = @transform_7, window_bounds = array<i64: 64, 256>}]} {
    %c0 = arith.constant 0 : index
    %c0_0 = arith.constant 0 : index
    %0 = vector.load %arg1[%c0, %c0_0] : memref<64x32xbf16, #tpu.memory_space<vmem>>, vector<64x32xbf16>
    %c0_1 = arith.constant 0 : index
    %c0_2 = arith.constant 0 : index
    %1 = vector.load %arg2[%c0_1, %c0_2] : memref<32x96xbf16, #tpu.memory_space<vmem>>, vector<32x96xbf16>
    %cst = arith.constant dense<0.000000e+00> : vector<64x96xf32>
    %2 = tpu.matmul %0, %1, %cst {dimension_numbers = #tpu.dot_dimension_numbers<[1], [0], [0], [1], [0, 0, 1, 1], [], []>} : vector<64x32xbf16>, vector<32x96xbf16>, vector<64x96xf32> -> vector<64x96xf32>
    %c0_3 = arith.constant 0 : index
    %c0_4 = arith.constant 0 : index
    %3 = vector.load %arg3[%c0_3, %c0_4] : memref<1x96xf32, #tpu.memory_space<vmem>>, vector<1x96xf32>
    %4 = vector.broadcast %3 : vector<1x96xf32> to vector<64x96xf32>
    %5 = arith.addf %2, %4 : vector<64x96xf32>
    %6 = arith.truncf %5 : vector<64x96xf32> to vector<64x96xbf16>
    %c0_5 = arith.constant 0 : index
    %c0_6 = arith.constant 0 : index
    %7 = vector.load %arg9[%c0_5, %c0_6] : memref<64x96xbf16, #tpu.memory_space<vmem>>, vector<64x96xbf16>
    tpu.vector_store %arg9[%c0_5, %c0_6], %6 {strides = array<i32>} : memref<64x96xbf16, #tpu.memory_space<vmem>>, vector<64x96xbf16>,
    %c0_i32 = arith.constant 0 : i32
    %c64_i32 = arith.constant 64 : i32
    %8 = arith.muli %c0_i32, %c64_i32 : i32
    %9 = tpu.assume_multiple %8, 64 : i32
    %10 = arith.index_cast %9 : i32 to index
    %c0_7 = arith.constant 0 : index
    %11 = vector.load %arg9[%10, %c0_7] : memref<64x96xbf16, #tpu.memory_space<vmem>>, vector<64x96xbf16>
    %cst_8 = arith.constant 0.000000e+00 : f32
    %12 = vector.broadcast %cst_8 : f32 to vector<64x32xf32>
    %13 = vector.extract_strided_slice %11 {offsets = [0, 0], sizes = [64, 8], strides = [1, 1]} : vector<64x96xbf16> to vector<64x8xbf16>
    %14 = vector.extract_strided_slice %11 {offsets = [0, 32], sizes = [64, 8], strides = [1, 1]} : vector<64x96xbf16> to vector<64x8xbf16>
    %15 = vector.extract_strided_slice %11 {offsets = [0, 64], sizes = [64, 8], strides = [1, 1]} : vector<64x96xbf16> to vector<64x8xbf16>
    %cst_9 = arith.constant dense<0.000000e+00> : vector<64x64xf32>
    %16 = tpu.matmul %13, %14, %cst_9 {dimension_numbers = #tpu.dot_dimension_numbers<[1], [1], [0], [0], [0, 0, 1, 0], [], []>} : vector<64x8xbf16>, vector<64x8xbf16>, vector<64x64xf32> -> vector<64x64xf32>
    %c0_10 = arith.constant 0 : index
    %c0_11 = arith.constant 0 : index
    %c0_12 = arith.constant 0 : index
    %17 = vector.load %arg6[%c0_10, %c0_11, %c0_12] : memref<4x64x64xbf16, #tpu.memory_space<vmem>>, vector<1x64x64xbf16>
    %18 = vector.shape_cast %17 : vector<1x64x64xbf16> to vector<64x64xbf16>
    %19 = arith.extf %18 : vector<64x64xbf16> to vector<64x64xf32>
    %20 = arith.addf %16, %19 : vector<64x64xf32>
    %cst_13 = arith.constant dense<0xFF800000> : vector<64xf32>
    %21 = vector.multi_reduction <maximumf>, %20, %cst_13 [1] : vector<64x64xf32> to vector<64xf32>
    %22 = vector.shape_cast %21 : vector<64xf32> to vector<64x1xf32>
    %23 = vector.broadcast %22 : vector<64x1xf32> to vector<64x64xf32>
    %24 = arith.subf %20, %23 : vector<64x64xf32>
    %25 = math.exp %24 : vector<64x64xf32>
    %cst_14 = arith.constant dense<0.000000e+00> : vector<64xf32>
    %26 = vector.multi_reduction <add>, %25, %cst_14 [1] : vector<64x64xf32> to vector<64xf32>
    %27 = vector.shape_cast %26 : vector<64xf32> to vector<64x1xf32>
    %28 = tpu.reciprocal %27 {approx = true} : vector<64x1xf32> -> vector<64x1xf32>
    %29 = vector.broadcast %28 : vector<64x1xf32> to vector<64x64xf32>
    %30 = arith.mulf %25, %29 : vector<64x64xf32>
    %31 = arith.truncf %30 : vector<64x64xf32> to vector<64x64xbf16>
    %cst_15 = arith.constant dense<0.000000e+00> : vector<64x8xf32>
    %32 = tpu.matmul %31, %15, %cst_15 {dimension_numbers = #tpu.dot_dimension_numbers<[1], [0], [0], [1], [0, 0, 1, 1], [], []>} : vector<64x64xbf16>, vector<64x8xbf16>, vector<64x8xf32> -> vector<64x8xf32>
    %33 = arith.truncf %32 : vector<64x8xf32> to vector<64x8xbf16>
    %c0_16 = arith.constant 0 : index
    %c0_17 = arith.constant 0 : index
    %34 = vector.load %arg4[%c0_16, %c0_17] : memref<32x32xbf16, #tpu.memory_space<vmem>>, vector<8x32xbf16>
    %cst_18 = arith.constant dense<0.000000e+00> : vector<64x32xf32>
    %35 = tpu.matmul %33, %34, %cst_18 {dimension_numbers = #tpu.dot_dimension_numbers<[1], [0], [0], [1], [0, 0, 1, 1], [], []>} : vector<64x8xbf16>, vector<8x32xbf16>, vector<64x32xf32> -> vector<64x32xf32>
    %36 = arith.addf %12, %35 : vector<64x32xf32>
    %37 = vector.extract_strided_slice %11 {offsets = [0, 8], sizes = [64, 8], strides = [1, 1]} : vector<64x96xbf16> to vector<64x8xbf16>
    %38 = vector.extract_strided_slice %11 {offsets = [0, 40], sizes = [64, 8], strides = [1, 1]} : vector<64x96xbf16> to vector<64x8xbf16>
    %39 = vector.extract_strided_slice %11 {offsets = [0, 72], sizes = [64, 8], strides = [1, 1]} : vector<64x96xbf16> to vector<64x8xbf16>
    %cst_19 = arith.constant dense<0.000000e+00> : vector<64x64xf32>
    %40 = tpu.matmul %37, %38, %cst_19 {dimension_numbers = #tpu.dot_dimension_numbers<[1], [1], [0], [0], [0, 0, 1, 0], [], []>} : vector<64x8xbf16>, vector<64x8xbf16>, vector<64x64xf32> -> vector<64x64xf32>
    %c1 = arith.constant 1 : index
    %c0_20 = arith.constant 0 : index
    %c0_21 = arith.constant 0 : index
    %41 = vector.load %arg6[%c1, %c0_20, %c0_21] : memref<4x64x64xbf16, #tpu.memory_space<vmem>>, vector<1x64x64xbf16>
    %42 = vector.shape_cast %41 : vector<1x64x64xbf16> to vector<64x64xbf16>
    %43 = arith.extf %42 : vector<64x64xbf16> to vector<64x64xf32>
    %44 = arith.addf %40, %43 : vector<64x64xf32>
    %cst_22 = arith.constant dense<0xFF800000> : vector<64xf32>
    %45 = vector.multi_reduction <maximumf>, %44, %cst_22 [1] : vector<64x64xf32> to vector<64xf32>
    %46 = vector.shape_cast %45 : vector<64xf32> to vector<64x1xf32>
    %47 = vector.broadcast %46 : vector<64x1xf32> to vector<64x64xf32>
    %48 = arith.subf %44, %47 : vector<64x64xf32>
    %49 = math.exp %48 : vector<64x64xf32>
    %cst_23 = arith.constant dense<0.000000e+00> : vector<64xf32>
    %50 = vector.multi_reduction <add>, %49, %cst_23 [1] : vector<64x64xf32> to vector<64xf32>
    %51 = vector.shape_cast %50 : vector<64xf32> to vector<64x1xf32>
    %52 = tpu.reciprocal %51 {approx = true} : vector<64x1xf32> -> vector<64x1xf32>
    %53 = vector.broadcast %52 : vector<64x1xf32> to vector<64x64xf32>
    %54 = arith.mulf %49, %53 : vector<64x64xf32>
    %55 = arith.truncf %54 : vector<64x64xf32> to vector<64x64xbf16>
    %cst_24 = arith.constant dense<0.000000e+00> : vector<64x8xf32>
    %56 = tpu.matmul %55, %39, %cst_24 {dimension_numbers = #tpu.dot_dimension_numbers<[1], [0], [0], [1], [0, 0, 1, 1], [], []>} : vector<64x64xbf16>, vector<64x8xbf16>, vector<64x8xf32> -> vector<64x8xf32>
    %57 = arith.truncf %56 : vector<64x8xf32> to vector<64x8xbf16>
    %c8 = arith.constant 8 : index
    %c0_25 = arith.constant 0 : index
    %58 = vector.load %arg4[%c8, %c0_25] : memref<32x32xbf16, #tpu.memory_space<vmem>>, vector<8x32xbf16>
    %cst_26 = arith.constant dense<0.000000e+00> : vector<64x32xf32>
    %59 = tpu.matmul %57, %58, %cst_26 {dimension_numbers = #tpu.dot_dimension_numbers<[1], [0], [0], [1], [0, 0, 1, 1], [], []>} : vector<64x8xbf16>, vector<8x32xbf16>, vector<64x32xf32> -> vector<64x32xf32>
    %60 = arith.addf %36, %59 : vector<64x32xf32>
    %61 = vector.extract_strided_slice %11 {offsets = [0, 16], sizes = [64, 8], strides = [1, 1]} : vector<64x96xbf16> to vector<64x8xbf16>
    %62 = vector.extract_strided_slice %11 {offsets = [0, 48], sizes = [64, 8], strides = [1, 1]} : vector<64x96xbf16> to vector<64x8xbf16>
    %63 = vector.extract_strided_slice %11 {offsets = [0, 80], sizes = [64, 8], strides = [1, 1]} : vector<64x96xbf16> to vector<64x8xbf16>
    %cst_27 = arith.constant dense<0.000000e+00> : vector<64x64xf32>
    %64 = tpu.matmul %61, %62, %cst_27 {dimension_numbers = #tpu.dot_dimension_numbers<[1], [1], [0], [0], [0, 0, 1, 0], [], []>} : vector<64x8xbf16>, vector<64x8xbf16>, vector<64x64xf32> -> vector<64x64xf32>
    %c2 = arith.constant 2 : index
    %c0_28 = arith.constant 0 : index
    %c0_29 = arith.constant 0 : index
    %65 = vector.load %arg6[%c2, %c0_28, %c0_29] : memref<4x64x64xbf16, #tpu.memory_space<vmem>>, vector<1x64x64xbf16>
    %66 = vector.shape_cast %65 : vector<1x64x64xbf16> to vector<64x64xbf16>
    %67 = arith.extf %66 : vector<64x64xbf16> to vector<64x64xf32>
    %68 = arith.addf %64, %67 : vector<64x64xf32>
    %cst_30 = arith.constant dense<0xFF800000> : vector<64xf32>
    %69 = vector.multi_reduction <maximumf>, %68, %cst_30 [1] : vector<64x64xf32> to vector<64xf32>
    %70 = vector.shape_cast %69 : vector<64xf32> to vector<64x1xf32>
    %71 = vector.broadcast %70 : vector<64x1xf32> to vector<64x64xf32>
    %72 = arith.subf %68, %71 : vector<64x64xf32>
    %73 = math.exp %72 : vector<64x64xf32>
    %cst_31 = arith.constant dense<0.000000e+00> : vector<64xf32>
    %74 = vector.multi_reduction <add>, %73, %cst_31 [1] : vector<64x64xf32> to vector<64xf32>
    %75 = vector.shape_cast %74 : vector<64xf32> to vector<64x1xf32>
    %76 = tpu.reciprocal %75 {approx = true} : vector<64x1xf32> -> vector<64x1xf32>
    %77 = vector.broadcast %76 : vector<64x1xf32> to vector<64x64xf32>
    %78 = arith.mulf %73, %77 : vector<64x64xf32>
    %79 = arith.truncf %78 : vector<64x64xf32> to vector<64x64xbf16>
    %cst_32 = arith.constant dense<0.000000e+00> : vector<64x8xf32>
    %80 = tpu.matmul %79, %63, %cst_32 {dimension_numbers = #tpu.dot_dimension_numbers<[1], [0], [0], [1], [0, 0, 1, 1], [], []>} : vector<64x64xbf16>, vector<64x8xbf16>, vector<64x8xf32> -> vector<64x8xf32>
    %81 = arith.truncf %80 : vector<64x8xf32> to vector<64x8xbf16>
    %c16 = arith.constant 16 : index
    %c0_33 = arith.constant 0 : index
    %82 = vector.load %arg4[%c16, %c0_33] : memref<32x32xbf16, #tpu.memory_space<vmem>>, vector<8x32xbf16>
    %cst_34 = arith.constant dense<0.000000e+00> : vector<64x32xf32>
    %83 = tpu.matmul %81, %82, %cst_34 {dimension_numbers = #tpu.dot_dimension_numbers<[1], [0], [0], [1], [0, 0, 1, 1], [], []>} : vector<64x8xbf16>, vector<8x32xbf16>, vector<64x32xf32> -> vector<64x32xf32>
    %84 = arith.addf %60, %83 : vector<64x32xf32>
    %85 = vector.extract_strided_slice %11 {offsets = [0, 24], sizes = [64, 8], strides = [1, 1]} : vector<64x96xbf16> to vector<64x8xbf16>
    %86 = vector.extract_strided_slice %11 {offsets = [0, 56], sizes = [64, 8], strides = [1, 1]} : vector<64x96xbf16> to vector<64x8xbf16>
    %87 = vector.extract_strided_slice %11 {offsets = [0, 88], sizes = [64, 8], strides = [1, 1]} : vector<64x96xbf16> to vector<64x8xbf16>
    %cst_35 = arith.constant dense<0.000000e+00> : vector<64x64xf32>
    %88 = tpu.matmul %85, %86, %cst_35 {dimension_numbers = #tpu.dot_dimension_numbers<[1], [1], [0], [0], [0, 0, 1, 0], [], []>} : vector<64x8xbf16>, vector<64x8xbf16>, vector<64x64xf32> -> vector<64x64xf32>
    %c3 = arith.constant 3 : index
    %c0_36 = arith.constant 0 : index
    %c0_37 = arith.constant 0 : index
    %89 = vector.load %arg6[%c3, %c0_36, %c0_37] : memref<4x64x64xbf16, #tpu.memory_space<vmem>>, vector<1x64x64xbf16>
    %90 = vector.shape_cast %89 : vector<1x64x64xbf16> to vector<64x64xbf16>
    %91 = arith.extf %90 : vector<64x64xbf16> to vector<64x64xf32>
    %92 = arith.addf %88, %91 : vector<64x64xf32>
    %cst_38 = arith.constant dense<0xFF800000> : vector<64xf32>
    %93 = vector.multi_reduction <maximumf>, %92, %cst_38 [1] : vector<64x64xf32> to vector<64xf32>
    %94 = vector.shape_cast %93 : vector<64xf32> to vector<64x1xf32>
    %95 = vector.broadcast %94 : vector<64x1xf32> to vector<64x64xf32>
    %96 = arith.subf %92, %95 : vector<64x64xf32>
    %97 = math.exp %96 : vector<64x64xf32>
    %cst_39 = arith.constant dense<0.000000e+00> : vector<64xf32>
    %98 = vector.multi_reduction <add>, %97, %cst_39 [1] : vector<64x64xf32> to vector<64xf32>
    %99 = vector.shape_cast %98 : vector<64xf32> to vector<64x1xf32>
    %100 = tpu.reciprocal %99 {approx = true} : vector<64x1xf32> -> vector<64x1xf32>
    %101 = vector.broadcast %100 : vector<64x1xf32> to vector<64x64xf32>
    %102 = arith.mulf %97, %101 : vector<64x64xf32>
    %103 = arith.truncf %102 : vector<64x64xf32> to vector<64x64xbf16>
    %cst_40 = arith.constant dense<0.000000e+00> : vector<64x8xf32>
    %104 = tpu.matmul %103, %87, %cst_40 {dimension_numbers = #tpu.dot_dimension_numbers<[1], [0], [0], [1], [0, 0, 1, 1], [], []>} : vector<64x64xbf16>, vector<64x8xbf16>, vector<64x8xf32> -> vector<64x8xf32>
    %105 = arith.truncf %104 : vector<64x8xf32> to vector<64x8xbf16>
    %c24 = arith.constant 24 : index
    %c0_41 = arith.constant 0 : index
    %106 = vector.load %arg4[%c24, %c0_41] : memref<32x32xbf16, #tpu.memory_space<vmem>>, vector<8x32xbf16>
    %cst_42 = arith.constant dense<0.000000e+00> : vector<64x32xf32>
    %107 = tpu.matmul %105, %106, %cst_42 {dimension_numbers = #tpu.dot_dimension_numbers<[1], [0], [0], [1], [0, 0, 1, 1], [], []>} : vector<64x8xbf16>, vector<8x32xbf16>, vector<64x32xf32> -> vector<64x32xf32>
    %108 = arith.addf %84, %107 : vector<64x32xf32>
    %109 = tpu.concatenate %31, %55, %79, %103 in 1 : vector<64x64xbf16>, vector<64x64xbf16>, vector<64x64xbf16>, vector<64x64xbf16> -> vector<64x256xbf16>
    %110 = arith.index_cast %9 : i32 to index
    %c0_43 = arith.constant 0 : index
    %111 = vector.load %arg8[%110, %c0_43] : memref<64x256xbf16, #tpu.memory_space<vmem>>, vector<64x256xbf16>
    tpu.vector_store %arg8[%110, %c0_43], %109 {strides = array<i32>} : memref<64x256xbf16, #tpu.memory_space<vmem>>, vector<64x256xbf16>,
    %c0_44 = arith.constant 0 : index
    %c0_45 = arith.constant 0 : index
    %112 = vector.load %arg5[%c0_44, %c0_45] : memref<1x32xf32, #tpu.memory_space<vmem>>, vector<1x32xf32>
    %113 = vector.broadcast %112 : vector<1x32xf32> to vector<64x32xf32>
    %114 = arith.addf %108, %113 : vector<64x32xf32>
    %115 = arith.index_cast %9 : i32 to index
    %c0_46 = arith.constant 0 : index
    %116 = vector.load %arg7[%115, %c0_46] : memref<64x32xf32, #tpu.memory_space<vmem>>, vector<64x32xf32>
    tpu.vector_store %arg7[%115, %c0_46], %114 {strides = array<i32>} : memref<64x32xf32, #tpu.memory_space<vmem>>, vector<64x32xf32>,
    %c1_i32 = arith.constant 1 : i32
    return
  }
  func.func @transform_0(%arg0: i32) -> (i32, i32) {
    %c0_i32 = arith.constant 0 : i32
    %c0_i32_0 = arith.constant 0 : i32
    return %arg0, %c0_i32 : i32, i32
  }
  func.func @transform_1(%arg0: i32) -> (i32, i32) {
    %c0_i32 = arith.constant 0 : i32
    %c0_i32_0 = arith.constant 0 : i32
    %c0_i32_1 = arith.constant 0 : i32
    return %c0_i32, %c0_i32_0 : i32, i32
  }
  func.func @transform_2(%arg0: i32) -> (i32, i32) {
    %c0_i32 = arith.constant 0 : i32
    %c0_i32_0 = arith.constant 0 : i32
    %c0_i32_1 = arith.constant 0 : i32
    return %c0_i32, %c0_i32_0 : i32, i32
  }
  func.func @transform_3(%arg0: i32) -> (i32, i32) {
    %c0_i32 = arith.constant 0 : i32
    %c0_i32_0 = arith.constant 0 : i32
    %c0_i32_1 = arith.constant 0 : i32
    return %c0_i32, %c0_i32_0 : i32, i32
  }
  func.func @transform_4(%arg0: i32) -> (i32, i32) {
    %c0_i32 = arith.constant 0 : i32
    %c0_i32_0 = arith.constant 0 : i32
    %c0_i32_1 = arith.constant 0 : i32
    return %c0_i32, %c0_i32_0 : i32, i32
  }
  func.func @transform_5(%arg0: i32) -> (i32, i32, i32) {
    %c0_i32 = arith.constant 0 : i32
    %c0_i32_0 = arith.constant 0 : i32
    %c0_i32_1 = arith.constant 0 : i32
    %c0_i32_2 = arith.constant 0 : i32
    return %c0_i32, %c0_i32_0, %c0_i32_1 : i32, i32, i32
  }
  func.func @transform_6(%arg0: i32) -> (i32, i32) {
    %c0_i32 = arith.constant 0 : i32
    %c0_i32_0 = arith.constant 0 : i32
    return %arg0, %c0_i32 : i32, i32
  }
  func.func @transform_7(%arg0: i32) -> (i32, i32) {
    %c0_i32 = arith.constant 0 : i32
    %c0_i32_0 = arith.constant 0 : i32
    return %arg0, %c0_i32 : i32, i32
  }
}

</mosaic_0001>

<llo_original>
// kernel: tpu_custom_call.1
$region0: #{tpu_custom_call.1}
  #allocation0 [shape = 'u32[]', space=smem, size = 0x4, offset = 0x4, fixed_abs, tag = 'smem constant byte address 0x4 - core index']
  #allocation1 [shape = 'u32[144,128]{1,0:T(1,128)}', space=vmem, size = 0x12000, scoped, tag = 'internal scratch']
  #allocation2 [shape = 'bf16[64,96]{1,0:T(8,128)(2,1)}', space=vmem, size = 0x4000, scoped, tag = 'scratch operand']
  %s0 = inlined_call_operand.vmem [shape: bf16[128,32], index: 0, kind: input, shape index: {}]
  %s1 = inlined_call_operand.vmem [shape: bf16[32,96], index: 1, kind: input, shape index: {}]
  %s2 = inlined_call_operand.vmem [shape: f32[1,96], index: 2, kind: input, shape index: {}]
  %s3 = inlined_call_operand.vmem [shape: bf16[32,32], index: 3, kind: input, shape index: {}]
  %s4 = inlined_call_operand.vmem [shape: f32[1,32], index: 4, kind: input, shape index: {}]
  %s5 = inlined_call_operand.hbm [shape: bf16[4,64,64], index: 5, kind: input, shape index: {}]
  %s6 = inlined_call_operand.vmem [shape: f32[128,32], index: 6, kind: output, shape index: {0}]
  %s7 = inlined_call_operand.hbm [shape: bf16[128,256], index: 7, kind: output, shape index: {1}]
  %8 = xla_tuple %s6, %s7
  %s9 = sld [smem:[#allocation0]]
  $region69: #{tpu_custom_call.1} parent=0
    _
  %s11 = ssub.s32 1, %s9
  %s12 = scalar_select 0, %s11, %s9
  $region1: #{tpu_custom_call.1} parent=0
    #allocation3 [shape = 'u8[65536]{0}', space=vmem, size = 0x10000, scoped, tag = 'input window, operand 5, single buffered']
    #allocation4 [shape = 's32[2]{0}', space=sflag, size = 0x8, scoped, tag = 'scoped memory for tpu_custom_call.1']
    #allocation5 [shape = 's32[2]{0}', space=sflag, size = 0x8, scoped, tag = 'scoped memory for tpu_custom_call.1']
    #allocation6 [shape = 'u8[65536]{0}', space=vmem, size = 0x10000, scoped, tag = 'output window, operand 1']
    %13 = vsyncpa [#allocation4], 0
    %14 = vsyncpa [#allocation5], 0
    %s15 = scalar_lea.sflag [#allocation5], 1
    %16 = vsyncpa %s15, 0
    loop: start=0, step=1, limit=4
    $region2: #{tpu_custom_call.1} parent=1 // loop_pre_header
      _
    $region3: #{tpu_custom_call.1} parent=1 // loop_header
      %s18 = sphi 0, %s22
      %p19 = scmp.ge.s32.totalorder %s18, 4
      %s28 = sphi 0, %s30
      %s31 = sphi 0, %s28
      %s32 = sphi 0, %s31
      %s48 = sphi 0, %s32
      %s52 = sphi 0, %s52
      %s54 = sphi 0, %s52
      %s55 = sphi 0, %s54
      %s69 = sphi 0, %s55
      %s73 = sphi 0, %s73
      %s75 = sphi 0, %s73
      %s76 = sphi 0, %s75
      %s90 = sphi 0, %s76
      %s94 = sphi 0, %s94
      %s96 = sphi 0, %s94
      %s97 = sphi 0, %s96
      %s111 = sphi 0, %s97
      %s115 = sphi 0, %s115
      %s117 = sphi 0, %s115
      %s118 = sphi 0, %s117
      %s132 = sphi 0, %s118
      %s136 = sphi 0, %s136
      %s138 = sphi 0, %s136
      %s139 = sphi 0, %s138
      %s153 = sphi 0, %s139
      %s159 = sphi 0, %s161
      %s162 = sphi 0, %s159
      %s163 = sphi 0, %s162
      %s179 = sphi 0, %s163
      %s185 = sphi 0, %s187
      %s188 = sphi 0, %s185
      %s189 = sphi 0, %s188
      %s205 = sphi 0, %s189
    $region4: #{tpu_custom_call.1} parent=1 // loop_header_branch
      %21 = sbr.rel (%p19) target = $region8
    $region5: #{tpu_custom_call.1} parent=1 // loop_body
      %s23 = ssub.s32 %s18, 1
      %s24 = ssub.s32 %s18, 2
      %s25 = sadd.s32 %s18, 1
      %s26 = ssub.s32 %s18, %s25
      %p27 = scmp.eq.s32.totalorder %s26, 0
      %s29 = sadd.s32 %s28, 1
      %s30 = scalar_select %p27, %s28, %s29
      %p33 = pneg %p27
      %p34 = scmp.eq.s32.totalorder %s18, 1
      %p35 = por %p33, %p34
      %p36 = scmp.ne.s32.totalorder %s28, %s31
      %p37 = scmp.eq.s32.totalorder %s18, 0
      %p38 = por %p36, %p37
      %p39 = scmp.ne.s32.totalorder %s28, %s31
      %p40 = scmp.eq.s32.totalorder %s23, 1
      %p41 = por %p39, %p40
      %p42 = scmp.ne.s32.totalorder %s31, %s32
      %p43 = scmp.eq.s32.totalorder %s23, 0
      %p44 = por %p42, %p43
      %p45 = scmp.ne.s32.totalorder %s31, %s32
      %p46 = scmp.eq.s32.totalorder %s24, 1
      %p47 = por %p45, %p46
      %p49 = scmp.ne.s32.totalorder %s32, %s48
      %p50 = scmp.eq.s32.totalorder %s24, 0
      %p51 = por %p49, %p50
      %s53 = sadd.s32 %s52, 1
      %p56 = scmp.eq.s32.totalorder %s18, 1
      %p57 = scmp.ne.s32.totalorder %s52, %s54
      %p58 = scmp.eq.s32.totalorder %s18, 0
      %p59 = por %p57, %p58
      %p60 = scmp.ne.s32.totalorder %s52, %s54
      %p61 = scmp.eq.s32.totalorder %s23, 1
      %p62 = por %p60, %p61
      %p63 = scmp.ne.s32.totalorder %s54, %s55
      %p64 = scmp.eq.s32.totalorder %s23, 0
      %p65 = por %p63, %p64
      %p66 = scmp.ne.s32.totalorder %s54, %s55
      %p67 = scmp.eq.s32.totalorder %s24, 1
      %p68 = por %p66, %p67
      %p70 = scmp.ne.s32.totalorder %s55, %s69
      %p71 = scmp.eq.s32.totalorder %s24, 0
      %p72 = por %p70, %p71
      %s74 = sadd.s32 %s73, 1
      %p77 = scmp.eq.s32.totalorder %s18, 1
      %p78 = scmp.ne.s32.totalorder %s73, %s75
      %p79 = scmp.eq.s32.totalorder %s18, 0
      %p80 = por %p78, %p79
      %p81 = scmp.ne.s32.totalorder %s73, %s75
      %p82 = scmp.eq.s32.totalorder %s23, 1
      %p83 = por %p81, %p82
      %p84 = scmp.ne.s32.totalorder %s75, %s76
      %p85 = scmp.eq.s32.totalorder %s23, 0
      %p86 = por %p84, %p85
      %p87 = scmp.ne.s32.totalorder %s75, %s76
      %p88 = scmp.eq.s32.totalorder %s24, 1
      %p89 = por %p87, %p88
      %p91 = scmp.ne.s32.totalorder %s76, %s90
      %p92 = scmp.eq.s32.totalorder %s24, 0
      %p93 = por %p91, %p92
      %s95 = sadd.s32 %s94, 1
      %p98 = scmp.eq.s32.totalorder %s18, 1
      %p99 = scmp.ne.s32.totalorder %s94, %s96
      %p100 = scmp.eq.s32.totalorder %s18, 0
      %p101 = por %p99, %p100
      %p102 = scmp.ne.s32.totalorder %s94, %s96
      %p103 = scmp.eq.s32.totalorder %s23, 1
      %p104 = por %p102, %p103
      %p105 = scmp.ne.s32.totalorder %s96, %s97
      %p106 = scmp.eq.s32.totalorder %s23, 0
      %p107 = por %p105, %p106
      %p108 = scmp.ne.s32.totalorder %s96, %s97
      %p109 = scmp.eq.s32.totalorder %s24, 1
      %p110 = por %p108, %p109
      %p112 = scmp.ne.s32.totalorder %s97, %s111
      %p113 = scmp.eq.s32.totalorder %s24, 0
      %p114 = por %p112, %p113
      %s116 = sadd.s32 %s115, 1
      %p119 = scmp.eq.s32.totalorder %s18, 1
      %p120 = scmp.ne.s32.totalorder %s115, %s117
      %p121 = scmp.eq.s32.totalorder %s18, 0
      %p122 = por %p120, %p121
      %p123 = scmp.ne.s32.totalorder %s115, %s117
      %p124 = scmp.eq.s32.totalorder %s23, 1
      %p125 = por %p123, %p124
      %p126 = scmp.ne.s32.totalorder %s117, %s118
      %p127 = scmp.eq.s32.totalorder %s23, 0
      %p128 = por %p126, %p127
      %p129 = scmp.ne.s32.totalorder %s117, %s118
      %p130 = scmp.eq.s32.totalorder %s24, 1
      %p131 = por %p129, %p130
      %p133 = scmp.ne.s32.totalorder %s118, %s132
      %p134 = scmp.eq.s32.totalorder %s24, 0
      %p135 = por %p133, %p134
      %s137 = sadd.s32 %s136, 1
      %p140 = scmp.eq.s32.totalorder %s18, 1
      %p141 = scmp.ne.s32.totalorder %s136, %s138
      %p142 = scmp.eq.s32.totalorder %s18, 0
      %p143 = por %p141, %p142
      %p144 = scmp.ne.s32.totalorder %s136, %s138
      %p145 = scmp.eq.s32.totalorder %s23, 1
      %p146 = por %p144, %p145
      %p147 = scmp.ne.s32.totalorder %s138, %s139
      %p148 = scmp.eq.s32.totalorder %s23, 0
      %p149 = por %p147, %p148
      %p150 = scmp.ne.s32.totalorder %s138, %s139
      %p151 = scmp.eq.s32.totalorder %s24, 1
      %p152 = por %p150, %p151
      %p154 = scmp.ne.s32.totalorder %s139, %s153
      %p155 = scmp.eq.s32.totalorder %s24, 0
      %p156 = por %p154, %p155
      %s157 = ssub.s32 %s18, %s25
      %p158 = scmp.eq.s32.totalorder %s157, 0
      %s160 = sadd.s32 %s159, 1
      %s161 = scalar_select %p158, %s159, %s160
      %p164 = pneg %p158
      %p165 = scmp.eq.s32.totalorder %s18, 1
      %p166 = por %p164, %p165
      %p167 = scmp.ne.s32.totalorder %s159, %s162
      %p168 = scmp.eq.s32.totalorder %s18, 0
      %p169 = por %p167, %p168
      %p170 = scmp.ne.s32.totalorder %s159, %s162
      %p171 = scmp.eq.s32.totalorder %s23, 1
      %p172 = por %p170, %p171
      %p173 = scmp.ne.s32.totalorder %s162, %s163
      %p174 = scmp.eq.s32.totalorder %s23, 0
      %p175 = por %p173, %p174
      %p176 = scmp.ne.s32.totalorder %s162, %s163
      %p177 = scmp.eq.s32.totalorder %s24, 1
      %p178 = por %p176, %p177
      %p180 = scmp.ne.s32.totalorder %s163, %s179
      %p181 = scmp.eq.s32.totalorder %s24, 0
      %p182 = por %p180, %p181
      %s183 = ssub.s32 %s18, %s25
      %p184 = scmp.eq.s32.totalorder %s183, 0
      %s186 = sadd.s32 %s185, 1
      %s187 = scalar_select %p184, %s185, %s186
      %p190 = pneg %p184
      %p191 = scmp.eq.s32.totalorder %s18, 1
      %p192 = por %p190, %p191
      %p193 = scmp.ne.s32.totalorder %s185, %s188
      %p194 = scmp.eq.s32.totalorder %s18, 0
      %p195 = por %p193, %p194
      %p196 = scmp.ne.s32.totalorder %s185, %s188
      %p197 = scmp.eq.s32.totalorder %s23, 1
      %p198 = por %p196, %p197
      %p199 = scmp.ne.s32.totalorder %s188, %s189
      %p200 = scmp.eq.s32.totalorder %s23, 0
      %p201 = por %p199, %p200
      %p202 = scmp.ne.s32.totalorder %s188, %s189
      %p203 = scmp.eq.s32.totalorder %s24, 1
      %p204 = por %p202, %p203
      %p206 = scmp.ne.s32.totalorder %s189, %s205
      %p207 = scmp.eq.s32.totalorder %s24, 0
      %p208 = por %p206, %p207
      %p209 = scmp.le.s32.totalorder 1, %s18
      %p210 = scmp.lt.s32.totalorder %s18, 3
      %p211 = pnand %p209, %p210
      %p212 = pneg %p211
      // Predicated region
      $region9: #{tpu_custom_call.1} parent=5 // pred_check
        _
      $region10: #{tpu_custom_call.1} parent=5 // pred_check_branch
        %214 = sbr.rel (%p211) target = $region12
      $region11: #{tpu_custom_call.1} parent=5 // pred_region
        %s215 = ssub.s32 %s18, 1
        // Predicated region
        $region13: #{tpu_custom_call.1} parent=11 // pred_check
          %p216 = pneg %p65
        $region14: #{tpu_custom_call.1} parent=11 // pred_check_branch
          %218 = sbr.rel (%p216) target = $region16
        $region15: #{tpu_custom_call.1} parent=11 // pred_region
          _
        $region16: #{tpu_custom_call.1} parent=11 // pred_fallthru
          _
        // Predicated region
        $region17: #{tpu_custom_call.1} parent=11 // pred_check
          %p219 = pneg %p86
        $region18: #{tpu_custom_call.1} parent=11 // pred_check_branch
          %221 = sbr.rel (%p219) target = $region20
        $region19: #{tpu_custom_call.1} parent=11 // pred_region
          _
        $region20: #{tpu_custom_call.1} parent=11 // pred_fallthru
          _
        // Predicated region
        $region21: #{tpu_custom_call.1} parent=11 // pred_check
          %p222 = pneg %p107
        $region22: #{tpu_custom_call.1} parent=11 // pred_check_branch
          %224 = sbr.rel (%p222) target = $region24
        $region23: #{tpu_custom_call.1} parent=11 // pred_region
          _
        $region24: #{tpu_custom_call.1} parent=11 // pred_fallthru
          _
        // Predicated region
        $region25: #{tpu_custom_call.1} parent=11 // pred_check
          %p225 = pneg %p128
        $region26: #{tpu_custom_call.1} parent=11 // pred_check_branch
          %227 = sbr.rel (%p225) target = $region28
        $region27: #{tpu_custom_call.1} parent=11 // pred_region
          _
        $region28: #{tpu_custom_call.1} parent=11 // pred_fallthru
          _
        // Predicated region
        $region29: #{tpu_custom_call.1} parent=11 // pred_check
          %p228 = pneg %p149
        $region30: #{tpu_custom_call.1} parent=11 // pred_check_branch
          %230 = sbr.rel (%p228) target = $region32
        $region31: #{tpu_custom_call.1} parent=11 // pred_region
          %s232 = ssub.s32 2048, 2048
          %233 = vsyncadd [#allocation4], %s232
          %s234 = sshll.u32 [#allocation3], 4
          %s235 = int_to_ptr.vmem [resolvable:$true] %s234
          %240 = dma.hbm_to_vmem [thread:$0]  %s5, 2048, %s235, [#allocation4], 64, 64, 4
        $region32: #{tpu_custom_call.1} parent=11 // pred_fallthru
          _
      $region12: #{tpu_custom_call.1} parent=5 // pred_fallthru
        _
      %p241 = scmp.lt.s32.totalorder %s18, 2
      // Predicated region
      $region33: #{tpu_custom_call.1} parent=5 // pred_check
        %p242 = pneg %p241
      $region34: #{tpu_custom_call.1} parent=5 // pred_check_branch
        %244 = sbr.rel (%p242) target = $region36
      $region35: #{tpu_custom_call.1} parent=5 // pred_region
        // Predicated region
        $region37: #{tpu_custom_call.1} parent=35 // pred_check
          %p245 = pneg %p38
        $region38: #{tpu_custom_call.1} parent=35 // pred_check_branch
          %247 = sbr.rel (%p245) target = $region40
        $region39: #{tpu_custom_call.1} parent=35 // pred_region
          %s248 = smul.u32 8, %s18
          %p249 = scmp.lt.s32.totalorder %s248, 15
          %s250 = scalar_select %p249, %s248, 15
          %s251 = smul.addr %s250, 4
          %s252 = scalar_lea.vmem %s0, %s251
          %s253 = smul.u32 8, %s18
        $region40: #{tpu_custom_call.1} parent=35 // pred_fallthru
          _
      $region36: #{tpu_custom_call.1} parent=5 // pred_fallthru
        _
      %p254 = scmp.le.s32.totalorder 1, %s18
      %p255 = scmp.lt.s32.totalorder %s18, 3
      %p256 = pnand %p254, %p255
      %p257 = pneg %p256
      // Predicated region
      $region41: #{tpu_custom_call.1} parent=5 // pred_check
        _
      $region42: #{tpu_custom_call.1} parent=5 // pred_check_branch
        %259 = sbr.rel (%p256) target = $region44
      $region43: #{tpu_custom_call.1} parent=5 // pred_region
        %s260 = ssub.s32 %s18, 1
        // Predicated region
        $region45: #{tpu_custom_call.1} parent=43 // pred_check
          %p261 = pneg %p149
        $region46: #{tpu_custom_call.1} parent=43 // pred_check_branch
          %263 = sbr.rel (%p261) target = $region48
        $region47: #{tpu_custom_call.1} parent=43 // pred_region
          %264 = dma.done [#allocation4], 2048
        $region48: #{tpu_custom_call.1} parent=43 // pred_fallthru
          _
        %s265 = smul.u32 8, %s23
        %p266 = scmp.lt.s32.totalorder %s265, 15
        %s267 = scalar_select %p266, %s265, 15
        %s268 = smul.addr %s267, 4
        %s269 = scalar_lea.vmem %s0, %s268
        %p270 = pneg %p44
        %p271 = pneg %p41
        %p272 = pneg %p65
        %p273 = pneg %p62
        %p274 = pneg %p86
        %p275 = pneg %p83
        %p276 = pneg %p107
        %p277 = pneg %p104
        %p278 = pneg %p128
        %p279 = pneg %p125
        %p280 = pneg %p149
        %p281 = pneg %p146
        %p282 = pneg %p175
        %p283 = pneg %p172
        %s284 = smul.u32 8, %s23
        %p285 = scmp.lt.s32.totalorder %s284, 15
        %s286 = scalar_select %p285, %s284, 15
        %s287 = smul.addr %s286, 8
        %s288 = scalar_lea.vmem %s6, %s287
        %p289 = pneg %p201
        %p290 = pneg %p198
        %s291 = sand.u32 %s188, 1
        %s292 = scalar_lea.sflag [#allocation5], %s291
        %s293 = sand.u32 %s188, 1
        %s294 = smul.addr %s293, 64
        %s295 = scalar_lea.vmem [#allocation6], %s294
        %s296 = smul.u32 8, %s23
        %p297 = scmp.lt.s32.totalorder %s296, 15
        %s298 = scalar_select %p297, %s296, 15
        %s299 = smul.addr %s298, 4
        %s300 = scalar_lea.vmem %s0, %s299
        %s301 = smul.u32 8, %s23
        %s302 = smul.u32 8, %s23
        %p303 = scmp.lt.s32.totalorder %s302, 15
        %s304 = scalar_select %p303, %s302, 15
        %s305 = smul.addr %s304, 8
        %s306 = scalar_lea.vmem %s6, %s305
        %s307 = smul.u32 8, %s23
        %s308 = smul.u32 8, %s23
        %v310 = vld [vmem:[%s300] sm:$0xf]
        %v311 = vld [vmem:[%s300 + $0x4] sm:$0xf]
        %v312 = vld [vmem:[%s300 + $0x8] sm:$0xf]
        %v313 = vld [vmem:[%s300 + $0xc] sm:$0xf]
        %v314 = vld [vmem:[%s300 + $0x10] sm:$0xf]
        %v315 = vld [vmem:[%s300 + $0x14] sm:$0xf]
        %v316 = vld [vmem:[%s300 + $0x18] sm:$0xf]
        %v317 = vld [vmem:[%s300 + $0x1c] sm:$0xf]
        %v318 = vld [vmem:[%s1] sm:$0xf]
        %v319 = vld [vmem:[%s1 + $0x4] sm:$0xf]
        %v320 = vld [vmem:[%s1 + $0x8] sm:$0xf]
        %v321 = vld [vmem:[%s1 + $0xc] sm:$0xf]
        %v322 = vld [vmem:[%s2] sm:$0x1]
        %v324 = vlaneseq
        %v325 = vshrl.u32 %v324, 7
        %v326 = vsub.s32 0, %v325
        %v327 = vrot.slane %v322, %v326
        %v337 = vunpack.c.l.b16 %v310
        %v338 = vunpack.c.l.b16 %v311
        %v339 = vunpack.c.l.b16 %v312
        %v340 = vunpack.c.l.b16 %v313
        %v341 = vunpack.c.l.b16 %v314
        %v342 = vunpack.c.l.b16 %v315
        %v343 = vunpack.c.l.b16 %v316
        %v344 = vunpack.c.l.b16 %v317
        %v345 = vpack.c.b16 %v338, %v337
        %v346 = vpack.c.b16 %v340, %v339
        %v347 = vpack.c.b16 %v342, %v341
        %v348 = vpack.c.b16 %v344, %v343
        %v353 = vunpack.c.l.b16 %v318
        %v354 = vunpack.c.l.b16 %v319
        %v355 = vunpack.c.l.b16 %v320
        %v356 = vunpack.c.l.b16 %v321
        %v357 = vpack.c.b16 %v354, %v353
        %v358 = vpack.c.b16 %v356, %v355
        %vm361 = vcmask 261120
        %v363 = vsel %vm361, %v345, 0
        %v366 = vsel %vm361, %v346, 0
        %v369 = vsel %vm361, %v347, 0
        %v372 = vsel %vm361, %v348, 0
        %374 = vmatprep.subr.bf16.mxu0 0
        %375 = vmatpush1.bf16.msra.mxu0 0
        %376 = vmatprep.subr.bf16.mxu0 0
        %377 = vmatpush1.bf16.msra.mxu0 0
        %378 = vmatprep.subr.bf16.mxu0 0
        %379 = vmatpush1.bf16.msra.mxu0 0
        %380 = vmatprep.subr.bf16.mxu0 0
        %381 = vmatpush1.bf16.msra.mxu0 0
        %382 = vmatprep.subr.bf16.mxu0 0
        %383 = vmatpush1.bf16.msra.mxu0 0
        %384 = vmatprep.subr.bf16.mxu0 0
        %385 = vmatpush1.bf16.msra.mxu0 0
        %386 = vmatprep.subr.bf16.mxu0 0
        %387 = vmatpush1.bf16.msra.mxu0 %v358
        %388 = vmatprep.subr.bf16.mxu0 0
        %389 = vmatpush1.bf16.msra.mxu0 %v357
        %390 = vmatprep.subr.bf16.mxu0 0
        %391 = vmatpush2.bf16.msra.mxu0 0
        %392 = vmatprep.subr.bf16.mxu0 0
        %393 = vmatpush2.bf16.msra.mxu0 0
        %394 = vmatprep.subr.bf16.mxu0 0
        %395 = vmatpush2.bf16.msra.mxu0 0
        %396 = vmatprep.subr.bf16.mxu0 0
        %397 = vmatpush2.bf16.msra.mxu0 0
        %398 = vmatprep.subr.bf16.mxu0 0
        %399 = vmatpush2.bf16.msra.mxu0 0
        %400 = vmatprep.subr.bf16.mxu0 0
        %401 = vmatpush2.bf16.msra.mxu0 0
        %402 = vmatprep.subr.bf16.mxu0 0
        %403 = vmatpush2.bf16.msra.mxu0 0
        %404 = vmatprep.subr.bf16.mxu0 0
        %405 = vmatpush2.bf16.msra.mxu0 0
        %406 = vmatprep.mubr.bf16.mxu0 0
        %407 = vmatmul.mubr.bf16.gmra.mxu0 %v363
        %v408 = vpop.f32.mrf.mxu0
        %v409 = vadd.f32 %v327, %v408
        %v410 = vpop.f32.mrf.mxu0
        %v411 = vpop.f32.mrf.mxu0
        %v412 = vadd.f32 %v327, %v411
        %v413 = vpop.f32.mrf.mxu0
        %414 = vmatprep.mubr.bf16.mxu0 0
        %415 = vmatmul.mubr.bf16.gmra.mxu0 %v366
        %v416 = vpop.f32.mrf.mxu0
        %v417 = vadd.f32 %v327, %v416
        %v418 = vpop.f32.mrf.mxu0
        %v419 = vpop.f32.mrf.mxu0
        %v420 = vadd.f32 %v327, %v419
        %v421 = vpop.f32.mrf.mxu0
        %422 = vmatprep.mubr.bf16.mxu0 0
        %423 = vmatmul.mubr.bf16.gmra.mxu0 %v369
        %v424 = vpop.f32.mrf.mxu0
        %v425 = vadd.f32 %v327, %v424
        %v426 = vpop.f32.mrf.mxu0
        %v427 = vpop.f32.mrf.mxu0
        %v428 = vadd.f32 %v327, %v427
        %v429 = vpop.f32.mrf.mxu0
        %430 = vmatprep.mubr.bf16.mxu0 0
        %431 = vmatmul.mubr.bf16.gmra.mxu0 %v372
        %v432 = vpop.f32.mrf.mxu0
        %v433 = vadd.f32 %v327, %v432
        %v434 = vpop.f32.mrf.mxu0
        %v435 = vpop.f32.mrf.mxu0
        %v436 = vadd.f32 %v327, %v435
        %v437 = vpop.f32.mrf.mxu0
        %438 = vdwg.mxu0
        %v439 = vpack.c.bf16 %v412, %v409
        %v440 = vpack.c.bf16 %v420, %v417
        %v441 = vpack.c.bf16 %v428, %v425
        %v442 = vpack.c.bf16 %v436, %v433
        %v447 = vunpack.c.l.b16 %v439
        %v448 = vunpack.c.h.b16 %v439
        %v449 = vunpack.c.l.b16 %v440
        %v450 = vunpack.c.h.b16 %v440
        %v451 = vunpack.c.l.b16 %v441
        %v452 = vunpack.c.h.b16 %v441
        %v453 = vunpack.c.l.b16 %v442
        %v454 = vunpack.c.h.b16 %v442
        %v455 = vpack.c.b16 %v447, %v447
        %v456 = vpack.c.b16 %v448, %v448
        %v457 = vpack.c.b16 %v449, %v449
        %v458 = vpack.c.b16 %v450, %v450
        %v459 = vpack.c.b16 %v451, %v451
        %v460 = vpack.c.b16 %v452, %v452
        %v461 = vpack.c.b16 %v453, %v453
        %v462 = vpack.c.b16 %v454, %v454
        %vm471 = vcmask 781312
        %472 = vst.msk [vmem:[#allocation2] sm:$0xf] %vm471, %v455
        %473 = vst.msk [vmem:[#allocation2 + $0x4] sm:$0xf] %vm471, %v456
        %474 = vst.msk [vmem:[#allocation2 + $0x8] sm:$0xf] %vm471, %v457
        %475 = vst.msk [vmem:[#allocation2 + $0xc] sm:$0xf] %vm471, %v458
        %476 = vst.msk [vmem:[#allocation2 + $0x10] sm:$0xf] %vm471, %v459
        %477 = vst.msk [vmem:[#allocation2 + $0x14] sm:$0xf] %vm471, %v460
        %478 = vst.msk [vmem:[#allocation2 + $0x18] sm:$0xf] %vm471, %v461
        %479 = vst.msk [vmem:[#allocation2 + $0x1c] sm:$0xf] %vm471, %v462
        %v480 = vld [vmem:[#allocation2] sm:$0xf]
        %v481 = vld [vmem:[#allocation2 + $0x4] sm:$0xf]
        %v482 = vld [vmem:[#allocation2 + $0x8] sm:$0xf]
        %v483 = vld [vmem:[#allocation2 + $0xc] sm:$0xf]
        %v484 = vld [vmem:[#allocation2 + $0x10] sm:$0xf]
        %v485 = vld [vmem:[#allocation2 + $0x14] sm:$0xf]
        %v486 = vld [vmem:[#allocation2 + $0x18] sm:$0xf]
        %v487 = vld [vmem:[#allocation2 + $0x1c] sm:$0xf]
        %v488 = vld [vmem:[#allocation3] sm:$0xf]
        %v489 = vld [vmem:[#allocation3 + $0x4] sm:$0xf]
        %v490 = vld [vmem:[#allocation3 + $0x8] sm:$0xf]
        %v491 = vld [vmem:[#allocation3 + $0xc] sm:$0xf]
        %v492 = vld [vmem:[#allocation3 + $0x10] sm:$0xf]
        %v493 = vld [vmem:[#allocation3 + $0x14] sm:$0xf]
        %v494 = vld [vmem:[#allocation3 + $0x18] sm:$0xf]
        %v495 = vld [vmem:[#allocation3 + $0x1c] sm:$0xf]
        %v496 = vunpack.c.l.bf16 %v488
        %v497 = vunpack.c.l.bf16 %v489
        %v498 = vunpack.c.l.bf16 %v490
        %v499 = vunpack.c.l.bf16 %v491
        %v500 = vunpack.c.l.bf16 %v492
        %v501 = vunpack.c.l.bf16 %v493
        %v502 = vunpack.c.l.bf16 %v494
        %v503 = vunpack.c.l.bf16 %v495
        %v512 = vunpack.c.l.b16 %v480
        %v513 = vunpack.c.l.b16 %v481
        %v514 = vunpack.c.l.b16 %v482
        %v515 = vunpack.c.l.b16 %v483
        %v516 = vunpack.c.l.b16 %v484
        %v517 = vunpack.c.l.b16 %v485
        %v518 = vunpack.c.l.b16 %v486
        %v519 = vunpack.c.l.b16 %v487
        %v520 = vpack.c.b16 %v513, %v512
        %v521 = vpack.c.b16 %v515, %v514
        %v522 = vpack.c.b16 %v517, %v516
        %v523 = vpack.c.b16 %v519, %v518
        %524 = vrot.lane.b32.xlu0 %v520, 96
        %v525 = vpop.permute.xlu0 %524
        %526 = vrot.lane.b32.xlu0 %v521, 96
        %v527 = vpop.permute.xlu0 %526
        %528 = vrot.lane.b32.xlu0 %v522, 96
        %v529 = vpop.permute.xlu0 %528
        %530 = vrot.lane.b32.xlu0 %v523, 96
        %v531 = vpop.permute.xlu0 %530
        %vm532 = vcmask 64512
        %v534 = vsel %vm532, %v520, 0
        %v537 = vsel %vm532, %v521, 0
        %v540 = vsel %vm532, %v522, 0
        %v543 = vsel %vm532, %v523, 0
        %v546 = vsel %vm532, %v525, 0
        %v549 = vsel %vm532, %v527, 0
        %v552 = vsel %vm532, %v529, 0
        %v555 = vsel %vm532, %v531, 0
        %557 = vmatprep.subr.bf16.mxu0 0
        %558 = vmatpush1.bf16.xpose.msra.mxu0 0
        %559 = vmatprep.subr.bf16.mxu0 0
        %560 = vmatpush1.bf16.xpose.msra.mxu0 0
        %561 = vmatprep.subr.bf16.mxu0 0
        %562 = vmatpush1.bf16.xpose.msra.mxu0 0
        %563 = vmatprep.subr.bf16.mxu0 0
        %564 = vmatpush1.bf16.xpose.msra.mxu0 0
        %565 = vmatprep.subr.bf16.mxu0 0
        %566 = vmatpush1.bf16.xpose.msra.mxu0 %v555
        %567 = vmatprep.subr.bf16.mxu0 0
        %568 = vmatpush1.bf16.xpose.msra.mxu0 %v552
        %569 = vmatprep.subr.bf16.mxu0 0
        %570 = vmatpush1.bf16.xpose.msra.mxu0 %v549
        %571 = vmatprep.subr.bf16.mxu0 0
        %572 = vmatpush1.bf16.xpose.msra.mxu0 %v546
        %573 = vmatprep.subr.bf16.mxu0 0
        %574 = vmatpush2.bf16.xpose.msra.mxu0 0
        %575 = vmatprep.subr.bf16.mxu0 0
        %576 = vmatpush2.bf16.xpose.msra.mxu0 0
        %577 = vmatprep.subr.bf16.mxu0 0
        %578 = vmatpush2.bf16.xpose.msra.mxu0 0
        %579 = vmatprep.subr.bf16.mxu0 0
        %580 = vmatpush2.bf16.xpose.msra.mxu0 0
        %581 = vmatprep.subr.bf16.mxu0 0
        %582 = vmatpush2.bf16.xpose.msra.mxu0 0
        %583 = vmatprep.subr.bf16.mxu0 0
        %584 = vmatpush2.bf16.xpose.msra.mxu0 0
        %585 = vmatprep.subr.bf16.mxu0 0
        %586 = vmatpush2.bf16.xpose.msra.mxu0 0
        %587 = vmatprep.subr.bf16.mxu0 0
        %588 = vmatpush2.bf16.xpose.msra.mxu0 0
        %589 = vmatprep.mubr.bf16.mxu0 0
        %590 = vmatmul.mubr.bf16.gmra.mxu0 %v534
        %v591 = vpop.f32.mrf.mxu0
        %v592 = vadd.f32 %v496, %v591
        %v593 = vpop.f32.mrf.mxu0
        %v594 = vpop.f32.mrf.mxu0
        %v595 = vadd.f32 %v497, %v594
        %v596 = vpop.f32.mrf.mxu0
        %597 = vmatprep.mubr.bf16.mxu0 0
        %598 = vmatmul.mubr.bf16.gmra.mxu0 %v537
        %v599 = vpop.f32.mrf.mxu0
        %v600 = vadd.f32 %v498, %v599
        %v601 = vpop.f32.mrf.mxu0
        %v602 = vpop.f32.mrf.mxu0
        %v603 = vadd.f32 %v499, %v602
        %v604 = vpop.f32.mrf.mxu0
        %605 = vmatprep.mubr.bf16.mxu0 0
        %606 = vmatmul.mubr.bf16.gmra.mxu0 %v540
        %v607 = vpop.f32.mrf.mxu0
        %v608 = vadd.f32 %v500, %v607
        %v609 = vpop.f32.mrf.mxu0
        %v610 = vpop.f32.mrf.mxu0
        %v611 = vadd.f32 %v501, %v610
        %v612 = vpop.f32.mrf.mxu0
        %613 = vmatprep.mubr.bf16.mxu0 0
        %614 = vmatmul.mubr.bf16.gmra.mxu0 %v543
        %v615 = vpop.f32.mrf.mxu0
        %v616 = vadd.f32 %v502, %v615
        %v617 = vpop.f32.mrf.mxu0
        %v618 = vpop.f32.mrf.mxu0
        %v619 = vadd.f32 %v503, %v618
        %v620 = vpop.f32.mrf.mxu0
        %621 = vdwg.mxu0
        %vm622 = vcmask 523264
        %v623 = vsel %vm622, %v592, -inf
        %624 = vmax.xlane.f32.xlu0 %v623
        %v625 = vpop.xlane.xlu0 %624
        %v626 = vsel %vm622, %v595, -inf
        %627 = vmax.xlane.f32.xlu0 %v626
        %v628 = vpop.xlane.xlu0 %627
        %v629 = vsel %vm622, %v600, -inf
        %630 = vmax.xlane.f32.xlu0 %v629
        %v631 = vpop.xlane.xlu0 %630
        %v632 = vsel %vm622, %v603, -inf
        %633 = vmax.xlane.f32.xlu0 %v632
        %v634 = vpop.xlane.xlu0 %633
        %v635 = vsel %vm622, %v608, -inf
        %636 = vmax.xlane.f32.xlu0 %v635
        %v637 = vpop.xlane.xlu0 %636
        %v638 = vsel %vm622, %v611, -inf
        %639 = vmax.xlane.f32.xlu0 %v638
        %v640 = vpop.xlane.xlu0 %639
        %v641 = vsel %vm622, %v616, -inf
        %642 = vmax.xlane.f32.xlu0 %v641
        %v643 = vpop.xlane.xlu0 %642
        %v644 = vsel %vm622, %v619, -inf
        %645 = vmax.xlane.f32.xlu0 %v644
        %v646 = vpop.xlane.xlu0 %645
        %v647 = vsub.f32 %v592, %v625
        %v648 = vsub.f32 %v595, %v628
        %v649 = vsub.f32 %v600, %v631
        %v650 = vsub.f32 %v603, %v634
        %v651 = vsub.f32 %v608, %v637
        %v652 = vsub.f32 %v611, %v640
        %v653 = vsub.f32 %v616, %v643
        %v654 = vsub.f32 %v619, %v646
        %v655 = vmul.f32 %v647, 1.442695
        %v656 = vpow.pop %v655
        %v657 = vmul.f32 %v648, 1.442695
        %v658 = vpow.pop %v657
        %v659 = vmul.f32 %v649, 1.442695
        %v660 = vpow.pop %v659
        %v661 = vmul.f32 %v650, 1.442695
        %v662 = vpow.pop %v661
        %v663 = vmul.f32 %v651, 1.442695
        %v664 = vpow.pop %v663
        %v665 = vmul.f32 %v652, 1.442695
        %v666 = vpow.pop %v665
        %v667 = vmul.f32 %v653, 1.442695
        %v668 = vpow.pop %v667
        %v669 = vmul.f32 %v654, 1.442695
        %v670 = vpow.pop %v669
        %v671 = vsel %vm622, %v656, 0.0
        %672 = vadd.xlane.f32.xlu0 %v671
        %v673 = vpop.xlane.xlu0 %672
        %v674 = vsel %vm622, %v658, 0.0
        %675 = vadd.xlane.f32.xlu0 %v674
        %v676 = vpop.xlane.xlu0 %675
        %v677 = vsel %vm622, %v660, 0.0
        %678 = vadd.xlane.f32.xlu0 %v677
        %v679 = vpop.xlane.xlu0 %678
        %v680 = vsel %vm622, %v662, 0.0
        %681 = vadd.xlane.f32.xlu0 %v680
        %v682 = vpop.xlane.xlu0 %681
        %v683 = vsel %vm622, %v664, 0.0
        %684 = vadd.xlane.f32.xlu0 %v683
        %v685 = vpop.xlane.xlu0 %684
        %v686 = vsel %vm622, %v666, 0.0
        %687 = vadd.xlane.f32.xlu0 %v686
        %v688 = vpop.xlane.xlu0 %687
        %v689 = vsel %vm622, %v668, 0.0
        %690 = vadd.xlane.f32.xlu0 %v689
        %v691 = vpop.xlane.xlu0 %690
        %v692 = vsel %vm622, %v670, 0.0
        %693 = vadd.xlane.f32.xlu0 %v692
        %v694 = vpop.xlane.xlu0 %693
        %v695 = vrcp.pop %v673
        %v696 = vrcp.pop %v676
        %v697 = vrcp.pop %v679
        %v698 = vrcp.pop %v682
        %v699 = vrcp.pop %v685
        %v700 = vrcp.pop %v688
        %v701 = vrcp.pop %v691
        %v702 = vrcp.pop %v694
        %v703 = vmul.f32 %v656, %v695
        %v704 = vmul.f32 %v658, %v696
        %v705 = vmul.f32 %v660, %v697
        %v706 = vmul.f32 %v662, %v698
        %v707 = vmul.f32 %v664, %v699
        %v708 = vmul.f32 %v666, %v700
        %v709 = vmul.f32 %v668, %v701
        %v710 = vmul.f32 %v670, %v702
        %v711 = vpack.c.bf16 %v704, %v703
        %v712 = vpack.c.bf16 %v706, %v705
        %v713 = vpack.c.bf16 %v708, %v707
        %v714 = vpack.c.bf16 %v710, %v709
        %715 = vrot.lane.b32.xlu0 %v520, 64
        %v716 = vpop.permute.xlu0 %715
        %717 = vrot.lane.b32.xlu0 %v521, 64
        %v718 = vpop.permute.xlu0 %717
        %719 = vrot.lane.b32.xlu0 %v522, 64
        %v720 = vpop.permute.xlu0 %719
        %721 = vrot.lane.b32.xlu0 %v523, 64
        %v722 = vpop.permute.xlu0 %721
        %v728 = vsel %vm622, %v711, 0
        %v731 = vsel %vm622, %v712, 0
        %v734 = vsel %vm622, %v713, 0
        %v737 = vsel %vm622, %v714, 0
        %739 = vmatprep.subr.bf16.mxu0 0
        %740 = vmatpush1.bf16.msra.mxu0 0
        %741 = vmatprep.subr.bf16.mxu0 0
        %742 = vmatpush1.bf16.msra.mxu0 0
        %743 = vmatprep.subr.bf16.mxu0 0
        %744 = vmatpush1.bf16.msra.mxu0 0
        %745 = vmatprep.subr.bf16.mxu0 0
        %746 = vmatpush1.bf16.msra.mxu0 0
        %747 = vmatprep.subr.bf16.mxu0 0
        %748 = vmatpush1.bf16.msra.mxu0 %v722
        %749 = vmatprep.subr.bf16.mxu0 0
        %750 = vmatpush1.bf16.msra.mxu0 %v720
        %751 = vmatprep.subr.bf16.mxu0 0
        %752 = vmatpush1.bf16.msra.mxu0 %v718
        %753 = vmatprep.subr.bf16.mxu0 0
        %754 = vmatpush1.bf16.msra.mxu0 %v716
        %755 = vmatprep.subr.bf16.mxu0 0
        %756 = vmatpush2.bf16.msra.mxu0 0
        %757 = vmatprep.subr.bf16.mxu0 0
        %758 = vmatpush2.bf16.msra.mxu0 0
        %759 = vmatprep.subr.bf16.mxu0 0
        %760 = vmatpush2.bf16.msra.mxu0 0
        %761 = vmatprep.subr.bf16.mxu0 0
        %762 = vmatpush2.bf16.msra.mxu0 0
        %763 = vmatprep.subr.bf16.mxu0 0
        %764 = vmatpush2.bf16.msra.mxu0 0
        %765 = vmatprep.subr.bf16.mxu0 0
        %766 = vmatpush2.bf16.msra.mxu0 0
        %767 = vmatprep.subr.bf16.mxu0 0
        %768 = vmatpush2.bf16.msra.mxu0 0
        %769 = vmatprep.subr.bf16.mxu0 0
        %770 = vmatpush2.bf16.msra.mxu0 0
        %771 = vmatprep.mubr.bf16.mxu0 0
        %772 = vmatmul.mubr.bf16.gmra.mxu0 %v728
        %v773 = vpop.f32.mrf.mxu0
        %v774 = vadd.f32 0.0, %v773
        %v775 = vpop.f32.mrf.mxu0
        %v776 = vpop.f32.mrf.mxu0
        %v777 = vadd.f32 0.0, %v776
        %v778 = vpop.f32.mrf.mxu0
        %779 = vmatprep.mubr.bf16.mxu0 0
        %780 = vmatmul.mubr.bf16.gmra.mxu0 %v731
        %v781 = vpop.f32.mrf.mxu0
        %v782 = vadd.f32 0.0, %v781
        %v783 = vpop.f32.mrf.mxu0
        %v784 = vpop.f32.mrf.mxu0
        %v785 = vadd.f32 0.0, %v784
        %v786 = vpop.f32.mrf.mxu0
        %787 = vmatprep.mubr.bf16.mxu0 0
        %788 = vmatmul.mubr.bf16.gmra.mxu0 %v734
        %v789 = vpop.f32.mrf.mxu0
        %v790 = vadd.f32 0.0, %v789
        %v791 = vpop.f32.mrf.mxu0
        %v792 = vpop.f32.mrf.mxu0
        %v793 = vadd.f32 0.0, %v792
        %v794 = vpop.f32.mrf.mxu0
        %795 = vmatprep.mubr.bf16.mxu0 0
        %796 = vmatmul.mubr.bf16.gmra.mxu0 %v737
        %v797 = vpop.f32.mrf.mxu0
        %v798 = vadd.f32 0.0, %v797
        %v799 = vpop.f32.mrf.mxu0
        %v800 = vpop.f32.mrf.mxu0
        %v801 = vadd.f32 0.0, %v800
        %v802 = vpop.f32.mrf.mxu0
        %803 = vdwg.mxu0
        %v804 = vpack.c.bf16 %v777, %v774
        %v805 = vpack.c.bf16 %v785, %v782
        %v806 = vpack.c.bf16 %v793, %v790
        %v807 = vpack.c.bf16 %v801, %v798
        %v808 = vld [vmem:[%s3] sm:$0xf]
        %s809 = scalar_lea.vmem [#allocation3], 32
        %v810 = vld [vmem:[%s809] sm:$0xf]
        %v811 = vld [vmem:[%s809 + $0x4] sm:$0xf]
        %v812 = vld [vmem:[%s809 + $0x8] sm:$0xf]
        %v813 = vld [vmem:[%s809 + $0xc] sm:$0xf]
        %v814 = vld [vmem:[%s809 + $0x10] sm:$0xf]
        %v815 = vld [vmem:[%s809 + $0x14] sm:$0xf]
        %v816 = vld [vmem:[%s809 + $0x18] sm:$0xf]
        %v817 = vld [vmem:[%s809 + $0x1c] sm:$0xf]
        %v818 = vunpack.c.l.bf16 %v810
        %v819 = vunpack.c.l.bf16 %v811
        %v820 = vunpack.c.l.bf16 %v812
        %v821 = vunpack.c.l.bf16 %v813
        %v822 = vunpack.c.l.bf16 %v814
        %v823 = vunpack.c.l.bf16 %v815
        %v824 = vunpack.c.l.bf16 %v816
        %v825 = vunpack.c.l.bf16 %v817
        %826 = vrot.lane.b32.xlu0 %v520, 120
        %v827 = vpop.permute.xlu0 %826
        %828 = vrot.lane.b32.xlu0 %v521, 120
        %v829 = vpop.permute.xlu0 %828
        %830 = vrot.lane.b32.xlu0 %v522, 120
        %v831 = vpop.permute.xlu0 %830
        %832 = vrot.lane.b32.xlu0 %v523, 120
        %v833 = vpop.permute.xlu0 %832
        %834 = vrot.lane.b32.xlu0 %v520, 88
        %v835 = vpop.permute.xlu0 %834
        %836 = vrot.lane.b32.xlu0 %v521, 88
        %v837 = vpop.permute.xlu0 %836
        %838 = vrot.lane.b32.xlu0 %v522, 88
        %v839 = vpop.permute.xlu0 %838
        %840 = vrot.lane.b32.xlu0 %v523, 88
        %v841 = vpop.permute.xlu0 %840
        %v843 = vsel %vm532, %v827, 0
        %v846 = vsel %vm532, %v829, 0
        %v849 = vsel %vm532, %v831, 0
        %v852 = vsel %vm532, %v833, 0
        %v855 = vsel %vm532, %v835, 0
        %v858 = vsel %vm532, %v837, 0
        %v861 = vsel %vm532, %v839, 0
        %v864 = vsel %vm532, %v841, 0
        %866 = vmatprep.subr.bf16.mxu0 0
        %867 = vmatpush1.bf16.xpose.msra.mxu0 0
        %868 = vmatprep.subr.bf16.mxu0 0
        %869 = vmatpush1.bf16.xpose.msra.mxu0 0
        %870 = vmatprep.subr.bf16.mxu0 0
        %871 = vmatpush1.bf16.xpose.msra.mxu0 0
        %872 = vmatprep.subr.bf16.mxu0 0
        %873 = vmatpush1.bf16.xpose.msra.mxu0 0
        %874 = vmatprep.subr.bf16.mxu0 0
        %875 = vmatpush1.bf16.xpose.msra.mxu0 %v864
        %876 = vmatprep.subr.bf16.mxu0 0
        %877 = vmatpush1.bf16.xpose.msra.mxu0 %v861
        %878 = vmatprep.subr.bf16.mxu0 0
        %879 = vmatpush1.bf16.xpose.msra.mxu0 %v858
        %880 = vmatprep.subr.bf16.mxu0 0
        %881 = vmatpush1.bf16.xpose.msra.mxu0 %v855
        %882 = vmatprep.subr.bf16.mxu0 0
        %883 = vmatpush2.bf16.xpose.msra.mxu0 0
        %884 = vmatprep.subr.bf16.mxu0 0
        %885 = vmatpush2.bf16.xpose.msra.mxu0 0
        %886 = vmatprep.subr.bf16.mxu0 0
        %887 = vmatpush2.bf16.xpose.msra.mxu0 0
        %888 = vmatprep.subr.bf16.mxu0 0
        %889 = vmatpush2.bf16.xpose.msra.mxu0 0
        %890 = vmatprep.subr.bf16.mxu0 0
        %891 = vmatpush2.bf16.xpose.msra.mxu0 0
        %892 = vmatprep.subr.bf16.mxu0 0
        %893 = vmatpush2.bf16.xpose.msra.mxu0 0
        %894 = vmatprep.subr.bf16.mxu0 0
        %895 = vmatpush2.bf16.xpose.msra.mxu0 0
        %896 = vmatprep.subr.bf16.mxu0 0
        %897 = vmatpush2.bf16.xpose.msra.mxu0 0
        %898 = vmatprep.mubr.bf16.mxu0 0
        %899 = vmatmul.mubr.bf16.gmra.mxu0 %v843
        %v900 = vpop.f32.mrf.mxu0
        %v901 = vadd.f32 %v818, %v900
        %v902 = vpop.f32.mrf.mxu0
        %v903 = vpop.f32.mrf.mxu0
        %v904 = vadd.f32 %v819, %v903
        %v905 = vpop.f32.mrf.mxu0
        %906 = vmatprep.mubr.bf16.mxu0 0
        %907 = vmatmul.mubr.bf16.gmra.mxu0 %v846
        %v908 = vpop.f32.mrf.mxu0
        %v909 = vadd.f32 %v820, %v908
        %v910 = vpop.f32.mrf.mxu0
        %v911 = vpop.f32.mrf.mxu0
        %v912 = vadd.f32 %v821, %v911
        %v913 = vpop.f32.mrf.mxu0
        %914 = vmatprep.mubr.bf16.mxu0 0
        %915 = vmatmul.mubr.bf16.gmra.mxu0 %v849
        %v916 = vpop.f32.mrf.mxu0
        %v917 = vadd.f32 %v822, %v916
        %v918 = vpop.f32.mrf.mxu0
        %v919 = vpop.f32.mrf.mxu0
        %v920 = vadd.f32 %v823, %v919
        %v921 = vpop.f32.mrf.mxu0
        %922 = vmatprep.mubr.bf16.mxu0 0
        %923 = vmatmul.mubr.bf16.gmra.mxu0 %v852
        %v924 = vpop.f32.mrf.mxu0
        %v925 = vadd.f32 %v824, %v924
        %v926 = vpop.f32.mrf.mxu0
        %v927 = vpop.f32.mrf.mxu0
        %v928 = vadd.f32 %v825, %v927
        %v929 = vpop.f32.mrf.mxu0
        %930 = vdwg.mxu0
        %v931 = vsel %vm622, %v901, -inf
        %932 = vmax.xlane.f32.xlu0 %v931
        %v933 = vpop.xlane.xlu0 %932
        %v934 = vsel %vm622, %v904, -inf
        %935 = vmax.xlane.f32.xlu0 %v934
        %v936 = vpop.xlane.xlu0 %935
        %v937 = vsel %vm622, %v909, -inf
        %938 = vmax.xlane.f32.xlu0 %v937
        %v939 = vpop.xlane.xlu0 %938
        %v940 = vsel %vm622, %v912, -inf
        %941 = vmax.xlane.f32.xlu0 %v940
        %v942 = vpop.xlane.xlu0 %941
        %v943 = vsel %vm622, %v917, -inf
        %944 = vmax.xlane.f32.xlu0 %v943
        %v945 = vpop.xlane.xlu0 %944
        %v946 = vsel %vm622, %v920, -inf
        %947 = vmax.xlane.f32.xlu0 %v946
        %v948 = vpop.xlane.xlu0 %947
        %v949 = vsel %vm622, %v925, -inf
        %950 = vmax.xlane.f32.xlu0 %v949
        %v951 = vpop.xlane.xlu0 %950
        %v952 = vsel %vm622, %v928, -inf
        %953 = vmax.xlane.f32.xlu0 %v952
        %v954 = vpop.xlane.xlu0 %953
        %v955 = vsub.f32 %v901, %v933
        %v956 = vsub.f32 %v904, %v936
        %v957 = vsub.f32 %v909, %v939
        %v958 = vsub.f32 %v912, %v942
        %v959 = vsub.f32 %v917, %v945
        %v960 = vsub.f32 %v920, %v948
        %v961 = vsub.f32 %v925, %v951
        %v962 = vsub.f32 %v928, %v954
        %v963 = vmul.f32 %v955, 1.442695
        %v964 = vpow.pop %v963
        %v965 = vmul.f32 %v956, 1.442695
        %v966 = vpow.pop %v965
        %v967 = vmul.f32 %v957, 1.442695
        %v968 = vpow.pop %v967
        %v969 = vmul.f32 %v958, 1.442695
        %v970 = vpow.pop %v969
        %v971 = vmul.f32 %v959, 1.442695
        %v972 = vpow.pop %v971
        %v973 = vmul.f32 %v960, 1.442695
        %v974 = vpow.pop %v973
        %v975 = vmul.f32 %v961, 1.442695
        %v976 = vpow.pop %v975
        %v977 = vmul.f32 %v962, 1.442695
        %v978 = vpow.pop %v977
        %v979 = vsel %vm622, %v964, 0.0
        %980 = vadd.xlane.f32.xlu0 %v979
        %v981 = vpop.xlane.xlu0 %980
        %v982 = vsel %vm622, %v966, 0.0
        %983 = vadd.xlane.f32.xlu0 %v982
        %v984 = vpop.xlane.xlu0 %983
        %v985 = vsel %vm622, %v968, 0.0
        %986 = vadd.xlane.f32.xlu0 %v985
        %v987 = vpop.xlane.xlu0 %986
        %v988 = vsel %vm622, %v970, 0.0
        %989 = vadd.xlane.f32.xlu0 %v988
        %v990 = vpop.xlane.xlu0 %989
        %v991 = vsel %vm622, %v972, 0.0
        %992 = vadd.xlane.f32.xlu0 %v991
        %v993 = vpop.xlane.xlu0 %992
        %v994 = vsel %vm622, %v974, 0.0
        %995 = vadd.xlane.f32.xlu0 %v994
        %v996 = vpop.xlane.xlu0 %995
        %v997 = vsel %vm622, %v976, 0.0
        %998 = vadd.xlane.f32.xlu0 %v997
        %v999 = vpop.xlane.xlu0 %998
        %v1000 = vsel %vm622, %v978, 0.0
        %1001 = vadd.xlane.f32.xlu0 %v1000
        %v1002 = vpop.xlane.xlu0 %1001
        %v1003 = vrcp.pop %v981
        %v1004 = vrcp.pop %v984
        %v1005 = vrcp.pop %v987
        %v1006 = vrcp.pop %v990
        %v1007 = vrcp.pop %v993
        %v1008 = vrcp.pop %v996
        %v1009 = vrcp.pop %v999
        %v1010 = vrcp.pop %v1002
        %v1011 = vmul.f32 %v964, %v1003
        %v1012 = vmul.f32 %v966, %v1004
        %v1013 = vmul.f32 %v968, %v1005
        %v1014 = vmul.f32 %v970, %v1006
        %v1015 = vmul.f32 %v972, %v1007
        %v1016 = vmul.f32 %v974, %v1008
        %v1017 = vmul.f32 %v976, %v1009
        %v1018 = vmul.f32 %v978, %v1010
        %v1019 = vpack.c.bf16 %v1012, %v1011
        %v1020 = vpack.c.bf16 %v1014, %v1013
        %v1021 = vpack.c.bf16 %v1016, %v1015
        %v1022 = vpack.c.bf16 %v1018, %v1017
        %1023 = vrot.lane.b32.xlu0 %v520, 56
        %v1024 = vpop.permute.xlu0 %1023
        %1025 = vrot.lane.b32.xlu0 %v521, 56
        %v1026 = vpop.permute.xlu0 %1025
        %1027 = vrot.lane.b32.xlu0 %v522, 56
        %v1028 = vpop.permute.xlu0 %1027
        %1029 = vrot.lane.b32.xlu0 %v523, 56
        %v1030 = vpop.permute.xlu0 %1029
        %v1036 = vsel %vm622, %v1019, 0
        %v1039 = vsel %vm622, %v1020, 0
        %v1042 = vsel %vm622, %v1021, 0
        %v1045 = vsel %vm622, %v1022, 0
        %1047 = vmatprep.subr.bf16.mxu0 0
        %1048 = vmatpush1.bf16.msra.mxu0 0
        %1049 = vmatprep.subr.bf16.mxu0 0
        %1050 = vmatpush1.bf16.msra.mxu0 0
        %1051 = vmatprep.subr.bf16.mxu0 0
        %1052 = vmatpush1.bf16.msra.mxu0 0
        %1053 = vmatprep.subr.bf16.mxu0 0
        %1054 = vmatpush1.bf16.msra.mxu0 0
        %1055 = vmatprep.subr.bf16.mxu0 0
        %1056 = vmatpush1.bf16.msra.mxu0 %v1030
        %1057 = vmatprep.subr.bf16.mxu0 0
        %1058 = vmatpush1.bf16.msra.mxu0 %v1028
        %1059 = vmatprep.subr.bf16.mxu0 0
        %1060 = vmatpush1.bf16.msra.mxu0 %v1026
        %1061 = vmatprep.subr.bf16.mxu0 0
        %1062 = vmatpush1.bf16.msra.mxu0 %v1024
        %1063 = vmatprep.subr.bf16.mxu0 0
        %1064 = vmatpush2.bf16.msra.mxu0 0
        %1065 = vmatprep.subr.bf16.mxu0 0
        %1066 = vmatpush2.bf16.msra.mxu0 0
        %1067 = vmatprep.subr.bf16.mxu0 0
        %1068 = vmatpush2.bf16.msra.mxu0 0
        %1069 = vmatprep.subr.bf16.mxu0 0
        %1070 = vmatpush2.bf16.msra.mxu0 0
        %1071 = vmatprep.subr.bf16.mxu0 0
        %1072 = vmatpush2.bf16.msra.mxu0 0
        %1073 = vmatprep.subr.bf16.mxu0 0
        %1074 = vmatpush2.bf16.msra.mxu0 0
        %1075 = vmatprep.subr.bf16.mxu0 0
        %1076 = vmatpush2.bf16.msra.mxu0 0
        %1077 = vmatprep.subr.bf16.mxu0 0
        %1078 = vmatpush2.bf16.msra.mxu0 0
        %1079 = vmatprep.mubr.bf16.mxu0 0
        %1080 = vmatmul.mubr.bf16.gmra.mxu0 %v1036
        %v1081 = vpop.f32.mrf.mxu0
        %v1082 = vadd.f32 0.0, %v1081
        %v1083 = vpop.f32.mrf.mxu0
        %v1084 = vpop.f32.mrf.mxu0
        %v1085 = vadd.f32 0.0, %v1084
        %v1086 = vpop.f32.mrf.mxu0
        %1087 = vmatprep.mubr.bf16.mxu0 0
        %1088 = vmatmul.mubr.bf16.gmra.mxu0 %v1039
        %v1089 = vpop.f32.mrf.mxu0
        %v1090 = vadd.f32 0.0, %v1089
        %v1091 = vpop.f32.mrf.mxu0
        %v1092 = vpop.f32.mrf.mxu0
        %v1093 = vadd.f32 0.0, %v1092
        %v1094 = vpop.f32.mrf.mxu0
        %1095 = vmatprep.mubr.bf16.mxu0 0
        %1096 = vmatmul.mubr.bf16.gmra.mxu0 %v1042
        %v1097 = vpop.f32.mrf.mxu0
        %v1098 = vadd.f32 0.0, %v1097
        %v1099 = vpop.f32.mrf.mxu0
        %v1100 = vpop.f32.mrf.mxu0
        %v1101 = vadd.f32 0.0, %v1100
        %v1102 = vpop.f32.mrf.mxu0
        %1103 = vmatprep.mubr.bf16.mxu0 0
        %1104 = vmatmul.mubr.bf16.gmra.mxu0 %v1045
        %v1105 = vpop.f32.mrf.mxu0
        %v1106 = vadd.f32 0.0, %v1105
        %v1107 = vpop.f32.mrf.mxu0
        %v1108 = vpop.f32.mrf.mxu0
        %v1109 = vadd.f32 0.0, %v1108
        %v1110 = vpop.f32.mrf.mxu0
        %1111 = vdwg.mxu0
        %v1112 = vpack.c.bf16 %v1085, %v1082
        %v1113 = vpack.c.bf16 %v1093, %v1090
        %v1114 = vpack.c.bf16 %v1101, %v1098
        %v1115 = vpack.c.bf16 %v1109, %v1106
        %v1116 = vld [vmem:[%s3 + $0x4] sm:$0xf]
        %v1118 = vsel %vm532, %v1112, 0
        %v1121 = vsel %vm532, %v1113, 0
        %v1124 = vsel %vm532, %v1114, 0
        %v1127 = vsel %vm532, %v1115, 0
        %vm1129 = vcmask 1043456
        %v1131 = vsel %vm1129, %v1116, 0
        %1133 = vmatprep.subr.bf16.mxu0 0
        %1134 = vmatpush1.bf16.msra.mxu0 0
        %1135 = vmatprep.subr.bf16.mxu0 0
        %1136 = vmatpush1.bf16.msra.mxu0 0
        %1137 = vmatprep.subr.bf16.mxu0 0
        %1138 = vmatpush1.bf16.msra.mxu0 0
        %1139 = vmatprep.subr.bf16.mxu0 0
        %1140 = vmatpush1.bf16.msra.mxu0 0
        %1141 = vmatprep.subr.bf16.mxu0 0
        %1142 = vmatpush1.bf16.msra.mxu0 0
        %1143 = vmatprep.subr.bf16.mxu0 0
        %1144 = vmatpush1.bf16.msra.mxu0 0
        %1145 = vmatprep.subr.bf16.mxu0 0
        %1146 = vmatpush1.bf16.msra.mxu0 0
        %1147 = vmatprep.subr.bf16.mxu0 0
        %1148 = vmatpush1.bf16.msra.mxu0 %v1131
        %1149 = vmatprep.subr.bf16.mxu0 0
        %1150 = vmatpush2.bf16.msra.mxu0 0
        %1151 = vmatprep.subr.bf16.mxu0 0
        %1152 = vmatpush2.bf16.msra.mxu0 0
        %1153 = vmatprep.subr.bf16.mxu0 0
        %1154 = vmatpush2.bf16.msra.mxu0 0
        %1155 = vmatprep.subr.bf16.mxu0 0
        %1156 = vmatpush2.bf16.msra.mxu0 0
        %1157 = vmatprep.subr.bf16.mxu0 0
        %1158 = vmatpush2.bf16.msra.mxu0 0
        %1159 = vmatprep.subr.bf16.mxu0 0
        %1160 = vmatpush2.bf16.msra.mxu0 0
        %1161 = vmatprep.subr.bf16.mxu0 0
        %1162 = vmatpush2.bf16.msra.mxu0 0
        %1163 = vmatprep.subr.bf16.mxu0 0
        %1164 = vmatpush2.bf16.msra.mxu0 0
        %1165 = vmatprep.mubr.bf16.mxu0 0
        %1166 = vmatmul.mubr.bf16.gmra.mxu0 %v1118
        %v1167 = vpop.f32.mrf.mxu0
        %v1168 = vadd.f32 0.0, %v1167
        %v1169 = vpop.f32.mrf.mxu0
        %v1170 = vpop.f32.mrf.mxu0
        %v1171 = vadd.f32 0.0, %v1170
        %v1172 = vpop.f32.mrf.mxu0
        %1173 = vmatprep.mubr.bf16.mxu0 0
        %1174 = vmatmul.mubr.bf16.gmra.mxu0 %v1121
        %v1175 = vpop.f32.mrf.mxu0
        %v1176 = vadd.f32 0.0, %v1175
        %v1177 = vpop.f32.mrf.mxu0
        %v1178 = vpop.f32.mrf.mxu0
        %v1179 = vadd.f32 0.0, %v1178
        %v1180 = vpop.f32.mrf.mxu0
        %1181 = vmatprep.mubr.bf16.mxu0 0
        %1182 = vmatmul.mubr.bf16.gmra.mxu0 %v1124
        %v1183 = vpop.f32.mrf.mxu0
        %v1184 = vadd.f32 0.0, %v1183
        %v1185 = vpop.f32.mrf.mxu0
        %v1186 = vpop.f32.mrf.mxu0
        %v1187 = vadd.f32 0.0, %v1186
        %v1188 = vpop.f32.mrf.mxu0
        %1189 = vmatprep.mubr.bf16.mxu0 0
        %1190 = vmatmul.mubr.bf16.gmra.mxu0 %v1127
        %v1191 = vpop.f32.mrf.mxu0
        %v1192 = vadd.f32 0.0, %v1191
        %v1193 = vpop.f32.mrf.mxu0
        %v1194 = vpop.f32.mrf.mxu0
        %v1195 = vadd.f32 0.0, %v1194
        %v1196 = vpop.f32.mrf.mxu0
        %1197 = vdwg.mxu0
        %v1199 = vsel %vm532, %v804, 0
        %v1202 = vsel %vm532, %v805, 0
        %v1205 = vsel %vm532, %v806, 0
        %v1208 = vsel %vm532, %v807, 0
        %v1211 = vsel %vm1129, %v808, 0
        %1213 = vmatprep.subr.bf16.mxu0 0
        %1214 = vmatpush1.bf16.msra.mxu0 0
        %1215 = vmatprep.subr.bf16.mxu0 0
        %1216 = vmatpush1.bf16.msra.mxu0 0
        %1217 = vmatprep.subr.bf16.mxu0 0
        %1218 = vmatpush1.bf16.msra.mxu0 0
        %1219 = vmatprep.subr.bf16.mxu0 0
        %1220 = vmatpush1.bf16.msra.mxu0 0
        %1221 = vmatprep.subr.bf16.mxu0 0
        %1222 = vmatpush1.bf16.msra.mxu0 0
        %1223 = vmatprep.subr.bf16.mxu0 0
        %1224 = vmatpush1.bf16.msra.mxu0 0
        %1225 = vmatprep.subr.bf16.mxu0 0
        %1226 = vmatpush1.bf16.msra.mxu0 0
        %1227 = vmatprep.subr.bf16.mxu0 0
        %1228 = vmatpush1.bf16.msra.mxu0 %v1211
        %1229 = vmatprep.subr.bf16.mxu0 0
        %1230 = vmatpush2.bf16.msra.mxu0 0
        %1231 = vmatprep.subr.bf16.mxu0 0
        %1232 = vmatpush2.bf16.msra.mxu0 0
        %1233 = vmatprep.subr.bf16.mxu0 0
        %1234 = vmatpush2.bf16.msra.mxu0 0
        %1235 = vmatprep.subr.bf16.mxu0 0
        %1236 = vmatpush2.bf16.msra.mxu0 0
        %1237 = vmatprep.subr.bf16.mxu0 0
        %1238 = vmatpush2.bf16.msra.mxu0 0
        %1239 = vmatprep.subr.bf16.mxu0 0
        %1240 = vmatpush2.bf16.msra.mxu0 0
        %1241 = vmatprep.subr.bf16.mxu0 0
        %1242 = vmatpush2.bf16.msra.mxu0 0
        %1243 = vmatprep.subr.bf16.mxu0 0
        %1244 = vmatpush2.bf16.msra.mxu0 0
        %1245 = vmatprep.mubr.bf16.mxu0 0
        %1246 = vmatmul.mubr.bf16.gmra.mxu0 %v1199
        %v1247 = vpop.f32.mrf.mxu0
        %v1248 = vadd.f32 %v1168, %v1247
        %v1249 = vpop.f32.mrf.mxu0
        %v1250 = vpop.f32.mrf.mxu0
        %v1251 = vadd.f32 %v1171, %v1250
        %v1252 = vpop.f32.mrf.mxu0
        %1253 = vmatprep.mubr.bf16.mxu0 0
        %1254 = vmatmul.mubr.bf16.gmra.mxu0 %v1202
        %v1255 = vpop.f32.mrf.mxu0
        %v1256 = vadd.f32 %v1176, %v1255
        %v1257 = vpop.f32.mrf.mxu0
        %v1258 = vpop.f32.mrf.mxu0
        %v1259 = vadd.f32 %v1179, %v1258
        %v1260 = vpop.f32.mrf.mxu0
        %1261 = vmatprep.mubr.bf16.mxu0 0
        %1262 = vmatmul.mubr.bf16.gmra.mxu0 %v1205
        %v1263 = vpop.f32.mrf.mxu0
        %v1264 = vadd.f32 %v1184, %v1263
        %v1265 = vpop.f32.mrf.mxu0
        %v1266 = vpop.f32.mrf.mxu0
        %v1267 = vadd.f32 %v1187, %v1266
        %v1268 = vpop.f32.mrf.mxu0
        %1269 = vmatprep.mubr.bf16.mxu0 0
        %1270 = vmatmul.mubr.bf16.gmra.mxu0 %v1208
        %v1271 = vpop.f32.mrf.mxu0
        %v1272 = vadd.f32 %v1192, %v1271
        %v1273 = vpop.f32.mrf.mxu0
        %v1274 = vpop.f32.mrf.mxu0
        %v1275 = vadd.f32 %v1195, %v1274
        %v1276 = vpop.f32.mrf.mxu0
        %1277 = vdwg.mxu0
        %s1278 = scalar_lea.vmem [#allocation3], 64
        %v1279 = vld [vmem:[%s1278] sm:$0xf]
        %v1280 = vld [vmem:[%s1278 + $0x4] sm:$0xf]
        %v1281 = vld [vmem:[%s1278 + $0x8] sm:$0xf]
        %v1282 = vld [vmem:[%s1278 + $0xc] sm:$0xf]
        %v1283 = vld [vmem:[%s1278 + $0x10] sm:$0xf]
        %v1284 = vld [vmem:[%s1278 + $0x14] sm:$0xf]
        %v1285 = vld [vmem:[%s1278 + $0x18] sm:$0xf]
        %v1286 = vld [vmem:[%s1278 + $0x1c] sm:$0xf]
        %v1287 = vunpack.c.l.bf16 %v1279
        %v1288 = vunpack.c.l.bf16 %v1280
        %v1289 = vunpack.c.l.bf16 %v1281
        %v1290 = vunpack.c.l.bf16 %v1282
        %v1291 = vunpack.c.l.bf16 %v1283
        %v1292 = vunpack.c.l.bf16 %v1284
        %v1293 = vunpack.c.l.bf16 %v1285
        %v1294 = vunpack.c.l.bf16 %v1286
        %1295 = vrot.lane.b32.xlu0 %v520, 112
        %v1296 = vpop.permute.xlu0 %1295
        %1297 = vrot.lane.b32.xlu0 %v521, 112
        %v1298 = vpop.permute.xlu0 %1297
        %1299 = vrot.lane.b32.xlu0 %v522, 112
        %v1300 = vpop.permute.xlu0 %1299
        %1301 = vrot.lane.b32.xlu0 %v523, 112
        %v1302 = vpop.permute.xlu0 %1301
        %1303 = vrot.lane.b32.xlu0 %v520, 80
        %v1304 = vpop.permute.xlu0 %1303
        %1305 = vrot.lane.b32.xlu0 %v521, 80
        %v1306 = vpop.permute.xlu0 %1305
        %1307 = vrot.lane.b32.xlu0 %v522, 80
        %v1308 = vpop.permute.xlu0 %1307
        %1309 = vrot.lane.b32.xlu0 %v523, 80
        %v1310 = vpop.permute.xlu0 %1309
        %v1312 = vsel %vm532, %v1296, 0
        %v1315 = vsel %vm532, %v1298, 0
        %v1318 = vsel %vm532, %v1300, 0
        %v1321 = vsel %vm532, %v1302, 0
        %v1324 = vsel %vm532, %v1304, 0
        %v1327 = vsel %vm532, %v1306, 0
        %v1330 = vsel %vm532, %v1308, 0
        %v1333 = vsel %vm532, %v1310, 0
        %1335 = vmatprep.subr.bf16.mxu0 0
        %1336 = vmatpush1.bf16.xpose.msra.mxu0 0
        %1337 = vmatprep.subr.bf16.mxu0 0
        %1338 = vmatpush1.bf16.xpose.msra.mxu0 0
        %1339 = vmatprep.subr.bf16.mxu0 0
        %1340 = vmatpush1.bf16.xpose.msra.mxu0 0
        %1341 = vmatprep.subr.bf16.mxu0 0
        %1342 = vmatpush1.bf16.xpose.msra.mxu0 0
        %1343 = vmatprep.subr.bf16.mxu0 0
        %1344 = vmatpush1.bf16.xpose.msra.mxu0 %v1333
        %1345 = vmatprep.subr.bf16.mxu0 0
        %1346 = vmatpush1.bf16.xpose.msra.mxu0 %v1330
        %1347 = vmatprep.subr.bf16.mxu0 0
        %1348 = vmatpush1.bf16.xpose.msra.mxu0 %v1327
        %1349 = vmatprep.subr.bf16.mxu0 0
        %1350 = vmatpush1.bf16.xpose.msra.mxu0 %v1324
        %1351 = vmatprep.subr.bf16.mxu0 0
        %1352 = vmatpush2.bf16.xpose.msra.mxu0 0
        %1353 = vmatprep.subr.bf16.mxu0 0
        %1354 = vmatpush2.bf16.xpose.msra.mxu0 0
        %1355 = vmatprep.subr.bf16.mxu0 0
        %1356 = vmatpush2.bf16.xpose.msra.mxu0 0
        %1357 = vmatprep.subr.bf16.mxu0 0
        %1358 = vmatpush2.bf16.xpose.msra.mxu0 0
        %1359 = vmatprep.subr.bf16.mxu0 0
        %1360 = vmatpush2.bf16.xpose.msra.mxu0 0
        %1361 = vmatprep.subr.bf16.mxu0 0
        %1362 = vmatpush2.bf16.xpose.msra.mxu0 0
        %1363 = vmatprep.subr.bf16.mxu0 0
        %1364 = vmatpush2.bf16.xpose.msra.mxu0 0
        %1365 = vmatprep.subr.bf16.mxu0 0
        %1366 = vmatpush2.bf16.xpose.msra.mxu0 0
        %1367 = vmatprep.mubr.bf16.mxu0 0
        %1368 = vmatmul.mubr.bf16.gmra.mxu0 %v1312
        %v1369 = vpop.f32.mrf.mxu0
        %v1370 = vadd.f32 %v1287, %v1369
        %v1371 = vpop.f32.mrf.mxu0
        %v1372 = vpop.f32.mrf.mxu0
        %v1373 = vadd.f32 %v1288, %v1372
        %v1374 = vpop.f32.mrf.mxu0
        %1375 = vmatprep.mubr.bf16.mxu0 0
        %1376 = vmatmul.mubr.bf16.gmra.mxu0 %v1315
        %v1377 = vpop.f32.mrf.mxu0
        %v1378 = vadd.f32 %v1289, %v1377
        %v1379 = vpop.f32.mrf.mxu0
        %v1380 = vpop.f32.mrf.mxu0
        %v1381 = vadd.f32 %v1290, %v1380
        %v1382 = vpop.f32.mrf.mxu0
        %1383 = vmatprep.mubr.bf16.mxu0 0
        %1384 = vmatmul.mubr.bf16.gmra.mxu0 %v1318
        %v1385 = vpop.f32.mrf.mxu0
        %v1386 = vadd.f32 %v1291, %v1385
        %v1387 = vpop.f32.mrf.mxu0
        %v1388 = vpop.f32.mrf.mxu0
        %v1389 = vadd.f32 %v1292, %v1388
        %v1390 = vpop.f32.mrf.mxu0
        %1391 = vmatprep.mubr.bf16.mxu0 0
        %1392 = vmatmul.mubr.bf16.gmra.mxu0 %v1321
        %v1393 = vpop.f32.mrf.mxu0
        %v1394 = vadd.f32 %v1293, %v1393
        %v1395 = vpop.f32.mrf.mxu0
        %v1396 = vpop.f32.mrf.mxu0
        %v1397 = vadd.f32 %v1294, %v1396
        %v1398 = vpop.f32.mrf.mxu0
        %1399 = vdwg.mxu0
        %v1400 = vsel %vm622, %v1370, -inf
        %1401 = vmax.xlane.f32.xlu0 %v1400
        %v1402 = vpop.xlane.xlu0 %1401
        %v1403 = vsel %vm622, %v1373, -inf
        %1404 = vmax.xlane.f32.xlu0 %v1403
        %v1405 = vpop.xlane.xlu0 %1404
        %v1406 = vsel %vm622, %v1378, -inf
        %1407 = vmax.xlane.f32.xlu0 %v1406
        %v1408 = vpop.xlane.xlu0 %1407
        %v1409 = vsel %vm622, %v1381, -inf
        %1410 = vmax.xlane.f32.xlu0 %v1409
        %v1411 = vpop.xlane.xlu0 %1410
        %v1412 = vsel %vm622, %v1386, -inf
        %1413 = vmax.xlane.f32.xlu0 %v1412
        %v1414 = vpop.xlane.xlu0 %1413
        %v1415 = vsel %vm622, %v1389, -inf
        %1416 = vmax.xlane.f32.xlu0 %v1415
        %v1417 = vpop.xlane.xlu0 %1416
        %v1418 = vsel %vm622, %v1394, -inf
        %1419 = vmax.xlane.f32.xlu0 %v1418
        %v1420 = vpop.xlane.xlu0 %1419
        %v1421 = vsel %vm622, %v1397, -inf
        %1422 = vmax.xlane.f32.xlu0 %v1421
        %v1423 = vpop.xlane.xlu0 %1422
        %v1424 = vsub.f32 %v1370, %v1402
        %v1425 = vsub.f32 %v1373, %v1405
        %v1426 = vsub.f32 %v1378, %v1408
        %v1427 = vsub.f32 %v1381, %v1411
        %v1428 = vsub.f32 %v1386, %v1414
        %v1429 = vsub.f32 %v1389, %v1417
        %v1430 = vsub.f32 %v1394, %v1420
        %v1431 = vsub.f32 %v1397, %v1423
        %v1432 = vmul.f32 %v1424, 1.442695
        %v1433 = vpow.pop %v1432
        %v1434 = vmul.f32 %v1425, 1.442695
        %v1435 = vpow.pop %v1434
        %v1436 = vmul.f32 %v1426, 1.442695
        %v1437 = vpow.pop %v1436
        %v1438 = vmul.f32 %v1427, 1.442695
        %v1439 = vpow.pop %v1438
        %v1440 = vmul.f32 %v1428, 1.442695
        %v1441 = vpow.pop %v1440
        %v1442 = vmul.f32 %v1429, 1.442695
        %v1443 = vpow.pop %v1442
        %v1444 = vmul.f32 %v1430, 1.442695
        %v1445 = vpow.pop %v1444
        %v1446 = vmul.f32 %v1431, 1.442695
        %v1447 = vpow.pop %v1446
        %v1448 = vsel %vm622, %v1433, 0.0
        %1449 = vadd.xlane.f32.xlu0 %v1448
        %v1450 = vpop.xlane.xlu0 %1449
        %v1451 = vsel %vm622, %v1435, 0.0
        %1452 = vadd.xlane.f32.xlu0 %v1451
        %v1453 = vpop.xlane.xlu0 %1452
        %v1454 = vsel %vm622, %v1437, 0.0
        %1455 = vadd.xlane.f32.xlu0 %v1454
        %v1456 = vpop.xlane.xlu0 %1455
        %v1457 = vsel %vm622, %v1439, 0.0
        %1458 = vadd.xlane.f32.xlu0 %v1457
        %v1459 = vpop.xlane.xlu0 %1458
        %v1460 = vsel %vm622, %v1441, 0.0
        %1461 = vadd.xlane.f32.xlu0 %v1460
        %v1462 = vpop.xlane.xlu0 %1461
        %v1463 = vsel %vm622, %v1443, 0.0
        %1464 = vadd.xlane.f32.xlu0 %v1463
        %v1465 = vpop.xlane.xlu0 %1464
        %v1466 = vsel %vm622, %v1445, 0.0
        %1467 = vadd.xlane.f32.xlu0 %v1466
        %v1468 = vpop.xlane.xlu0 %1467
        %v1469 = vsel %vm622, %v1447, 0.0
        %1470 = vadd.xlane.f32.xlu0 %v1469
        %v1471 = vpop.xlane.xlu0 %1470
        %v1472 = vrcp.pop %v1450
        %v1473 = vrcp.pop %v1453
        %v1474 = vrcp.pop %v1456
        %v1475 = vrcp.pop %v1459
        %v1476 = vrcp.pop %v1462
        %v1477 = vrcp.pop %v1465
        %v1478 = vrcp.pop %v1468
        %v1479 = vrcp.pop %v1471
        %v1480 = vmul.f32 %v1433, %v1472
        %v1481 = vmul.f32 %v1435, %v1473
        %v1482 = vmul.f32 %v1437, %v1474
        %v1483 = vmul.f32 %v1439, %v1475
        %v1484 = vmul.f32 %v1441, %v1476
        %v1485 = vmul.f32 %v1443, %v1477
        %v1486 = vmul.f32 %v1445, %v1478
        %v1487 = vmul.f32 %v1447, %v1479
        %v1488 = vpack.c.bf16 %v1481, %v1480
        %v1489 = vpack.c.bf16 %v1483, %v1482
        %v1490 = vpack.c.bf16 %v1485, %v1484
        %v1491 = vpack.c.bf16 %v1487, %v1486
        %1492 = vrot.lane.b32.xlu0 %v520, 48
        %v1493 = vpop.permute.xlu0 %1492
        %1494 = vrot.lane.b32.xlu0 %v521, 48
        %v1495 = vpop.permute.xlu0 %1494
        %1496 = vrot.lane.b32.xlu0 %v522, 48
        %v1497 = vpop.permute.xlu0 %1496
        %1498 = vrot.lane.b32.xlu0 %v523, 48
        %v1499 = vpop.permute.xlu0 %1498
        %v1505 = vsel %vm622, %v1488, 0
        %v1508 = vsel %vm622, %v1489, 0
        %v1511 = vsel %vm622, %v1490, 0
        %v1514 = vsel %vm622, %v1491, 0
        %1516 = vmatprep.subr.bf16.mxu0 0
        %1517 = vmatpush1.bf16.msra.mxu0 0
        %1518 = vmatprep.subr.bf16.mxu0 0
        %1519 = vmatpush1.bf16.msra.mxu0 0
        %1520 = vmatprep.subr.bf16.mxu0 0
        %1521 = vmatpush1.bf16.msra.mxu0 0
        %1522 = vmatprep.subr.bf16.mxu0 0
        %1523 = vmatpush1.bf16.msra.mxu0 0
        %1524 = vmatprep.subr.bf16.mxu0 0
        %1525 = vmatpush1.bf16.msra.mxu0 %v1499
        %1526 = vmatprep.subr.bf16.mxu0 0
        %1527 = vmatpush1.bf16.msra.mxu0 %v1497
        %1528 = vmatprep.subr.bf16.mxu0 0
        %1529 = vmatpush1.bf16.msra.mxu0 %v1495
        %1530 = vmatprep.subr.bf16.mxu0 0
        %1531 = vmatpush1.bf16.msra.mxu0 %v1493
        %1532 = vmatprep.subr.bf16.mxu0 0
        %1533 = vmatpush2.bf16.msra.mxu0 0
        %1534 = vmatprep.subr.bf16.mxu0 0
        %1535 = vmatpush2.bf16.msra.mxu0 0
        %1536 = vmatprep.subr.bf16.mxu0 0
        %1537 = vmatpush2.bf16.msra.mxu0 0
        %1538 = vmatprep.subr.bf16.mxu0 0
        %1539 = vmatpush2.bf16.msra.mxu0 0
        %1540 = vmatprep.subr.bf16.mxu0 0
        %1541 = vmatpush2.bf16.msra.mxu0 0
        %1542 = vmatprep.subr.bf16.mxu0 0
        %1543 = vmatpush2.bf16.msra.mxu0 0
        %1544 = vmatprep.subr.bf16.mxu0 0
        %1545 = vmatpush2.bf16.msra.mxu0 0
        %1546 = vmatprep.subr.bf16.mxu0 0
        %1547 = vmatpush2.bf16.msra.mxu0 0
        %1548 = vmatprep.mubr.bf16.mxu0 0
        %1549 = vmatmul.mubr.bf16.gmra.mxu0 %v1505
        %v1550 = vpop.f32.mrf.mxu0
        %v1551 = vadd.f32 0.0, %v1550
        %v1552 = vpop.f32.mrf.mxu0
        %v1553 = vpop.f32.mrf.mxu0
        %v1554 = vadd.f32 0.0, %v1553
        %v1555 = vpop.f32.mrf.mxu0
        %1556 = vmatprep.mubr.bf16.mxu0 0
        %1557 = vmatmul.mubr.bf16.gmra.mxu0 %v1508
        %v1558 = vpop.f32.mrf.mxu0
        %v1559 = vadd.f32 0.0, %v1558
        %v1560 = vpop.f32.mrf.mxu0
        %v1561 = vpop.f32.mrf.mxu0
        %v1562 = vadd.f32 0.0, %v1561
        %v1563 = vpop.f32.mrf.mxu0
        %1564 = vmatprep.mubr.bf16.mxu0 0
        %1565 = vmatmul.mubr.bf16.gmra.mxu0 %v1511
        %v1566 = vpop.f32.mrf.mxu0
        %v1567 = vadd.f32 0.0, %v1566
        %v1568 = vpop.f32.mrf.mxu0
        %v1569 = vpop.f32.mrf.mxu0
        %v1570 = vadd.f32 0.0, %v1569
        %v1571 = vpop.f32.mrf.mxu0
        %1572 = vmatprep.mubr.bf16.mxu0 0
        %1573 = vmatmul.mubr.bf16.gmra.mxu0 %v1514
        %v1574 = vpop.f32.mrf.mxu0
        %v1575 = vadd.f32 0.0, %v1574
        %v1576 = vpop.f32.mrf.mxu0
        %v1577 = vpop.f32.mrf.mxu0
        %v1578 = vadd.f32 0.0, %v1577
        %v1579 = vpop.f32.mrf.mxu0
        %1580 = vdwg.mxu0
        %v1581 = vpack.c.bf16 %v1554, %v1551
        %v1582 = vpack.c.bf16 %v1562, %v1559
        %v1583 = vpack.c.bf16 %v1570, %v1567
        %v1584 = vpack.c.bf16 %v1578, %v1575
        %v1585 = vld [vmem:[%s3 + $0x8] sm:$0xf]
        %v1587 = vsel %vm532, %v1581, 0
        %v1590 = vsel %vm532, %v1582, 0
        %v1593 = vsel %vm532, %v1583, 0
        %v1596 = vsel %vm532, %v1584, 0
        %v1599 = vsel %vm1129, %v1585, 0
        %1601 = vmatprep.subr.bf16.mxu0 0
        %1602 = vmatpush1.bf16.msra.mxu0 0
        %1603 = vmatprep.subr.bf16.mxu0 0
        %1604 = vmatpush1.bf16.msra.mxu0 0
        %1605 = vmatprep.subr.bf16.mxu0 0
        %1606 = vmatpush1.bf16.msra.mxu0 0
        %1607 = vmatprep.subr.bf16.mxu0 0
        %1608 = vmatpush1.bf16.msra.mxu0 0
        %1609 = vmatprep.subr.bf16.mxu0 0
        %1610 = vmatpush1.bf16.msra.mxu0 0
        %1611 = vmatprep.subr.bf16.mxu0 0
        %1612 = vmatpush1.bf16.msra.mxu0 0
        %1613 = vmatprep.subr.bf16.mxu0 0
        %1614 = vmatpush1.bf16.msra.mxu0 0
        %1615 = vmatprep.subr.bf16.mxu0 0
        %1616 = vmatpush1.bf16.msra.mxu0 %v1599
        %1617 = vmatprep.subr.bf16.mxu0 0
        %1618 = vmatpush2.bf16.msra.mxu0 0
        %1619 = vmatprep.subr.bf16.mxu0 0
        %1620 = vmatpush2.bf16.msra.mxu0 0
        %1621 = vmatprep.subr.bf16.mxu0 0
        %1622 = vmatpush2.bf16.msra.mxu0 0
        %1623 = vmatprep.subr.bf16.mxu0 0
        %1624 = vmatpush2.bf16.msra.mxu0 0
        %1625 = vmatprep.subr.bf16.mxu0 0
        %1626 = vmatpush2.bf16.msra.mxu0 0
        %1627 = vmatprep.subr.bf16.mxu0 0
        %1628 = vmatpush2.bf16.msra.mxu0 0
        %1629 = vmatprep.subr.bf16.mxu0 0
        %1630 = vmatpush2.bf16.msra.mxu0 0
        %1631 = vmatprep.subr.bf16.mxu0 0
        %1632 = vmatpush2.bf16.msra.mxu0 0
        %1633 = vmatprep.mubr.bf16.mxu0 0
        %1634 = vmatmul.mubr.bf16.gmra.mxu0 %v1587
        %v1635 = vpop.f32.mrf.mxu0
        %v1636 = vadd.f32 0.0, %v1635
        %v1637 = vpop.f32.mrf.mxu0
        %v1638 = vpop.f32.mrf.mxu0
        %v1639 = vadd.f32 0.0, %v1638
        %v1640 = vpop.f32.mrf.mxu0
        %1641 = vmatprep.mubr.bf16.mxu0 0
        %1642 = vmatmul.mubr.bf16.gmra.mxu0 %v1590
        %v1643 = vpop.f32.mrf.mxu0
        %v1644 = vadd.f32 0.0, %v1643
        %v1645 = vpop.f32.mrf.mxu0
        %v1646 = vpop.f32.mrf.mxu0
        %v1647 = vadd.f32 0.0, %v1646
        %v1648 = vpop.f32.mrf.mxu0
        %1649 = vmatprep.mubr.bf16.mxu0 0
        %1650 = vmatmul.mubr.bf16.gmra.mxu0 %v1593
        %v1651 = vpop.f32.mrf.mxu0
        %v1652 = vadd.f32 0.0, %v1651
        %v1653 = vpop.f32.mrf.mxu0
        %v1654 = vpop.f32.mrf.mxu0
        %v1655 = vadd.f32 0.0, %v1654
        %v1656 = vpop.f32.mrf.mxu0
        %1657 = vmatprep.mubr.bf16.mxu0 0
        %1658 = vmatmul.mubr.bf16.gmra.mxu0 %v1596
        %v1659 = vpop.f32.mrf.mxu0
        %v1660 = vadd.f32 0.0, %v1659
        %v1661 = vpop.f32.mrf.mxu0
        %v1662 = vpop.f32.mrf.mxu0
        %v1663 = vadd.f32 0.0, %v1662
        %v1664 = vpop.f32.mrf.mxu0
        %1665 = vdwg.mxu0
        %v1666 = vadd.f32 %v1248, %v1636
        %v1667 = vadd.f32 %v1251, %v1639
        %v1668 = vadd.f32 %v1256, %v1644
        %v1669 = vadd.f32 %v1259, %v1647
        %v1670 = vadd.f32 %v1264, %v1652
        %v1671 = vadd.f32 %v1267, %v1655
        %v1672 = vadd.f32 %v1272, %v1660
        %v1673 = vadd.f32 %v1275, %v1663
        %s1674 = scalar_lea.vmem [#allocation3], 96
        %v1675 = vld [vmem:[%s1674] sm:$0xf]
        %v1676 = vld [vmem:[%s1674 + $0x4] sm:$0xf]
        %v1677 = vld [vmem:[%s1674 + $0x8] sm:$0xf]
        %v1678 = vld [vmem:[%s1674 + $0xc] sm:$0xf]
        %v1679 = vld [vmem:[%s1674 + $0x10] sm:$0xf]
        %v1680 = vld [vmem:[%s1674 + $0x14] sm:$0xf]
        %v1681 = vld [vmem:[%s1674 + $0x18] sm:$0xf]
        %v1682 = vld [vmem:[%s1674 + $0x1c] sm:$0xf]
        %v1683 = vunpack.c.l.bf16 %v1675
        %v1684 = vunpack.c.l.bf16 %v1676
        %v1685 = vunpack.c.l.bf16 %v1677
        %v1686 = vunpack.c.l.bf16 %v1678
        %v1687 = vunpack.c.l.bf16 %v1679
        %v1688 = vunpack.c.l.bf16 %v1680
        %v1689 = vunpack.c.l.bf16 %v1681
        %v1690 = vunpack.c.l.bf16 %v1682
        %1691 = vrot.lane.b32.xlu0 %v520, 104
        %v1692 = vpop.permute.xlu0 %1691
        %1693 = vrot.lane.b32.xlu0 %v521, 104
        %v1694 = vpop.permute.xlu0 %1693
        %1695 = vrot.lane.b32.xlu0 %v522, 104
        %v1696 = vpop.permute.xlu0 %1695
        %1697 = vrot.lane.b32.xlu0 %v523, 104
        %v1698 = vpop.permute.xlu0 %1697
        %1699 = vrot.lane.b32.xlu0 %v520, 72
        %v1700 = vpop.permute.xlu0 %1699
        %1701 = vrot.lane.b32.xlu0 %v521, 72
        %v1702 = vpop.permute.xlu0 %1701
        %1703 = vrot.lane.b32.xlu0 %v522, 72
        %v1704 = vpop.permute.xlu0 %1703
        %1705 = vrot.lane.b32.xlu0 %v523, 72
        %v1706 = vpop.permute.xlu0 %1705
        %v1708 = vsel %vm532, %v1692, 0
        %v1711 = vsel %vm532, %v1694, 0
        %v1714 = vsel %vm532, %v1696, 0
        %v1717 = vsel %vm532, %v1698, 0
        %v1720 = vsel %vm532, %v1700, 0
        %v1723 = vsel %vm532, %v1702, 0
        %v1726 = vsel %vm532, %v1704, 0
        %v1729 = vsel %vm532, %v1706, 0
        %1731 = vmatprep.subr.bf16.mxu0 0
        %1732 = vmatpush1.bf16.xpose.msra.mxu0 0
        %1733 = vmatprep.subr.bf16.mxu0 0
        %1734 = vmatpush1.bf16.xpose.msra.mxu0 0
        %1735 = vmatprep.subr.bf16.mxu0 0
        %1736 = vmatpush1.bf16.xpose.msra.mxu0 0
        %1737 = vmatprep.subr.bf16.mxu0 0
        %1738 = vmatpush1.bf16.xpose.msra.mxu0 0
        %1739 = vmatprep.subr.bf16.mxu0 0
        %1740 = vmatpush1.bf16.xpose.msra.mxu0 %v1729
        %1741 = vmatprep.subr.bf16.mxu0 0
        %1742 = vmatpush1.bf16.xpose.msra.mxu0 %v1726
        %1743 = vmatprep.subr.bf16.mxu0 0
        %1744 = vmatpush1.bf16.xpose.msra.mxu0 %v1723
        %1745 = vmatprep.subr.bf16.mxu0 0
        %1746 = vmatpush1.bf16.xpose.msra.mxu0 %v1720
        %1747 = vmatprep.subr.bf16.mxu0 0
        %1748 = vmatpush2.bf16.xpose.msra.mxu0 0
        %1749 = vmatprep.subr.bf16.mxu0 0
        %1750 = vmatpush2.bf16.xpose.msra.mxu0 0
        %1751 = vmatprep.subr.bf16.mxu0 0
        %1752 = vmatpush2.bf16.xpose.msra.mxu0 0
        %1753 = vmatprep.subr.bf16.mxu0 0
        %1754 = vmatpush2.bf16.xpose.msra.mxu0 0
        %1755 = vmatprep.subr.bf16.mxu0 0
        %1756 = vmatpush2.bf16.xpose.msra.mxu0 0
        %1757 = vmatprep.subr.bf16.mxu0 0
        %1758 = vmatpush2.bf16.xpose.msra.mxu0 0
        %1759 = vmatprep.subr.bf16.mxu0 0
        %1760 = vmatpush2.bf16.xpose.msra.mxu0 0
        %1761 = vmatprep.subr.bf16.mxu0 0
        %1762 = vmatpush2.bf16.xpose.msra.mxu0 0
        %1763 = vmatprep.mubr.bf16.mxu0 0
        %1764 = vmatmul.mubr.bf16.gmra.mxu0 %v1708
        %v1765 = vpop.f32.mrf.mxu0
        %v1766 = vadd.f32 %v1683, %v1765
        %v1767 = vpop.f32.mrf.mxu0
        %v1768 = vpop.f32.mrf.mxu0
        %v1769 = vadd.f32 %v1684, %v1768
        %v1770 = vpop.f32.mrf.mxu0
        %1771 = vmatprep.mubr.bf16.mxu0 0
        %1772 = vmatmul.mubr.bf16.gmra.mxu0 %v1711
        %v1773 = vpop.f32.mrf.mxu0
        %v1774 = vadd.f32 %v1685, %v1773
        %v1775 = vpop.f32.mrf.mxu0
        %v1776 = vpop.f32.mrf.mxu0
        %v1777 = vadd.f32 %v1686, %v1776
        %v1778 = vpop.f32.mrf.mxu0
        %1779 = vmatprep.mubr.bf16.mxu0 0
        %1780 = vmatmul.mubr.bf16.gmra.mxu0 %v1714
        %v1781 = vpop.f32.mrf.mxu0
        %v1782 = vadd.f32 %v1687, %v1781
        %v1783 = vpop.f32.mrf.mxu0
        %v1784 = vpop.f32.mrf.mxu0
        %v1785 = vadd.f32 %v1688, %v1784
        %v1786 = vpop.f32.mrf.mxu0
        %1787 = vmatprep.mubr.bf16.mxu0 0
        %1788 = vmatmul.mubr.bf16.gmra.mxu0 %v1717
        %v1789 = vpop.f32.mrf.mxu0
        %v1790 = vadd.f32 %v1689, %v1789
        %v1791 = vpop.f32.mrf.mxu0
        %v1792 = vpop.f32.mrf.mxu0
        %v1793 = vadd.f32 %v1690, %v1792
        %v1794 = vpop.f32.mrf.mxu0
        %1795 = vdwg.mxu0
        %v1796 = vsel %vm622, %v1766, -inf
        %1797 = vmax.xlane.f32.xlu0 %v1796
        %v1798 = vpop.xlane.xlu0 %1797
        %v1799 = vsel %vm622, %v1769, -inf
        %1800 = vmax.xlane.f32.xlu0 %v1799
        %v1801 = vpop.xlane.xlu0 %1800
        %v1802 = vsel %vm622, %v1774, -inf
        %1803 = vmax.xlane.f32.xlu0 %v1802
        %v1804 = vpop.xlane.xlu0 %1803
        %v1805 = vsel %vm622, %v1777, -inf
        %1806 = vmax.xlane.f32.xlu0 %v1805
        %v1807 = vpop.xlane.xlu0 %1806
        %v1808 = vsel %vm622, %v1782, -inf
        %1809 = vmax.xlane.f32.xlu0 %v1808
        %v1810 = vpop.xlane.xlu0 %1809
        %v1811 = vsel %vm622, %v1785, -inf
        %1812 = vmax.xlane.f32.xlu0 %v1811
        %v1813 = vpop.xlane.xlu0 %1812
        %v1814 = vsel %vm622, %v1790, -inf
        %1815 = vmax.xlane.f32.xlu0 %v1814
        %v1816 = vpop.xlane.xlu0 %1815
        %v1817 = vsel %vm622, %v1793, -inf
        %1818 = vmax.xlane.f32.xlu0 %v1817
        %v1819 = vpop.xlane.xlu0 %1818
        %v1820 = vsub.f32 %v1766, %v1798
        %v1821 = vsub.f32 %v1769, %v1801
        %v1822 = vsub.f32 %v1774, %v1804
        %v1823 = vsub.f32 %v1777, %v1807
        %v1824 = vsub.f32 %v1782, %v1810
        %v1825 = vsub.f32 %v1785, %v1813
        %v1826 = vsub.f32 %v1790, %v1816
        %v1827 = vsub.f32 %v1793, %v1819
        %v1828 = vmul.f32 %v1820, 1.442695
        %v1829 = vpow.pop %v1828
        %v1830 = vmul.f32 %v1821, 1.442695
        %v1831 = vpow.pop %v1830
        %v1832 = vmul.f32 %v1822, 1.442695
        %v1833 = vpow.pop %v1832
        %v1834 = vmul.f32 %v1823, 1.442695
        %v1835 = vpow.pop %v1834
        %v1836 = vmul.f32 %v1824, 1.442695
        %v1837 = vpow.pop %v1836
        %v1838 = vmul.f32 %v1825, 1.442695
        %v1839 = vpow.pop %v1838
        %v1840 = vmul.f32 %v1826, 1.442695
        %v1841 = vpow.pop %v1840
        %v1842 = vmul.f32 %v1827, 1.442695
        %v1843 = vpow.pop %v1842
        %v1844 = vsel %vm622, %v1829, 0.0
        %1845 = vadd.xlane.f32.xlu0 %v1844
        %v1846 = vpop.xlane.xlu0 %1845
        %v1847 = vsel %vm622, %v1831, 0.0
        %1848 = vadd.xlane.f32.xlu0 %v1847
        %v1849 = vpop.xlane.xlu0 %1848
        %v1850 = vsel %vm622, %v1833, 0.0
        %1851 = vadd.xlane.f32.xlu0 %v1850
        %v1852 = vpop.xlane.xlu0 %1851
        %v1853 = vsel %vm622, %v1835, 0.0
        %1854 = vadd.xlane.f32.xlu0 %v1853
        %v1855 = vpop.xlane.xlu0 %1854
        %v1856 = vsel %vm622, %v1837, 0.0
        %1857 = vadd.xlane.f32.xlu0 %v1856
        %v1858 = vpop.xlane.xlu0 %1857
        %v1859 = vsel %vm622, %v1839, 0.0
        %1860 = vadd.xlane.f32.xlu0 %v1859
        %v1861 = vpop.xlane.xlu0 %1860
        %v1862 = vsel %vm622, %v1841, 0.0
        %1863 = vadd.xlane.f32.xlu0 %v1862
        %v1864 = vpop.xlane.xlu0 %1863
        %v1865 = vsel %vm622, %v1843, 0.0
        %1866 = vadd.xlane.f32.xlu0 %v1865
        %v1867 = vpop.xlane.xlu0 %1866
        %v1868 = vrcp.pop %v1846
        %v1869 = vrcp.pop %v1849
        %v1870 = vrcp.pop %v1852
        %v1871 = vrcp.pop %v1855
        %v1872 = vrcp.pop %v1858
        %v1873 = vrcp.pop %v1861
        %v1874 = vrcp.pop %v1864
        %v1875 = vrcp.pop %v1867
        %v1876 = vmul.f32 %v1829, %v1868
        %v1877 = vmul.f32 %v1831, %v1869
        %v1878 = vmul.f32 %v1833, %v1870
        %v1879 = vmul.f32 %v1835, %v1871
        %v1880 = vmul.f32 %v1837, %v1872
        %v1881 = vmul.f32 %v1839, %v1873
        %v1882 = vmul.f32 %v1841, %v1874
        %v1883 = vmul.f32 %v1843, %v1875
        %v1884 = vpack.c.bf16 %v1877, %v1876
        %v1885 = vpack.c.bf16 %v1879, %v1878
        %v1886 = vpack.c.bf16 %v1881, %v1880
        %v1887 = vpack.c.bf16 %v1883, %v1882
        %1888 = vrot.lane.b32.xlu0 %v520, 40
        %v1889 = vpop.permute.xlu0 %1888
        %1890 = vrot.lane.b32.xlu0 %v521, 40
        %v1891 = vpop.permute.xlu0 %1890
        %1892 = vrot.lane.b32.xlu0 %v522, 40
        %v1893 = vpop.permute.xlu0 %1892
        %1894 = vrot.lane.b32.xlu0 %v523, 40
        %v1895 = vpop.permute.xlu0 %1894
        %v1901 = vsel %vm622, %v1884, 0
        %v1904 = vsel %vm622, %v1885, 0
        %v1907 = vsel %vm622, %v1886, 0
        %v1910 = vsel %vm622, %v1887, 0
        %1912 = vmatprep.subr.bf16.mxu0 0
        %1913 = vmatpush1.bf16.msra.mxu0 0
        %1914 = vmatprep.subr.bf16.mxu0 0
        %1915 = vmatpush1.bf16.msra.mxu0 0
        %1916 = vmatprep.subr.bf16.mxu0 0
        %1917 = vmatpush1.bf16.msra.mxu0 0
        %1918 = vmatprep.subr.bf16.mxu0 0
        %1919 = vmatpush1.bf16.msra.mxu0 0
        %1920 = vmatprep.subr.bf16.mxu0 0
        %1921 = vmatpush1.bf16.msra.mxu0 %v1895
        %1922 = vmatprep.subr.bf16.mxu0 0
        %1923 = vmatpush1.bf16.msra.mxu0 %v1893
        %1924 = vmatprep.subr.bf16.mxu0 0
        %1925 = vmatpush1.bf16.msra.mxu0 %v1891
        %1926 = vmatprep.subr.bf16.mxu0 0
        %1927 = vmatpush1.bf16.msra.mxu0 %v1889
        %1928 = vmatprep.subr.bf16.mxu0 0
        %1929 = vmatpush2.bf16.msra.mxu0 0
        %1930 = vmatprep.subr.bf16.mxu0 0
        %1931 = vmatpush2.bf16.msra.mxu0 0
        %1932 = vmatprep.subr.bf16.mxu0 0
        %1933 = vmatpush2.bf16.msra.mxu0 0
        %1934 = vmatprep.subr.bf16.mxu0 0
        %1935 = vmatpush2.bf16.msra.mxu0 0
        %1936 = vmatprep.subr.bf16.mxu0 0
        %1937 = vmatpush2.bf16.msra.mxu0 0
        %1938 = vmatprep.subr.bf16.mxu0 0
        %1939 = vmatpush2.bf16.msra.mxu0 0
        %1940 = vmatprep.subr.bf16.mxu0 0
        %1941 = vmatpush2.bf16.msra.mxu0 0
        %1942 = vmatprep.subr.bf16.mxu0 0
        %1943 = vmatpush2.bf16.msra.mxu0 0
        %1944 = vmatprep.mubr.bf16.mxu0 0
        %1945 = vmatmul.mubr.bf16.gmra.mxu0 %v1901
        %v1946 = vpop.f32.mrf.mxu0
        %v1947 = vadd.f32 0.0, %v1946
        %v1948 = vpop.f32.mrf.mxu0
        %v1949 = vpop.f32.mrf.mxu0
        %v1950 = vadd.f32 0.0, %v1949
        %v1951 = vpop.f32.mrf.mxu0
        %1952 = vmatprep.mubr.bf16.mxu0 0
        %1953 = vmatmul.mubr.bf16.gmra.mxu0 %v1904
        %v1954 = vpop.f32.mrf.mxu0
        %v1955 = vadd.f32 0.0, %v1954
        %v1956 = vpop.f32.mrf.mxu0
        %v1957 = vpop.f32.mrf.mxu0
        %v1958 = vadd.f32 0.0, %v1957
        %v1959 = vpop.f32.mrf.mxu0
        %1960 = vmatprep.mubr.bf16.mxu0 0
        %1961 = vmatmul.mubr.bf16.gmra.mxu0 %v1907
        %v1962 = vpop.f32.mrf.mxu0
        %v1963 = vadd.f32 0.0, %v1962
        %v1964 = vpop.f32.mrf.mxu0
        %v1965 = vpop.f32.mrf.mxu0
        %v1966 = vadd.f32 0.0, %v1965
        %v1967 = vpop.f32.mrf.mxu0
        %1968 = vmatprep.mubr.bf16.mxu0 0
        %1969 = vmatmul.mubr.bf16.gmra.mxu0 %v1910
        %v1970 = vpop.f32.mrf.mxu0
        %v1971 = vadd.f32 0.0, %v1970
        %v1972 = vpop.f32.mrf.mxu0
        %v1973 = vpop.f32.mrf.mxu0
        %v1974 = vadd.f32 0.0, %v1973
        %v1975 = vpop.f32.mrf.mxu0
        %1976 = vdwg.mxu0
        %v1977 = vpack.c.bf16 %v1950, %v1947
        %v1978 = vpack.c.bf16 %v1958, %v1955
        %v1979 = vpack.c.bf16 %v1966, %v1963
        %v1980 = vpack.c.bf16 %v1974, %v1971
        %v1981 = vld [vmem:[%s3 + $0xc] sm:$0xf]
        %v1983 = vsel %vm532, %v1977, 0
        %v1986 = vsel %vm532, %v1978, 0
        %v1989 = vsel %vm532, %v1979, 0
        %v1992 = vsel %vm532, %v1980, 0
        %v1995 = vsel %vm1129, %v1981, 0
        %1997 = vmatprep.subr.bf16.mxu0 0
        %1998 = vmatpush1.bf16.msra.mxu0 0
        %1999 = vmatprep.subr.bf16.mxu0 0
        %2000 = vmatpush1.bf16.msra.mxu0 0
        %2001 = vmatprep.subr.bf16.mxu0 0
        %2002 = vmatpush1.bf16.msra.mxu0 0
        %2003 = vmatprep.subr.bf16.mxu0 0
        %2004 = vmatpush1.bf16.msra.mxu0 0
        %2005 = vmatprep.subr.bf16.mxu0 0
        %2006 = vmatpush1.bf16.msra.mxu0 0
        %2007 = vmatprep.subr.bf16.mxu0 0
        %2008 = vmatpush1.bf16.msra.mxu0 0
        %2009 = vmatprep.subr.bf16.mxu0 0
        %2010 = vmatpush1.bf16.msra.mxu0 0
        %2011 = vmatprep.subr.bf16.mxu0 0
        %2012 = vmatpush1.bf16.msra.mxu0 %v1995
        %2013 = vmatprep.subr.bf16.mxu0 0
        %2014 = vmatpush2.bf16.msra.mxu0 0
        %2015 = vmatprep.subr.bf16.mxu0 0
        %2016 = vmatpush2.bf16.msra.mxu0 0
        %2017 = vmatprep.subr.bf16.mxu0 0
        %2018 = vmatpush2.bf16.msra.mxu0 0
        %2019 = vmatprep.subr.bf16.mxu0 0
        %2020 = vmatpush2.bf16.msra.mxu0 0
        %2021 = vmatprep.subr.bf16.mxu0 0
        %2022 = vmatpush2.bf16.msra.mxu0 0
        %2023 = vmatprep.subr.bf16.mxu0 0
        %2024 = vmatpush2.bf16.msra.mxu0 0
        %2025 = vmatprep.subr.bf16.mxu0 0
        %2026 = vmatpush2.bf16.msra.mxu0 0
        %2027 = vmatprep.subr.bf16.mxu0 0
        %2028 = vmatpush2.bf16.msra.mxu0 0
        %2029 = vmatprep.mubr.bf16.mxu0 0
        %2030 = vmatmul.mubr.bf16.gmra.mxu0 %v1983
        %v2031 = vpop.f32.mrf.mxu0
        %v2032 = vadd.f32 0.0, %v2031
        %v2033 = vpop.f32.mrf.mxu0
        %v2034 = vpop.f32.mrf.mxu0
        %v2035 = vadd.f32 0.0, %v2034
        %v2036 = vpop.f32.mrf.mxu0
        %2037 = vmatprep.mubr.bf16.mxu0 0
        %2038 = vmatmul.mubr.bf16.gmra.mxu0 %v1986
        %v2039 = vpop.f32.mrf.mxu0
        %v2040 = vadd.f32 0.0, %v2039
        %v2041 = vpop.f32.mrf.mxu0
        %v2042 = vpop.f32.mrf.mxu0
        %v2043 = vadd.f32 0.0, %v2042
        %v2044 = vpop.f32.mrf.mxu0
        %2045 = vmatprep.mubr.bf16.mxu0 0
        %2046 = vmatmul.mubr.bf16.gmra.mxu0 %v1989
        %v2047 = vpop.f32.mrf.mxu0
        %v2048 = vadd.f32 0.0, %v2047
        %v2049 = vpop.f32.mrf.mxu0
        %v2050 = vpop.f32.mrf.mxu0
        %v2051 = vadd.f32 0.0, %v2050
        %v2052 = vpop.f32.mrf.mxu0
        %2053 = vmatprep.mubr.bf16.mxu0 0
        %2054 = vmatmul.mubr.bf16.gmra.mxu0 %v1992
        %v2055 = vpop.f32.mrf.mxu0
        %v2056 = vadd.f32 0.0, %v2055
        %v2057 = vpop.f32.mrf.mxu0
        %v2058 = vpop.f32.mrf.mxu0
        %v2059 = vadd.f32 0.0, %v2058
        %v2060 = vpop.f32.mrf.mxu0
        %2061 = vdwg.mxu0
        %v2062 = vadd.f32 %v1666, %v2032
        %v2063 = vadd.f32 %v1667, %v2035
        %v2064 = vadd.f32 %v1668, %v2040
        %v2065 = vadd.f32 %v1669, %v2043
        %v2066 = vadd.f32 %v1670, %v2048
        %v2067 = vadd.f32 %v1671, %v2051
        %v2068 = vadd.f32 %v1672, %v2056
        %v2069 = vadd.f32 %v1673, %v2059
        %2074 = vrot.lane.b32.xlu0 %v1019, 64
        %v2075 = vpop.permute.xlu0 %2074
        %2076 = vrot.lane.b32.xlu0 %v1020, 64
        %v2077 = vpop.permute.xlu0 %2076
        %2078 = vrot.lane.b32.xlu0 %v1021, 64
        %v2079 = vpop.permute.xlu0 %2078
        %2080 = vrot.lane.b32.xlu0 %v1022, 64
        %v2081 = vpop.permute.xlu0 %2080
        %2086 = vrot.lane.b32.xlu0 %v1884, 64
        %v2087 = vpop.permute.xlu0 %2086
        %2088 = vrot.lane.b32.xlu0 %v1885, 64
        %v2089 = vpop.permute.xlu0 %2088
        %2090 = vrot.lane.b32.xlu0 %v1886, 64
        %v2091 = vpop.permute.xlu0 %2090
        %2092 = vrot.lane.b32.xlu0 %v1887, 64
        %v2093 = vpop.permute.xlu0 %2092
        %v2095 = vsel %vm622, %v711, %v2075
        %v2097 = vsel %vm622, %v712, %v2077
        %v2099 = vsel %vm622, %v713, %v2079
        %v2101 = vsel %vm622, %v714, %v2081
        %v2103 = vsel %vm622, %v1488, %v2087
        %v2105 = vsel %vm622, %v1489, %v2089
        %v2107 = vsel %vm622, %v1490, %v2091
        %v2109 = vsel %vm622, %v1491, %v2093
        %v2118 = vunpack.c.l.b16 %v2095
        %v2119 = vunpack.c.l.b16 %v2103
        %v2120 = vunpack.c.h.b16 %v2095
        %v2121 = vunpack.c.h.b16 %v2103
        %v2122 = vunpack.c.l.b16 %v2097
        %v2123 = vunpack.c.l.b16 %v2105
        %v2124 = vunpack.c.h.b16 %v2097
        %v2125 = vunpack.c.h.b16 %v2105
        %v2126 = vunpack.c.l.b16 %v2099
        %v2127 = vunpack.c.l.b16 %v2107
        %v2128 = vunpack.c.h.b16 %v2099
        %v2129 = vunpack.c.h.b16 %v2107
        %v2130 = vunpack.c.l.b16 %v2101
        %v2131 = vunpack.c.l.b16 %v2109
        %v2132 = vunpack.c.h.b16 %v2101
        %v2133 = vunpack.c.h.b16 %v2109
        %v2134 = vpack.c.b16 %v2119, %v2118
        %v2135 = vpack.c.b16 %v2121, %v2120
        %v2136 = vpack.c.b16 %v2123, %v2122
        %v2137 = vpack.c.b16 %v2125, %v2124
        %v2138 = vpack.c.b16 %v2127, %v2126
        %v2139 = vpack.c.b16 %v2129, %v2128
        %v2140 = vpack.c.b16 %v2131, %v2130
        %v2141 = vpack.c.b16 %v2133, %v2132
        %s2150 = smul.u32 0, 2
        %s2151 = smul.addr %s2150, 4
        %s2152 = scalar_lea.vmem %s295, %s2151 [#allocation6]
        %2153 = vst [vmem:[%s2152] sm:$0xff] %v2134
        %2154 = vst [vmem:[%s2152 + $0x8] sm:$0xff] %v2135
        %2155 = vst [vmem:[%s2152 + $0x10] sm:$0xff] %v2136
        %2156 = vst [vmem:[%s2152 + $0x18] sm:$0xff] %v2137
        %2157 = vst [vmem:[%s2152 + $0x20] sm:$0xff] %v2138
        %2158 = vst [vmem:[%s2152 + $0x28] sm:$0xff] %v2139
        %2159 = vst [vmem:[%s2152 + $0x30] sm:$0xff] %v2140
        %2160 = vst [vmem:[%s2152 + $0x38] sm:$0xff] %v2141
        %v2161 = vld [vmem:[%s4] sm:$0x1]
        %v2163 = vlaneseq
        %v2164 = vshrl.u32 %v2163, 7
        %v2165 = vsub.s32 0, %v2164
        %v2166 = vrot.slane %v2161, %v2165
        %v2168 = vadd.f32 %v2062, %v2166
        %v2169 = vadd.f32 %v2063, %v2166
        %v2170 = vadd.f32 %v2064, %v2166
        %v2171 = vadd.f32 %v2065, %v2166
        %v2172 = vadd.f32 %v2066, %v2166
        %v2173 = vadd.f32 %v2067, %v2166
        %v2174 = vadd.f32 %v2068, %v2166
        %v2175 = vadd.f32 %v2069, %v2166
        %2176 = vst.msk [vmem:[%s306] sm:$0xff] %vm361, %v2168
        %2177 = vst.msk [vmem:[%s306 + $0x8] sm:$0xff] %vm361, %v2169
        %2178 = vst.msk [vmem:[%s306 + $0x10] sm:$0xff] %vm361, %v2170
        %2179 = vst.msk [vmem:[%s306 + $0x18] sm:$0xff] %vm361, %v2171
        %2180 = vst.msk [vmem:[%s306 + $0x20] sm:$0xff] %vm361, %v2172
        %2181 = vst.msk [vmem:[%s306 + $0x28] sm:$0xff] %vm361, %v2173
        %2182 = vst.msk [vmem:[%s306 + $0x30] sm:$0xff] %vm361, %v2174
        %2183 = vst.msk [vmem:[%s306 + $0x38] sm:$0xff] %vm361, %v2175
        %s2184 = smul.u32 8, %s23
        %p2185 = scmp.lt.s32.totalorder %s2184, 15
        %s2186 = scalar_select %p2185, %s2184, 15
        %s2187 = smul.addr %s2186, 8
        %s2188 = scalar_lea.vmem %s6, %s2187
        %s2189 = sand.u32 %s188, 1
        %s2190 = scalar_lea.sflag [#allocation5], %s2189
        %s2191 = sand.u32 %s188, 1
        %s2192 = smul.addr %s2191, 64
        %s2193 = scalar_lea.vmem [#allocation6], %s2192
        // Predicated region
        $region49: #{tpu_custom_call.1} parent=43 // pred_check
          %p2194 = pneg %p172
        $region50: #{tpu_custom_call.1} parent=43 // pred_check_branch
          %2196 = sbr.rel (%p2194) target = $region52
        $region51: #{tpu_custom_call.1} parent=43 // pred_region
          %s2197 = smul.u32 8, %s23
        $region52: #{tpu_custom_call.1} parent=43 // pred_fallthru
          _
        // Predicated region
        $region53: #{tpu_custom_call.1} parent=43 // pred_check
          %p2198 = pneg %p198
        $region54: #{tpu_custom_call.1} parent=43 // pred_check_branch
          %2200 = sbr.rel (%p2198) target = $region56
        $region55: #{tpu_custom_call.1} parent=43 // pred_region
          %s2201 = smul.u32 8, %s23
          %s2203 = ssub.s32 1024, 1024
          %2204 = vsyncadd %s2190, %s2203
          %s2205 = smul.addr %s2201, 2
          %s2206 = smul.addr %s2205, 64
          %s2207 = scalar_lea.hbm %s7, %s2206
          %s2208 = sshll.u32 %s2193, 4
          %s2209 = int_to_ptr.vmem [resolvable:$true] %s2208
          %2214 = dma.vmem_to_hbm [thread:$0]  %s2209, 1024, %s2207, %s2190, 128, 128, 8
        $region56: #{tpu_custom_call.1} parent=43 // pred_fallthru
          _
      $region44: #{tpu_custom_call.1} parent=5 // pred_fallthru
        _
      %p2215 = scmp.le.s32.totalorder 2, %s18
      // Predicated region
      $region57: #{tpu_custom_call.1} parent=5 // pred_check
        %p2216 = pneg %p2215
      $region58: #{tpu_custom_call.1} parent=5 // pred_check_branch
        %2218 = sbr.rel (%p2216) target = $region60
      $region59: #{tpu_custom_call.1} parent=5 // pred_region
        %s2219 = ssub.s32 %s18, 2
        // Predicated region
        $region61: #{tpu_custom_call.1} parent=59 // pred_check
          %p2220 = pneg %p178
        $region62: #{tpu_custom_call.1} parent=59 // pred_check_branch
          %2222 = sbr.rel (%p2220) target = $region64
        $region63: #{tpu_custom_call.1} parent=59 // pred_region
          %s2223 = smul.u32 8, %s24
          %p2224 = scmp.lt.s32.totalorder %s2223, 15
          %s2225 = scalar_select %p2224, %s2223, 15
          %s2226 = smul.addr %s2225, 8
          %s2227 = scalar_lea.vmem %s6, %s2226
        $region64: #{tpu_custom_call.1} parent=59 // pred_fallthru
          _
        // Predicated region
        $region65: #{tpu_custom_call.1} parent=59 // pred_check
          %p2228 = pneg %p204
        $region66: #{tpu_custom_call.1} parent=59 // pred_check_branch
          %2230 = sbr.rel (%p2228) target = $region68
        $region67: #{tpu_custom_call.1} parent=59 // pred_region
          %s2231 = sand.u32 %s189, 1
          %s2232 = scalar_lea.sflag [#allocation5], %s2231
          %s2233 = sand.u32 %s189, 1
          %s2234 = smul.addr %s2233, 64
          %s2235 = scalar_lea.vmem [#allocation6], %s2234
          %2236 = dma.done %s2232, 1024
        $region68: #{tpu_custom_call.1} parent=59 // pred_fallthru
          _
      $region60: #{tpu_custom_call.1} parent=5 // pred_fallthru
        _
    $region6: #{tpu_custom_call.1} parent=1 // loop_footer
      %s22 = sadd.s32 1, %s18
    $region7: #{tpu_custom_call.1} parent=1 // loop_footer_branch
      %17 = sbr.rel target = $region3
    $region8: #{tpu_custom_call.1} parent=1 // loop_exit
      _
    %2237 = vsyncpa [#allocation4], 1
    %s2238 = scalar_lea.sflag [#allocation4], 1
    %2239 = vsyncpa %s2238, 1
    %2240 = vsyncpa [#allocation5], 1
    %s2241 = scalar_lea.sflag [#allocation5], 1
    %2242 = vsyncpa %s2241, 1

// kernel: tpu_custom_call.1
$region0: #{tpu_custom_call.1}
  #allocation0 [shape = 'u32[]', space=smem, size = 0x4, offset = 0x4, fixed_abs, tag = 'smem constant byte address 0x4 - core index']
  #allocation1 [shape = 'u32[144,128]{1,0:T(1,128)}', space=vmem, size = 0x12000, scoped, tag = 'internal scratch']
  #allocation2 [shape = 'bf16[64,96]{1,0:T(8,128)(2,1)}', space=vmem, size = 0x4000, scoped, tag = 'scratch operand']
  %s0 = inlined_call_operand.vmem [shape: bf16[128,32], index: 0, kind: input, shape index: {}]
  %s1 = inlined_call_operand.vmem [shape: bf16[32,96], index: 1, kind: input, shape index: {}]
  %s2 = inlined_call_operand.vmem [shape: f32[1,96], index: 2, kind: input, shape index: {}]
  %s3 = inlined_call_operand.vmem [shape: bf16[32,32], index: 3, kind: input, shape index: {}]
  %s4 = inlined_call_operand.vmem [shape: f32[1,32], index: 4, kind: input, shape index: {}]
  %s5 = inlined_call_operand.hbm [shape: bf16[4,64,64], index: 5, kind: input, shape index: {}]
  %s6 = inlined_call_operand.vmem [shape: f32[128,32], index: 6, kind: output, shape index: {0}]
  %s7 = inlined_call_operand.hbm [shape: bf16[128,256], index: 7, kind: output, shape index: {1}]
  %8 = xla_tuple %s6, %s7
  %s9 = sld [smem:[#allocation0]]
  $region69: #{tpu_custom_call.1} parent=0
    _
  %s11 = ssub.s32 1, %s9
  %s12 = scalar_select 0, %s11, %s9
  $region1: #{tpu_custom_call.1} parent=0
    #allocation3 [shape = 'u8[65536]{0}', space=vmem, size = 0x10000, scoped, tag = 'input window, operand 5, single buffered']
    #allocation4 [shape = 's32[2]{0}', space=sflag, size = 0x8, scoped, tag = 'scoped memory for tpu_custom_call.1']
    #allocation5 [shape = 's32[2]{0}', space=sflag, size = 0x8, scoped, tag = 'scoped memory for tpu_custom_call.1']
    #allocation6 [shape = 'u8[65536]{0}', space=vmem, size = 0x10000, scoped, tag = 'output window, operand 1']
    %13 = vsyncpa [#allocation4], 0
    %14 = vsyncpa [#allocation5], 0
    %s15 = scalar_lea.sflag [#allocation5], 1
    %16 = vsyncpa %s15, 0
    loop: start=0, step=1, limit=4
    $region2: #{tpu_custom_call.1} parent=1 // loop_pre_header
      _
    $region3: #{tpu_custom_call.1} parent=1 // loop_header
      %s18 = sphi 0, %s22
      %p19 = scmp.ge.s32.totalorder %s18, 4
      %s28 = sphi 0, %s30
      %s31 = sphi 0, %s28
      %s32 = sphi 0, %s31
      %s48 = sphi 0, %s32
      %s52 = sphi 0, %s52
      %s54 = sphi 0, %s52
      %s55 = sphi 0, %s54
      %s69 = sphi 0, %s55
      %s73 = sphi 0, %s73
      %s75 = sphi 0, %s73
      %s76 = sphi 0, %s75
      %s90 = sphi 0, %s76
      %s94 = sphi 0, %s94
      %s96 = sphi 0, %s94
      %s97 = sphi 0, %s96
      %s111 = sphi 0, %s97
      %s115 = sphi 0, %s115
      %s117 = sphi 0, %s115
      %s118 = sphi 0, %s117
      %s132 = sphi 0, %s118
      %s136 = sphi 0, %s136
      %s138 = sphi 0, %s136
      %s139 = sphi 0, %s138
      %s153 = sphi 0, %s139
      %s159 = sphi 0, %s161
      %s162 = sphi 0, %s159
      %s163 = sphi 0, %s162
      %s179 = sphi 0, %s163
      %s185 = sphi 0, %s187
      %s188 = sphi 0, %s185
      %s189 = sphi 0, %s188
      %s205 = sphi 0, %s189
    $region4: #{tpu_custom_call.1} parent=1 // loop_header_branch
      %21 = sbr.rel (%p19) target = $region8
    $region5: #{tpu_custom_call.1} parent=1 // loop_body
      %s23 = ssub.s32 %s18, 1
      %s24 = ssub.s32 %s18, 2
      %s25 = sadd.s32 %s18, 1
      %s26 = ssub.s32 %s18, %s25
      %p27 = scmp.eq.s32.totalorder %s26, 0
      %s29 = sadd.s32 %s28, 1
      %s30 = scalar_select %p27, %s28, %s29
      %p33 = pneg %p27
      %p34 = scmp.eq.s32.totalorder %s18, 1
      %p35 = por %p33, %p34
      %p36 = scmp.ne.s32.totalorder %s28, %s31
      %p37 = scmp.eq.s32.totalorder %s18, 0
      %p38 = por %p36, %p37
      %p39 = scmp.ne.s32.totalorder %s28, %s31
      %p40 = scmp.eq.s32.totalorder %s23, 1
      %p41 = por %p39, %p40
      %p42 = scmp.ne.s32.totalorder %s31, %s32
      %p43 = scmp.eq.s32.totalorder %s23, 0
      %p44 = por %p42, %p43
      %p45 = scmp.ne.s32.totalorder %s31, %s32
      %p46 = scmp.eq.s32.totalorder %s24, 1
      %p47 = por %p45, %p46
      %p49 = scmp.ne.s32.totalorder %s32, %s48
      %p50 = scmp.eq.s32.totalorder %s24, 0
      %p51 = por %p49, %p50
      %s53 = sadd.s32 %s52, 1
      %p56 = scmp.eq.s32.totalorder %s18, 1
      %p57 = scmp.ne.s32.totalorder %s52, %s54
      %p58 = scmp.eq.s32.totalorder %s18, 0
      %p59 = por %p57, %p58
      %p60 = scmp.ne.s32.totalorder %s52, %s54
      %p61 = scmp.eq.s32.totalorder %s23, 1
      %p62 = por %p60, %p61
      %p63 = scmp.ne.s32.totalorder %s54, %s55
      %p64 = scmp.eq.s32.totalorder %s23, 0
      %p65 = por %p63, %p64
      %p66 = scmp.ne.s32.totalorder %s54, %s55
      %p67 = scmp.eq.s32.totalorder %s24, 1
      %p68 = por %p66, %p67
      %p70 = scmp.ne.s32.totalorder %s55, %s69
      %p71 = scmp.eq.s32.totalorder %s24, 0
      %p72 = por %p70, %p71
      %s74 = sadd.s32 %s73, 1
      %p77 = scmp.eq.s32.totalorder %s18, 1
      %p78 = scmp.ne.s32.totalorder %s73, %s75
      %p79 = scmp.eq.s32.totalorder %s18, 0
      %p80 = por %p78, %p79
      %p81 = scmp.ne.s32.totalorder %s73, %s75
      %p82 = scmp.eq.s32.totalorder %s23, 1
      %p83 = por %p81, %p82
      %p84 = scmp.ne.s32.totalorder %s75, %s76
      %p85 = scmp.eq.s32.totalorder %s23, 0
      %p86 = por %p84, %p85
      %p87 = scmp.ne.s32.totalorder %s75, %s76
      %p88 = scmp.eq.s32.totalorder %s24, 1
      %p89 = por %p87, %p88
      %p91 = scmp.ne.s32.totalorder %s76, %s90
      %p92 = scmp.eq.s32.totalorder %s24, 0
      %p93 = por %p91, %p92
      %s95 = sadd.s32 %s94, 1
      %p98 = scmp.eq.s32.totalorder %s18, 1
      %p99 = scmp.ne.s32.totalorder %s94, %s96
      %p100 = scmp.eq.s32.totalorder %s18, 0
      %p101 = por %p99, %p100
      %p102 = scmp.ne.s32.totalorder %s94, %s96
      %p103 = scmp.eq.s32.totalorder %s23, 1
      %p104 = por %p102, %p103
      %p105 = scmp.ne.s32.totalorder %s96, %s97
      %p106 = scmp.eq.s32.totalorder %s23, 0
      %p107 = por %p105, %p106
      %p108 = scmp.ne.s32.totalorder %s96, %s97
      %p109 = scmp.eq.s32.totalorder %s24, 1
      %p110 = por %p108, %p109
      %p112 = scmp.ne.s32.totalorder %s97, %s111
      %p113 = scmp.eq.s32.totalorder %s24, 0
      %p114 = por %p112, %p113
      %s116 = sadd.s32 %s115, 1
      %p119 = scmp.eq.s32.totalorder %s18, 1
      %p120 = scmp.ne.s32.totalorder %s115, %s117
      %p121 = scmp.eq.s32.totalorder %s18, 0
      %p122 = por %p120, %p121
      %p123 = scmp.ne.s32.totalorder %s115, %s117
      %p124 = scmp.eq.s32.totalorder %s23, 1
      %p125 = por %p123, %p124
      %p126 = scmp.ne.s32.totalorder %s117, %s118
      %p127 = scmp.eq.s32.totalorder %s23, 0
      %p128 = por %p126, %p127
      %p129 = scmp.ne.s32.totalorder %s117, %s118
      %p130 = scmp.eq.s32.totalorder %s24, 1
      %p131 = por %p129, %p130
      %p133 = scmp.ne.s32.totalorder %s118, %s132
      %p134 = scmp.eq.s32.totalorder %s24, 0
      %p135 = por %p133, %p134
      %s137 = sadd.s32 %s136, 1
      %p140 = scmp.eq.s32.totalorder %s18, 1
      %p141 = scmp.ne.s32.totalorder %s136, %s138
      %p142 = scmp.eq.s32.totalorder %s18, 0
      %p143 = por %p141, %p142
      %p144 = scmp.ne.s32.totalorder %s136, %s138
      %p145 = scmp.eq.s32.totalorder %s23, 1
      %p146 = por %p144, %p145
      %p147 = scmp.ne.s32.totalorder %s138, %s139
      %p148 = scmp.eq.s32.totalorder %s23, 0
      %p149 = por %p147, %p148
      %p150 = scmp.ne.s32.totalorder %s138, %s139
      %p151 = scmp.eq.s32.totalorder %s24, 1
      %p152 = por %p150, %p151
      %p154 = scmp.ne.s32.totalorder %s139, %s153
      %p155 = scmp.eq.s32.totalorder %s24, 0
      %p156 = por %p154, %p155
      %s157 = ssub.s32 %s18, %s25
      %p158 = scmp.eq.s32.totalorder %s157, 0
      %s160 = sadd.s32 %s159, 1
      %s161 = scalar_select %p158, %s159, %s160
      %p164 = pneg %p158
      %p165 = scmp.eq.s32.totalorder %s18, 1
      %p166 = por %p164, %p165
      %p167 = scmp.ne.s32.totalorder %s159, %s162
      %p168 = scmp.eq.s32.totalorder %s18, 0
      %p169 = por %p167, %p168
      %p170 = scmp.ne.s32.totalorder %s159, %s162
      %p171 = scmp.eq.s32.totalorder %s23, 1
      %p172 = por %p170, %p171
      %p173 = scmp.ne.s32.totalorder %s162, %s163
      %p174 = scmp.eq.s32.totalorder %s23, 0
      %p175 = por %p173, %p174
      %p176 = scmp.ne.s32.totalorder %s162, %s163
      %p177 = scmp.eq.s32.totalorder %s24, 1
      %p178 = por %p176, %p177
      %p180 = scmp.ne.s32.totalorder %s163, %s179
      %p181 = scmp.eq.s32.totalorder %s24, 0
      %p182 = por %p180, %p181
      %s183 = ssub.s32 %s18, %s25
      %p184 = scmp.eq.s32.totalorder %s183, 0
      %s186 = sadd.s32 %s185, 1
      %s187 = scalar_select %p184, %s185, %s186
      %p190 = pneg %p184
      %p191 = scmp.eq.s32.totalorder %s18, 1
      %p192 = por %p190, %p191
      %p193 = scmp.ne.s32.totalorder %s185, %s188
      %p194 = scmp.eq.s32.totalorder %s18, 0
      %p195 = por %p193, %p194
      %p196 = scmp.ne.s32.totalorder %s185, %s188
      %p197 = scmp.eq.s32.totalorder %s23, 1
      %p198 = por %p196, %p197
      %p199 = scmp.ne.s32.totalorder %s188, %s189
      %p200 = scmp.eq.s32.totalorder %s23, 0
      %p201 = por %p199, %p200
      %p202 = scmp.ne.s32.totalorder %s188, %s189
      %p203 = scmp.eq.s32.totalorder %s24, 1
      %p204 = por %p202, %p203
      %p206 = scmp.ne.s32.totalorder %s189, %s205
      %p207 = scmp.eq.s32.totalorder %s24, 0
      %p208 = por %p206, %p207
      %p209 = scmp.le.s32.totalorder 1, %s18
      %p210 = scmp.lt.s32.totalorder %s18, 3
      %p211 = pnand %p209, %p210
      %p212 = pneg %p211
      // Predicated region
      $region9: #{tpu_custom_call.1} parent=5 // pred_check
        _
      $region10: #{tpu_custom_call.1} parent=5 // pred_check_branch
        %214 = sbr.rel (%p211) target = $region12
      $region11: #{tpu_custom_call.1} parent=5 // pred_region
        %s215 = ssub.s32 %s18, 1
        // Predicated region
        $region13: #{tpu_custom_call.1} parent=11 // pred_check
          %p216 = pneg %p65
        $region14: #{tpu_custom_call.1} parent=11 // pred_check_branch
          %218 = sbr.rel (%p216) target = $region16
        $region15: #{tpu_custom_call.1} parent=11 // pred_region
          _
        $region16: #{tpu_custom_call.1} parent=11 // pred_fallthru
          _
        // Predicated region
        $region17: #{tpu_custom_call.1} parent=11 // pred_check
          %p219 = pneg %p86
        $region18: #{tpu_custom_call.1} parent=11 // pred_check_branch
          %221 = sbr.rel (%p219) target = $region20
        $region19: #{tpu_custom_call.1} parent=11 // pred_region
          _
        $region20: #{tpu_custom_call.1} parent=11 // pred_fallthru
          _
        // Predicated region
        $region21: #{tpu_custom_call.1} parent=11 // pred_check
          %p222 = pneg %p107
        $region22: #{tpu_custom_call.1} parent=11 // pred_check_branch
          %224 = sbr.rel (%p222) target = $region24
        $region23: #{tpu_custom_call.1} parent=11 // pred_region
          _
        $region24: #{tpu_custom_call.1} parent=11 // pred_fallthru
          _
        // Predicated region
        $region25: #{tpu_custom_call.1} parent=11 // pred_check
          %p225 = pneg %p128
        $region26: #{tpu_custom_call.1} parent=11 // pred_check_branch
          %227 = sbr.rel (%p225) target = $region28
        $region27: #{tpu_custom_call.1} parent=11 // pred_region
          _
        $region28: #{tpu_custom_call.1} parent=11 // pred_fallthru
          _
        // Predicated region
        $region29: #{tpu_custom_call.1} parent=11 // pred_check
          %p228 = pneg %p149
        $region30: #{tpu_custom_call.1} parent=11 // pred_check_branch
          %230 = sbr.rel (%p228) target = $region32
        $region31: #{tpu_custom_call.1} parent=11 // pred_region
          %s232 = ssub.s32 2048, 2048
          %233 = vsyncadd [#allocation4], %s232
          %s234 = sshll.u32 [#allocation3], 4
          %s235 = int_to_ptr.vmem [resolvable:$true] %s234
          %240 = dma.hbm_to_vmem [thread:$0]  %s5, 2048, %s235, [#allocation4], 64, 64, 4
        $region32: #{tpu_custom_call.1} parent=11 // pred_fallthru
          _
      $region12: #{tpu_custom_call.1} parent=5 // pred_fallthru
        _
      %p241 = scmp.lt.s32.totalorder %s18, 2
      // Predicated region
      $region33: #{tpu_custom_call.1} parent=5 // pred_check
        %p242 = pneg %p241
      $region34: #{tpu_custom_call.1} parent=5 // pred_check_branch
        %244 = sbr.rel (%p242) target = $region36
      $region35: #{tpu_custom_call.1} parent=5 // pred_region
        // Predicated region
        $region37: #{tpu_custom_call.1} parent=35 // pred_check
          %p245 = pneg %p38
        $region38: #{tpu_custom_call.1} parent=35 // pred_check_branch
          %247 = sbr.rel (%p245) target = $region40
        $region39: #{tpu_custom_call.1} parent=35 // pred_region
          %s248 = smul.u32 8, %s18
          %p249 = scmp.lt.s32.totalorder %s248, 15
          %s250 = scalar_select %p249, %s248, 15
          %s251 = smul.addr %s250, 4
          %s252 = scalar_lea.vmem %s0, %s251
          %s253 = smul.u32 8, %s18
        $region40: #{tpu_custom_call.1} parent=35 // pred_fallthru
          _
      $region36: #{tpu_custom_call.1} parent=5 // pred_fallthru
        _
      %p254 = scmp.le.s32.totalorder 1, %s18
      %p255 = scmp.lt.s32.totalorder %s18, 3
      %p256 = pnand %p254, %p255
      %p257 = pneg %p256
      // Predicated region
      $region41: #{tpu_custom_call.1} parent=5 // pred_check
        _
      $region42: #{tpu_custom_call.1} parent=5 // pred_check_branch
        %259 = sbr.rel (%p256) target = $region44
      $region43: #{tpu_custom_call.1} parent=5 // pred_region
        %s260 = ssub.s32 %s18, 1
        // Predicated region
        $region45: #{tpu_custom_call.1} parent=43 // pred_check
          %p261 = pneg %p149
        $region46: #{tpu_custom_call.1} parent=43 // pred_check_branch
          %263 = sbr.rel (%p261) target = $region48
        $region47: #{tpu_custom_call.1} parent=43 // pred_region
          %264 = dma.done [#allocation4], 2048
        $region48: #{tpu_custom_call.1} parent=43 // pred_fallthru
          _
        %s265 = smul.u32 8, %s23
        %p266 = scmp.lt.s32.totalorder %s265, 15
        %s267 = scalar_select %p266, %s265, 15
        %s268 = smul.addr %s267, 4
        %s269 = scalar_lea.vmem %s0, %s268
        %p270 = pneg %p44
        %p271 = pneg %p41
        %p272 = pneg %p65
        %p273 = pneg %p62
        %p274 = pneg %p86
        %p275 = pneg %p83
        %p276 = pneg %p107
        %p277 = pneg %p104
        %p278 = pneg %p128
        %p279 = pneg %p125
        %p280 = pneg %p149
        %p281 = pneg %p146
        %p282 = pneg %p175
        %p283 = pneg %p172
        %s284 = smul.u32 8, %s23
        %p285 = scmp.lt.s32.totalorder %s284, 15
        %s286 = scalar_select %p285, %s284, 15
        %s287 = smul.addr %s286, 8
        %s288 = scalar_lea.vmem %s6, %s287
        %p289 = pneg %p201
        %p290 = pneg %p198
        %s291 = sand.u32 %s188, 1
        %s292 = scalar_lea.sflag [#allocation5], %s291
        %s293 = sand.u32 %s188, 1
        %s294 = smul.addr %s293, 64
        %s295 = scalar_lea.vmem [#allocation6], %s294
        %s296 = smul.u32 8, %s23
        %p297 = scmp.lt.s32.totalorder %s296, 15
        %s298 = scalar_select %p297, %s296, 15
        %s299 = smul.addr %s298, 4
        %s300 = scalar_lea.vmem %s0, %s299
        %s301 = smul.u32 8, %s23
        %s302 = smul.u32 8, %s23
        %p303 = scmp.lt.s32.totalorder %s302, 15
        %s304 = scalar_select %p303, %s302, 15
        %s305 = smul.addr %s304, 8
        %s306 = scalar_lea.vmem %s6, %s305
        %s307 = smul.u32 8, %s23
        %s308 = smul.u32 8, %s23
        %v310 = vld [vmem:[%s300] sm:$0xf]
        %v311 = vld [vmem:[%s300 + $0x4] sm:$0xf]
        %v312 = vld [vmem:[%s300 + $0x8] sm:$0xf]
        %v313 = vld [vmem:[%s300 + $0xc] sm:$0xf]
        %v314 = vld [vmem:[%s300 + $0x10] sm:$0xf]
        %v315 = vld [vmem:[%s300 + $0x14] sm:$0xf]
        %v316 = vld [vmem:[%s300 + $0x18] sm:$0xf]
        %v317 = vld [vmem:[%s300 + $0x1c] sm:$0xf]
        %v318 = vld [vmem:[%s1] sm:$0xf]
        %v319 = vld [vmem:[%s1 + $0x4] sm:$0xf]
        %v320 = vld [vmem:[%s1 + $0x8] sm:$0xf]
        %v321 = vld [vmem:[%s1 + $0xc] sm:$0xf]
        %v322 = vld [vmem:[%s2] sm:$0x1]
        %v324 = vlaneseq
        %v325 = vshrl.u32 %v324, 7
        %v326 = vsub.s32 0, %v325
        %v327 = vrot.slane %v322, %v326
        %v337 = vunpack.c.l.b16 %v310
        %v338 = vunpack.c.l.b16 %v311
        %v339 = vunpack.c.l.b16 %v312
        %v340 = vunpack.c.l.b16 %v313
        %v341 = vunpack.c.l.b16 %v314
        %v342 = vunpack.c.l.b16 %v315
        %v343 = vunpack.c.l.b16 %v316
        %v344 = vunpack.c.l.b16 %v317
        %v345 = vpack.c.b16 %v338, %v337
        %v346 = vpack.c.b16 %v340, %v339
        %v347 = vpack.c.b16 %v342, %v341
        %v348 = vpack.c.b16 %v344, %v343
        %v353 = vunpack.c.l.b16 %v318
        %v354 = vunpack.c.l.b16 %v319
        %v355 = vunpack.c.l.b16 %v320
        %v356 = vunpack.c.l.b16 %v321
        %v357 = vpack.c.b16 %v354, %v353
        %v358 = vpack.c.b16 %v356, %v355
        %vm361 = vcmask 261120
        %v363 = vsel %vm361, %v345, 0
        %v366 = vsel %vm361, %v346, 0
        %v369 = vsel %vm361, %v347, 0
        %v372 = vsel %vm361, %v348, 0
        %374 = vmatprep.subr.bf16.mxu0 0
        %375 = vmatpush1.bf16.msra.mxu0 0
        %376 = vmatprep.subr.bf16.mxu0 0
        %377 = vmatpush1.bf16.msra.mxu0 0
        %378 = vmatprep.subr.bf16.mxu0 0
        %379 = vmatpush1.bf16.msra.mxu0 0
        %380 = vmatprep.subr.bf16.mxu0 0
        %381 = vmatpush1.bf16.msra.mxu0 0
        %382 = vmatprep.subr.bf16.mxu0 0
        %383 = vmatpush1.bf16.msra.mxu0 0
        %384 = vmatprep.subr.bf16.mxu0 0
        %385 = vmatpush1.bf16.msra.mxu0 0
        %386 = vmatprep.subr.bf16.mxu0 0
        %387 = vmatpush1.bf16.msra.mxu0 %v358
        %388 = vmatprep.subr.bf16.mxu0 0
        %389 = vmatpush1.bf16.msra.mxu0 %v357
        %390 = vmatprep.subr.bf16.mxu0 0
        %391 = vmatpush2.bf16.msra.mxu0 0
        %392 = vmatprep.subr.bf16.mxu0 0
        %393 = vmatpush2.bf16.msra.mxu0 0
        %394 = vmatprep.subr.bf16.mxu0 0
        %395 = vmatpush2.bf16.msra.mxu0 0
        %396 = vmatprep.subr.bf16.mxu0 0
        %397 = vmatpush2.bf16.msra.mxu0 0
        %398 = vmatprep.subr.bf16.mxu0 0
        %399 = vmatpush2.bf16.msra.mxu0 0
        %400 = vmatprep.subr.bf16.mxu0 0
        %401 = vmatpush2.bf16.msra.mxu0 0
        %402 = vmatprep.subr.bf16.mxu0 0
        %403 = vmatpush2.bf16.msra.mxu0 0
        %404 = vmatprep.subr.bf16.mxu0 0
        %405 = vmatpush2.bf16.msra.mxu0 0
        %406 = vmatprep.mubr.bf16.mxu0 0
        %407 = vmatmul.mubr.bf16.gmra.mxu0 %v363
        %v408 = vpop.f32.mrf.mxu0
        %v409 = vadd.f32 %v327, %v408
        %v410 = vpop.f32.mrf.mxu0
        %v411 = vpop.f32.mrf.mxu0
        %v412 = vadd.f32 %v327, %v411
        %v413 = vpop.f32.mrf.mxu0
        %414 = vmatprep.mubr.bf16.mxu0 0
        %415 = vmatmul.mubr.bf16.gmra.mxu0 %v366
        %v416 = vpop.f32.mrf.mxu0
        %v417 = vadd.f32 %v327, %v416
        %v418 = vpop.f32.mrf.mxu0
        %v419 = vpop.f32.mrf.mxu0
        %v420 = vadd.f32 %v327, %v419
        %v421 = vpop.f32.mrf.mxu0
        %422 = vmatprep.mubr.bf16.mxu0 0
        %423 = vmatmul.mubr.bf16.gmra.mxu0 %v369
        %v424 = vpop.f32.mrf.mxu0
        %v425 = vadd.f32 %v327, %v424
        %v426 = vpop.f32.mrf.mxu0
        %v427 = vpop.f32.mrf.mxu0
        %v428 = vadd.f32 %v327, %v427
        %v429 = vpop.f32.mrf.mxu0
        %430 = vmatprep.mubr.bf16.mxu0 0
        %431 = vmatmul.mubr.bf16.gmra.mxu0 %v372
        %v432 = vpop.f32.mrf.mxu0
        %v433 = vadd.f32 %v327, %v432
        %v434 = vpop.f32.mrf.mxu0
        %v435 = vpop.f32.mrf.mxu0
        %v436 = vadd.f32 %v327, %v435
        %v437 = vpop.f32.mrf.mxu0
        %438 = vdwg.mxu0
        %v439 = vpack.c.bf16 %v412, %v409
        %v440 = vpack.c.bf16 %v420, %v417
        %v441 = vpack.c.bf16 %v428, %v425
        %v442 = vpack.c.bf16 %v436, %v433
        %v447 = vunpack.c.l.b16 %v439
        %v448 = vunpack.c.h.b16 %v439
        %v449 = vunpack.c.l.b16 %v440
        %v450 = vunpack.c.h.b16 %v440
        %v451 = vunpack.c.l.b16 %v441
        %v452 = vunpack.c.h.b16 %v441
        %v453 = vunpack.c.l.b16 %v442
        %v454 = vunpack.c.h.b16 %v442
        %v455 = vpack.c.b16 %v447, %v447
        %v456 = vpack.c.b16 %v448, %v448
        %v457 = vpack.c.b16 %v449, %v449
        %v458 = vpack.c.b16 %v450, %v450
        %v459 = vpack.c.b16 %v451, %v451
        %v460 = vpack.c.b16 %v452, %v452
        %v461 = vpack.c.b16 %v453, %v453
        %v462 = vpack.c.b16 %v454, %v454
        %vm471 = vcmask 781312
        %472 = vst.msk [vmem:[#allocation2] sm:$0xf] %vm471, %v455
        %473 = vst.msk [vmem:[#allocation2 + $0x4] sm:$0xf] %vm471, %v456
        %474 = vst.msk [vmem:[#allocation2 + $0x8] sm:$0xf] %vm471, %v457
        %475 = vst.msk [vmem:[#allocation2 + $0xc] sm:$0xf] %vm471, %v458
        %476 = vst.msk [vmem:[#allocation2 + $0x10] sm:$0xf] %vm471, %v459
        %477 = vst.msk [vmem:[#allocation2 + $0x14] sm:$0xf] %vm471, %v460
        %478 = vst.msk [vmem:[#allocation2 + $0x18] sm:$0xf] %vm471, %v461
        %479 = vst.msk [vmem:[#allocation2 + $0x1c] sm:$0xf] %vm471, %v462
        %v480 = vld [vmem:[#allocation2] sm:$0xf]
        %v481 = vld [vmem:[#allocation2 + $0x4] sm:$0xf]
        %v482 = vld [vmem:[#allocation2 + $0x8] sm:$0xf]
        %v483 = vld [vmem:[#allocation2 + $0xc] sm:$0xf]
        %v484 = vld [vmem:[#allocation2 + $0x10] sm:$0xf]
        %v485 = vld [vmem:[#allocation2 + $0x14] sm:$0xf]
        %v486 = vld [vmem:[#allocation2 + $0x18] sm:$0xf]
        %v487 = vld [vmem:[#allocation2 + $0x1c] sm:$0xf]
        %v488 = vld [vmem:[#allocation3] sm:$0xf]
        %v489 = vld [vmem:[#allocation3 + $0x4] sm:$0xf]
        %v490 = vld [vmem:[#allocation3 + $0x8] sm:$0xf]
        %v491 = vld [vmem:[#allocation3 + $0xc] sm:$0xf]
        %v492 = vld [vmem:[#allocation3 + $0x10] sm:$0xf]
        %v493 = vld [vmem:[#allocation3 + $0x14] sm:$0xf]
        %v494 = vld [vmem:[#allocation3 + $0x18] sm:$0xf]
        %v495 = vld [vmem:[#allocation3 + $0x1c] sm:$0xf]
        %v496 = vunpack.c.l.bf16 %v488
        %v497 = vunpack.c.l.bf16 %v489
        %v498 = vunpack.c.l.bf16 %v490
        %v499 = vunpack.c.l.bf16 %v491
        %v500 = vunpack.c.l.bf16 %v492
        %v501 = vunpack.c.l.bf16 %v493
        %v502 = vunpack.c.l.bf16 %v494
        %v503 = vunpack.c.l.bf16 %v495
        %v512 = vunpack.c.l.b16 %v480
        %v513 = vunpack.c.l.b16 %v481
        %v514 = vunpack.c.l.b16 %v482
        %v515 = vunpack.c.l.b16 %v483
        %v516 = vunpack.c.l.b16 %v484
        %v517 = vunpack.c.l.b16 %v485
        %v518 = vunpack.c.l.b16 %v486
        %v519 = vunpack.c.l.b16 %v487
        %v520 = vpack.c.b16 %v513, %v512
        %v521 = vpack.c.b16 %v515, %v514
        %v522 = vpack.c.b16 %v517, %v516
        %v523 = vpack.c.b16 %v519, %v518
        %524 = vrot.lane.b32.xlu0 %v520, 96
        %v525 = vpop.permute.xlu0 %524
        %526 = vrot.lane.b32.xlu0 %v521, 96
        %v527 = vpop.permute.xlu0 %526
        %528 = vrot.lane.b32.xlu0 %v522, 96
        %v529 = vpop.permute.xlu0 %528
        %530 = vrot.lane.b32.xlu0 %v523, 96
        %v531 = vpop.permute.xlu0 %530
        %vm532 = vcmask 64512
        %v534 = vsel %vm532, %v520, 0
        %v537 = vsel %vm532, %v521, 0
        %v540 = vsel %vm532, %v522, 0
        %v543 = vsel %vm532, %v523, 0
        %v546 = vsel %vm532, %v525, 0
        %v549 = vsel %vm532, %v527, 0
        %v552 = vsel %vm532, %v529, 0
        %v555 = vsel %vm532, %v531, 0
        %557 = vmatprep.subr.bf16.mxu0 0
        %558 = vmatpush1.bf16.xpose.msra.mxu0 0
        %559 = vmatprep.subr.bf16.mxu0 0
        %560 = vmatpush1.bf16.xpose.msra.mxu0 0
        %561 = vmatprep.subr.bf16.mxu0 0
        %562 = vmatpush1.bf16.xpose.msra.mxu0 0
        %563 = vmatprep.subr.bf16.mxu0 0
        %564 = vmatpush1.bf16.xpose.msra.mxu0 0
        %565 = vmatprep.subr.bf16.mxu0 0
        %566 = vmatpush1.bf16.xpose.msra.mxu0 %v555
        %567 = vmatprep.subr.bf16.mxu0 0
        %568 = vmatpush1.bf16.xpose.msra.mxu0 %v552
        %569 = vmatprep.subr.bf16.mxu0 0
        %570 = vmatpush1.bf16.xpose.msra.mxu0 %v549
        %571 = vmatprep.subr.bf16.mxu0 0
        %572 = vmatpush1.bf16.xpose.msra.mxu0 %v546
        %573 = vmatprep.subr.bf16.mxu0 0
        %574 = vmatpush2.bf16.xpose.msra.mxu0 0
        %575 = vmatprep.subr.bf16.mxu0 0
        %576 = vmatpush2.bf16.xpose.msra.mxu0 0
        %577 = vmatprep.subr.bf16.mxu0 0
        %578 = vmatpush2.bf16.xpose.msra.mxu0 0
        %579 = vmatprep.subr.bf16.mxu0 0
        %580 = vmatpush2.bf16.xpose.msra.mxu0 0
        %581 = vmatprep.subr.bf16.mxu0 0
        %582 = vmatpush2.bf16.xpose.msra.mxu0 0
        %583 = vmatprep.subr.bf16.mxu0 0
        %584 = vmatpush2.bf16.xpose.msra.mxu0 0
        %585 = vmatprep.subr.bf16.mxu0 0
        %586 = vmatpush2.bf16.xpose.msra.mxu0 0
        %587 = vmatprep.subr.bf16.mxu0 0
        %588 = vmatpush2.bf16.xpose.msra.mxu0 0
        %589 = vmatprep.mubr.bf16.mxu0 0
        %590 = vmatmul.mubr.bf16.gmra.mxu0 %v534
        %v591 = vpop.f32.mrf.mxu0
        %v592 = vadd.f32 %v496, %v591
        %v593 = vpop.f32.mrf.mxu0
        %v594 = vpop.f32.mrf.mxu0
        %v595 = vadd.f32 %v497, %v594
        %v596 = vpop.f32.mrf.mxu0
        %597 = vmatprep.mubr.bf16.mxu0 0
        %598 = vmatmul.mubr.bf16.gmra.mxu0 %v537
        %v599 = vpop.f32.mrf.mxu0
        %v600 = vadd.f32 %v498, %v599
        %v601 = vpop.f32.mrf.mxu0
        %v602 = vpop.f32.mrf.mxu0
        %v603 = vadd.f32 %v499, %v602
        %v604 = vpop.f32.mrf.mxu0
        %605 = vmatprep.mubr.bf16.mxu0 0
        %606 = vmatmul.mubr.bf16.gmra.mxu0 %v540
        %v607 = vpop.f32.mrf.mxu0
        %v608 = vadd.f32 %v500, %v607
        %v609 = vpop.f32.mrf.mxu0
        %v610 = vpop.f32.mrf.mxu0
        %v611 = vadd.f32 %v501, %v610
        %v612 = vpop.f32.mrf.mxu0
        %613 = vmatprep.mubr.bf16.mxu0 0
        %614 = vmatmul.mubr.bf16.gmra.mxu0 %v543
        %v615 = vpop.f32.mrf.mxu0
        %v616 = vadd.f32 %v502, %v615
        %v617 = vpop.f32.mrf.mxu0
        %v618 = vpop.f32.mrf.mxu0
        %v619 = vadd.f32 %v503, %v618
        %v620 = vpop.f32.mrf.mxu0
        %621 = vdwg.mxu0
        %vm622 = vcmask 523264
        %v623 = vsel %vm622, %v592, -inf
        %624 = vmax.xlane.f32.xlu0 %v623
        %v625 = vpop.xlane.xlu0 %624
        %v626 = vsel %vm622, %v595, -inf
        %627 = vmax.xlane.f32.xlu0 %v626
        %v628 = vpop.xlane.xlu0 %627
        %v629 = vsel %vm622, %v600, -inf
        %630 = vmax.xlane.f32.xlu0 %v629
        %v631 = vpop.xlane.xlu0 %630
        %v632 = vsel %vm622, %v603, -inf
        %633 = vmax.xlane.f32.xlu0 %v632
        %v634 = vpop.xlane.xlu0 %633
        %v635 = vsel %vm622, %v608, -inf
        %636 = vmax.xlane.f32.xlu0 %v635
        %v637 = vpop.xlane.xlu0 %636
        %v638 = vsel %vm622, %v611, -inf
        %639 = vmax.xlane.f32.xlu0 %v638
        %v640 = vpop.xlane.xlu0 %639
        %v641 = vsel %vm622, %v616, -inf
        %642 = vmax.xlane.f32.xlu0 %v641
        %v643 = vpop.xlane.xlu0 %642
        %v644 = vsel %vm622, %v619, -inf
        %645 = vmax.xlane.f32.xlu0 %v644
        %v646 = vpop.xlane.xlu0 %645
        %v647 = vsub.f32 %v592, %v625
        %v648 = vsub.f32 %v595, %v628
        %v649 = vsub.f32 %v600, %v631
        %v650 = vsub.f32 %v603, %v634
        %v651 = vsub.f32 %v608, %v637
        %v652 = vsub.f32 %v611, %v640
        %v653 = vsub.f32 %v616, %v643
        %v654 = vsub.f32 %v619, %v646
        %v655 = vmul.f32 %v647, 1.442695
        %v656 = vpow.pop %v655
        %v657 = vmul.f32 %v648, 1.442695
        %v658 = vpow.pop %v657
        %v659 = vmul.f32 %v649, 1.442695
        %v660 = vpow.pop %v659
        %v661 = vmul.f32 %v650, 1.442695
        %v662 = vpow.pop %v661
        %v663 = vmul.f32 %v651, 1.442695
        %v664 = vpow.pop %v663
        %v665 = vmul.f32 %v652, 1.442695
        %v666 = vpow.pop %v665
        %v667 = vmul.f32 %v653, 1.442695
        %v668 = vpow.pop %v667
        %v669 = vmul.f32 %v654, 1.442695
        %v670 = vpow.pop %v669
        %v671 = vsel %vm622, %v656, 0.0
        %672 = vadd.xlane.f32.xlu0 %v671
        %v673 = vpop.xlane.xlu0 %672
        %v674 = vsel %vm622, %v658, 0.0
        %675 = vadd.xlane.f32.xlu0 %v674
        %v676 = vpop.xlane.xlu0 %675
        %v677 = vsel %vm622, %v660, 0.0
        %678 = vadd.xlane.f32.xlu0 %v677
        %v679 = vpop.xlane.xlu0 %678
        %v680 = vsel %vm622, %v662, 0.0
        %681 = vadd.xlane.f32.xlu0 %v680
        %v682 = vpop.xlane.xlu0 %681
        %v683 = vsel %vm622, %v664, 0.0
        %684 = vadd.xlane.f32.xlu0 %v683
        %v685 = vpop.xlane.xlu0 %684
        %v686 = vsel %vm622, %v666, 0.0
        %687 = vadd.xlane.f32.xlu0 %v686
        %v688 = vpop.xlane.xlu0 %687
        %v689 = vsel %vm622, %v668, 0.0
        %690 = vadd.xlane.f32.xlu0 %v689
        %v691 = vpop.xlane.xlu0 %690
        %v692 = vsel %vm622, %v670, 0.0
        %693 = vadd.xlane.f32.xlu0 %v692
        %v694 = vpop.xlane.xlu0 %693
        %v695 = vrcp.pop %v673
        %v696 = vrcp.pop %v676
        %v697 = vrcp.pop %v679
        %v698 = vrcp.pop %v682
        %v699 = vrcp.pop %v685
        %v700 = vrcp.pop %v688
        %v701 = vrcp.pop %v691
        %v702 = vrcp.pop %v694
        %v703 = vmul.f32 %v656, %v695
        %v704 = vmul.f32 %v658, %v696
        %v705 = vmul.f32 %v660, %v697
        %v706 = vmul.f32 %v662, %v698
        %v707 = vmul.f32 %v664, %v699
        %v708 = vmul.f32 %v666, %v700
        %v709 = vmul.f32 %v668, %v701
        %v710 = vmul.f32 %v670, %v702
        %v711 = vpack.c.bf16 %v704, %v703
        %v712 = vpack.c.bf16 %v706, %v705
        %v713 = vpack.c.bf16 %v708, %v707
        %v714 = vpack.c.bf16 %v710, %v709
        %715 = vrot.lane.b32.xlu0 %v520, 64
        %v716 = vpop.permute.xlu0 %715
        %717 = vrot.lane.b32.xlu0 %v521, 64
        %v718 = vpop.permute.xlu0 %717
        %719 = vrot.lane.b32.xlu0 %v522, 64
        %v720 = vpop.permute.xlu0 %719
        %721 = vrot.lane.b32.xlu0 %v523, 64
        %v722 = vpop.permute.xlu0 %721
        %v728 = vsel %vm622, %v711, 0
        %v731 = vsel %vm622, %v712, 0
        %v734 = vsel %vm622, %v713, 0
        %v737 = vsel %vm622, %v714, 0
        %739 = vmatprep.subr.bf16.mxu0 0
        %740 = vmatpush1.bf16.msra.mxu0 0
        %741 = vmatprep.subr.bf16.mxu0 0
        %742 = vmatpush1.bf16.msra.mxu0 0
        %743 = vmatprep.subr.bf16.mxu0 0
        %744 = vmatpush1.bf16.msra.mxu0 0
        %745 = vmatprep.subr.bf16.mxu0 0
        %746 = vmatpush1.bf16.msra.mxu0 0
        %747 = vmatprep.subr.bf16.mxu0 0
        %748 = vmatpush1.bf16.msra.mxu0 %v722
        %749 = vmatprep.subr.bf16.mxu0 0
        %750 = vmatpush1.bf16.msra.mxu0 %v720
        %751 = vmatprep.subr.bf16.mxu0 0
        %752 = vmatpush1.bf16.msra.mxu0 %v718
        %753 = vmatprep.subr.bf16.mxu0 0
        %754 = vmatpush1.bf16.msra.mxu0 %v716
        %755 = vmatprep.subr.bf16.mxu0 0
        %756 = vmatpush2.bf16.msra.mxu0 0
        %757 = vmatprep.subr.bf16.mxu0 0
        %758 = vmatpush2.bf16.msra.mxu0 0
        %759 = vmatprep.subr.bf16.mxu0 0
        %760 = vmatpush2.bf16.msra.mxu0 0
        %761 = vmatprep.subr.bf16.mxu0 0
        %762 = vmatpush2.bf16.msra.mxu0 0
        %763 = vmatprep.subr.bf16.mxu0 0
        %764 = vmatpush2.bf16.msra.mxu0 0
        %765 = vmatprep.subr.bf16.mxu0 0
        %766 = vmatpush2.bf16.msra.mxu0 0
        %767 = vmatprep.subr.bf16.mxu0 0
        %768 = vmatpush2.bf16.msra.mxu0 0
        %769 = vmatprep.subr.bf16.mxu0 0
        %770 = vmatpush2.bf16.msra.mxu0 0
        %771 = vmatprep.mubr.bf16.mxu0 0
        %772 = vmatmul.mubr.bf16.gmra.mxu0 %v728
        %v773 = vpop.f32.mrf.mxu0
        %v774 = vadd.f32 0.0, %v773
        %v775 = vpop.f32.mrf.mxu0
        %v776 = vpop.f32.mrf.mxu0
        %v777 = vadd.f32 0.0, %v776
        %v778 = vpop.f32.mrf.mxu0
        %779 = vmatprep.mubr.bf16.mxu0 0
        %780 = vmatmul.mubr.bf16.gmra.mxu0 %v731
        %v781 = vpop.f32.mrf.mxu0
        %v782 = vadd.f32 0.0, %v781
        %v783 = vpop.f32.mrf.mxu0
        %v784 = vpop.f32.mrf.mxu0
        %v785 = vadd.f32 0.0, %v784
        %v786 = vpop.f32.mrf.mxu0
        %787 = vmatprep.mubr.bf16.mxu0 0
        %788 = vmatmul.mubr.bf16.gmra.mxu0 %v734
        %v789 = vpop.f32.mrf.mxu0
        %v790 = vadd.f32 0.0, %v789
        %v791 = vpop.f32.mrf.mxu0
        %v792 = vpop.f32.mrf.mxu0
        %v793 = vadd.f32 0.0, %v792
        %v794 = vpop.f32.mrf.mxu0
        %795 = vmatprep.mubr.bf16.mxu0 0
        %796 = vmatmul.mubr.bf16.gmra.mxu0 %v737
        %v797 = vpop.f32.mrf.mxu0
        %v798 = vadd.f32 0.0, %v797
        %v799 = vpop.f32.mrf.mxu0
        %v800 = vpop.f32.mrf.mxu0
        %v801 = vadd.f32 0.0, %v800
        %v802 = vpop.f32.mrf.mxu0
        %803 = vdwg.mxu0
        %v804 = vpack.c.bf16 %v777, %v774
        %v805 = vpack.c.bf16 %v785, %v782
        %v806 = vpack.c.bf16 %v793, %v790
        %v807 = vpack.c.bf16 %v801, %v798
        %v808 = vld [vmem:[%s3] sm:$0xf]
        %s809 = scalar_lea.vmem [#allocation3], 32
        %v810 = vld [vmem:[%s809] sm:$0xf]
        %v811 = vld [vmem:[%s809 + $0x4] sm:$0xf]
        %v812 = vld [vmem:[%s809 + $0x8] sm:$0xf]
        %v813 = vld [vmem:[%s809 + $0xc] sm:$0xf]
        %v814 = vld [vmem:[%s809 + $0x10] sm:$0xf]
        %v815 = vld [vmem:[%s809 + $0x14] sm:$0xf]
        %v816 = vld [vmem:[%s809 + $0x18] sm:$0xf]
        %v817 = vld [vmem:[%s809 + $0x1c] sm:$0xf]
        %v818 = vunpack.c.l.bf16 %v810
        %v819 = vunpack.c.l.bf16 %v811
        %v820 = vunpack.c.l.bf16 %v812
        %v821 = vunpack.c.l.bf16 %v813
        %v822 = vunpack.c.l.bf16 %v814
        %v823 = vunpack.c.l.bf16 %v815
        %v824 = vunpack.c.l.bf16 %v816
        %v825 = vunpack.c.l.bf16 %v817
        %826 = vrot.lane.b32.xlu0 %v520, 120
        %v827 = vpop.permute.xlu0 %826
        %828 = vrot.lane.b32.xlu0 %v521, 120
        %v829 = vpop.permute.xlu0 %828
        %830 = vrot.lane.b32.xlu0 %v522, 120
        %v831 = vpop.permute.xlu0 %830
        %832 = vrot.lane.b32.xlu0 %v523, 120
        %v833 = vpop.permute.xlu0 %832
        %834 = vrot.lane.b32.xlu0 %v520, 88
        %v835 = vpop.permute.xlu0 %834
        %836 = vrot.lane.b32.xlu0 %v521, 88
        %v837 = vpop.permute.xlu0 %836
        %838 = vrot.lane.b32.xlu0 %v522, 88
        %v839 = vpop.permute.xlu0 %838
        %840 = vrot.lane.b32.xlu0 %v523, 88
        %v841 = vpop.permute.xlu0 %840
        %v843 = vsel %vm532, %v827, 0
        %v846 = vsel %vm532, %v829, 0
        %v849 = vsel %vm532, %v831, 0
        %v852 = vsel %vm532, %v833, 0
        %v855 = vsel %vm532, %v835, 0
        %v858 = vsel %vm532, %v837, 0
        %v861 = vsel %vm532, %v839, 0
        %v864 = vsel %vm532, %v841, 0
        %866 = vmatprep.subr.bf16.mxu0 0
        %867 = vmatpush1.bf16.xpose.msra.mxu0 0
        %868 = vmatprep.subr.bf16.mxu0 0
        %869 = vmatpush1.bf16.xpose.msra.mxu0 0
        %870 = vmatprep.subr.bf16.mxu0 0
        %871 = vmatpush1.bf16.xpose.msra.mxu0 0
        %872 = vmatprep.subr.bf16.mxu0 0
        %873 = vmatpush1.bf16.xpose.msra.mxu0 0
        %874 = vmatprep.subr.bf16.mxu0 0
        %875 = vmatpush1.bf16.xpose.msra.mxu0 %v864
        %876 = vmatprep.subr.bf16.mxu0 0
        %877 = vmatpush1.bf16.xpose.msra.mxu0 %v861
        %878 = vmatprep.subr.bf16.mxu0 0
        %879 = vmatpush1.bf16.xpose.msra.mxu0 %v858
        %880 = vmatprep.subr.bf16.mxu0 0
        %881 = vmatpush1.bf16.xpose.msra.mxu0 %v855
        %882 = vmatprep.subr.bf16.mxu0 0
        %883 = vmatpush2.bf16.xpose.msra.mxu0 0
        %884 = vmatprep.subr.bf16.mxu0 0
        %885 = vmatpush2.bf16.xpose.msra.mxu0 0
        %886 = vmatprep.subr.bf16.mxu0 0
        %887 = vmatpush2.bf16.xpose.msra.mxu0 0
        %888 = vmatprep.subr.bf16.mxu0 0
        %889 = vmatpush2.bf16.xpose.msra.mxu0 0
        %890 = vmatprep.subr.bf16.mxu0 0
        %891 = vmatpush2.bf16.xpose.msra.mxu0 0
        %892 = vmatprep.subr.bf16.mxu0 0
        %893 = vmatpush2.bf16.xpose.msra.mxu0 0
        %894 = vmatprep.subr.bf16.mxu0 0
        %895 = vmatpush2.bf16.xpose.msra.mxu0 0
        %896 = vmatprep.subr.bf16.mxu0 0
        %897 = vmatpush2.bf16.xpose.msra.mxu0 0
        %898 = vmatprep.mubr.bf16.mxu0 0
        %899 = vmatmul.mubr.bf16.gmra.mxu0 %v843
        %v900 = vpop.f32.mrf.mxu0
        %v901 = vadd.f32 %v818, %v900
        %v902 = vpop.f32.mrf.mxu0
        %v903 = vpop.f32.mrf.mxu0
        %v904 = vadd.f32 %v819, %v903
        %v905 = vpop.f32.mrf.mxu0
        %906 = vmatprep.mubr.bf16.mxu0 0
        %907 = vmatmul.mubr.bf16.gmra.mxu0 %v846
        %v908 = vpop.f32.mrf.mxu0
        %v909 = vadd.f32 %v820, %v908
        %v910 = vpop.f32.mrf.mxu0
        %v911 = vpop.f32.mrf.mxu0
        %v912 = vadd.f32 %v821, %v911
        %v913 = vpop.f32.mrf.mxu0
        %914 = vmatprep.mubr.bf16.mxu0 0
        %915 = vmatmul.mubr.bf16.gmra.mxu0 %v849
        %v916 = vpop.f32.mrf.mxu0
        %v917 = vadd.f32 %v822, %v916
        %v918 = vpop.f32.mrf.mxu0
        %v919 = vpop.f32.mrf.mxu0
        %v920 = vadd.f32 %v823, %v919
        %v921 = vpop.f32.mrf.mxu0
        %922 = vmatprep.mubr.bf16.mxu0 0
        %923 = vmatmul.mubr.bf16.gmra.mxu0 %v852
        %v924 = vpop.f32.mrf.mxu0
        %v925 = vadd.f32 %v824, %v924
        %v926 = vpop.f32.mrf.mxu0
        %v927 = vpop.f32.mrf.mxu0
        %v928 = vadd.f32 %v825, %v927
        %v929 = vpop.f32.mrf.mxu0
        %930 = vdwg.mxu0
        %v931 = vsel %vm622, %v901, -inf
        %932 = vmax.xlane.f32.xlu0 %v931
        %v933 = vpop.xlane.xlu0 %932
        %v934 = vsel %vm622, %v904, -inf
        %935 = vmax.xlane.f32.xlu0 %v934
        %v936 = vpop.xlane.xlu0 %935
        %v937 = vsel %vm622, %v909, -inf
        %938 = vmax.xlane.f32.xlu0 %v937
        %v939 = vpop.xlane.xlu0 %938
        %v940 = vsel %vm622, %v912, -inf
        %941 = vmax.xlane.f32.xlu0 %v940
        %v942 = vpop.xlane.xlu0 %941
        %v943 = vsel %vm622, %v917, -inf
        %944 = vmax.xlane.f32.xlu0 %v943
        %v945 = vpop.xlane.xlu0 %944
        %v946 = vsel %vm622, %v920, -inf
        %947 = vmax.xlane.f32.xlu0 %v946
        %v948 = vpop.xlane.xlu0 %947
        %v949 = vsel %vm622, %v925, -inf
        %950 = vmax.xlane.f32.xlu0 %v949
        %v951 = vpop.xlane.xlu0 %950
        %v952 = vsel %vm622, %v928, -inf
        %953 = vmax.xlane.f32.xlu0 %v952
        %v954 = vpop.xlane.xlu0 %953
        %v955 = vsub.f32 %v901, %v933
        %v956 = vsub.f32 %v904, %v936
        %v957 = vsub.f32 %v909, %v939
        %v958 = vsub.f32 %v912, %v942
        %v959 = vsub.f32 %v917, %v945
        %v960 = vsub.f32 %v920, %v948
        %v961 = vsub.f32 %v925, %v951
        %v962 = vsub.f32 %v928, %v954
        %v963 = vmul.f32 %v955, 1.442695
        %v964 = vpow.pop %v963
        %v965 = vmul.f32 %v956, 1.442695
        %v966 = vpow.pop %v965
        %v967 = vmul.f32 %v957, 1.442695
        %v968 = vpow.pop %v967
        %v969 = vmul.f32 %v958, 1.442695
        %v970 = vpow.pop %v969
        %v971 = vmul.f32 %v959, 1.442695
        %v972 = vpow.pop %v971
        %v973 = vmul.f32 %v960, 1.442695
        %v974 = vpow.pop %v973
        %v975 = vmul.f32 %v961, 1.442695
        %v976 = vpow.pop %v975
        %v977 = vmul.f32 %v962, 1.442695
        %v978 = vpow.pop %v977
        %v979 = vsel %vm622, %v964, 0.0
        %980 = vadd.xlane.f32.xlu0 %v979
        %v981 = vpop.xlane.xlu0 %980
        %v982 = vsel %vm622, %v966, 0.0
        %983 = vadd.xlane.f32.xlu0 %v982
        %v984 = vpop.xlane.xlu0 %983
        %v985 = vsel %vm622, %v968, 0.0
        %986 = vadd.xlane.f32.xlu0 %v985
        %v987 = vpop.xlane.xlu0 %986
        %v988 = vsel %vm622, %v970, 0.0
        %989 = vadd.xlane.f32.xlu0 %v988
        %v990 = vpop.xlane.xlu0 %989
        %v991 = vsel %vm622, %v972, 0.0
        %992 = vadd.xlane.f32.xlu0 %v991
        %v993 = vpop.xlane.xlu0 %992
        %v994 = vsel %vm622, %v974, 0.0
        %995 = vadd.xlane.f32.xlu0 %v994
        %v996 = vpop.xlane.xlu0 %995
        %v997 = vsel %vm622, %v976, 0.0
        %998 = vadd.xlane.f32.xlu0 %v997
        %v999 = vpop.xlane.xlu0 %998
        %v1000 = vsel %vm622, %v978, 0.0
        %1001 = vadd.xlane.f32.xlu0 %v1000
        %v1002 = vpop.xlane.xlu0 %1001
        %v1003 = vrcp.pop %v981
        %v1004 = vrcp.pop %v984
        %v1005 = vrcp.pop %v987
        %v1006 = vrcp.pop %v990
        %v1007 = vrcp.pop %v993
        %v1008 = vrcp.pop %v996
        %v1009 = vrcp.pop %v999
        %v1010 = vrcp.pop %v1002
        %v1011 = vmul.f32 %v964, %v1003
        %v1012 = vmul.f32 %v966, %v1004
        %v1013 = vmul.f32 %v968, %v1005
        %v1014 = vmul.f32 %v970, %v1006
        %v1015 = vmul.f32 %v972, %v1007
        %v1016 = vmul.f32 %v974, %v1008
        %v1017 = vmul.f32 %v976, %v1009
        %v1018 = vmul.f32 %v978, %v1010
        %v1019 = vpack.c.bf16 %v1012, %v1011
        %v1020 = vpack.c.bf16 %v1014, %v1013
        %v1021 = vpack.c.bf16 %v1016, %v1015
        %v1022 = vpack.c.bf16 %v1018, %v1017
        %1023 = vrot.lane.b32.xlu0 %v520, 56
        %v1024 = vpop.permute.xlu0 %1023
        %1025 = vrot.lane.b32.xlu0 %v521, 56
        %v1026 = vpop.permute.xlu0 %1025
        %1027 = vrot.lane.b32.xlu0 %v522, 56
        %v1028 = vpop.permute.xlu0 %1027
        %1029 = vrot.lane.b32.xlu0 %v523, 56
        %v1030 = vpop.permute.xlu0 %1029
        %v1036 = vsel %vm622, %v1019, 0
        %v1039 = vsel %vm622, %v1020, 0
        %v1042 = vsel %vm622, %v1021, 0
        %v1045 = vsel %vm622, %v1022, 0
        %1047 = vmatprep.subr.bf16.mxu0 0
        %1048 = vmatpush1.bf16.msra.mxu0 0
        %1049 = vmatprep.subr.bf16.mxu0 0
        %1050 = vmatpush1.bf16.msra.mxu0 0
        %1051 = vmatprep.subr.bf16.mxu0 0
        %1052 = vmatpush1.bf16.msra.mxu0 0
        %1053 = vmatprep.subr.bf16.mxu0 0
        %1054 = vmatpush1.bf16.msra.mxu0 0
        %1055 = vmatprep.subr.bf16.mxu0 0
        %1056 = vmatpush1.bf16.msra.mxu0 %v1030
        %1057 = vmatprep.subr.bf16.mxu0 0
        %1058 = vmatpush1.bf16.msra.mxu0 %v1028
        %1059 = vmatprep.subr.bf16.mxu0 0
        %1060 = vmatpush1.bf16.msra.mxu0 %v1026
        %1061 = vmatprep.subr.bf16.mxu0 0
        %1062 = vmatpush1.bf16.msra.mxu0 %v1024
        %1063 = vmatprep.subr.bf16.mxu0 0
        %1064 = vmatpush2.bf16.msra.mxu0 0
        %1065 = vmatprep.subr.bf16.mxu0 0
        %1066 = vmatpush2.bf16.msra.mxu0 0
        %1067 = vmatprep.subr.bf16.mxu0 0
        %1068 = vmatpush2.bf16.msra.mxu0 0
        %1069 = vmatprep.subr.bf16.mxu0 0
        %1070 = vmatpush2.bf16.msra.mxu0 0
        %1071 = vmatprep.subr.bf16.mxu0 0
        %1072 = vmatpush2.bf16.msra.mxu0 0
        %1073 = vmatprep.subr.bf16.mxu0 0
        %1074 = vmatpush2.bf16.msra.mxu0 0
        %1075 = vmatprep.subr.bf16.mxu0 0
        %1076 = vmatpush2.bf16.msra.mxu0 0
        %1077 = vmatprep.subr.bf16.mxu0 0
        %1078 = vmatpush2.bf16.msra.mxu0 0
        %1079 = vmatprep.mubr.bf16.mxu0 0
        %1080 = vmatmul.mubr.bf16.gmra.mxu0 %v1036
        %v1081 = vpop.f32.mrf.mxu0
        %v1082 = vadd.f32 0.0, %v1081
        %v1083 = vpop.f32.mrf.mxu0
        %v1084 = vpop.f32.mrf.mxu0
        %v1085 = vadd.f32 0.0, %v1084
        %v1086 = vpop.f32.mrf.mxu0
        %1087 = vmatprep.mubr.bf16.mxu0 0
        %1088 = vmatmul.mubr.bf16.gmra.mxu0 %v1039
        %v1089 = vpop.f32.mrf.mxu0
        %v1090 = vadd.f32 0.0, %v1089
        %v1091 = vpop.f32.mrf.mxu0
        %v1092 = vpop.f32.mrf.mxu0
        %v1093 = vadd.f32 0.0, %v1092
        %v1094 = vpop.f32.mrf.mxu0
        %1095 = vmatprep.mubr.bf16.mxu0 0
        %1096 = vmatmul.mubr.bf16.gmra.mxu0 %v1042
        %v1097 = vpop.f32.mrf.mxu0
        %v1098 = vadd.f32 0.0, %v1097
        %v1099 = vpop.f32.mrf.mxu0
        %v1100 = vpop.f32.mrf.mxu0
        %v1101 = vadd.f32 0.0, %v1100
        %v1102 = vpop.f32.mrf.mxu0
        %1103 = vmatprep.mubr.bf16.mxu0 0
        %1104 = vmatmul.mubr.bf16.gmra.mxu0 %v1045
        %v1105 = vpop.f32.mrf.mxu0
        %v1106 = vadd.f32 0.0, %v1105
        %v1107 = vpop.f32.mrf.mxu0
        %v1108 = vpop.f32.mrf.mxu0
        %v1109 = vadd.f32 0.0, %v1108
        %v1110 = vpop.f32.mrf.mxu0
        %1111 = vdwg.mxu0
        %v1112 = vpack.c.bf16 %v1085, %v1082
        %v1113 = vpack.c.bf16 %v1093, %v1090
        %v1114 = vpack.c.bf16 %v1101, %v1098
        %v1115 = vpack.c.bf16 %v1109, %v1106
        %v1116 = vld [vmem:[%s3 + $0x4] sm:$0xf]
        %v1118 = vsel %vm532, %v1112, 0
        %v1121 = vsel %vm532, %v1113, 0
        %v1124 = vsel %vm532, %v1114, 0
        %v1127 = vsel %vm532, %v1115, 0
        %vm1129 = vcmask 1043456
        %v1131 = vsel %vm1129, %v1116, 0
        %1133 = vmatprep.subr.bf16.mxu0 0
        %1134 = vmatpush1.bf16.msra.mxu0 0
        %1135 = vmatprep.subr.bf16.mxu0 0
        %1136 = vmatpush1.bf16.msra.mxu0 0
        %1137 = vmatprep.subr.bf16.mxu0 0
        %1138 = vmatpush1.bf16.msra.mxu0 0
        %1139 = vmatprep.subr.bf16.mxu0 0
        %1140 = vmatpush1.bf16.msra.mxu0 0
        %1141 = vmatprep.subr.bf16.mxu0 0
        %1142 = vmatpush1.bf16.msra.mxu0 0
        %1143 = vmatprep.subr.bf16.mxu0 0
        %1144 = vmatpush1.bf16.msra.mxu0 0
        %1145 = vmatprep.subr.bf16.mxu0 0
        %1146 = vmatpush1.bf16.msra.mxu0 0
        %1147 = vmatprep.subr.bf16.mxu0 0
        %1148 = vmatpush1.bf16.msra.mxu0 %v1131
        %1149 = vmatprep.subr.bf16.mxu0 0
        %1150 = vmatpush2.bf16.msra.mxu0 0
        %1151 = vmatprep.subr.bf16.mxu0 0
        %1152 = vmatpush2.bf16.msra.mxu0 0
        %1153 = vmatprep.subr.bf16.mxu0 0
        %1154 = vmatpush2.bf16.msra.mxu0 0
        %1155 = vmatprep.subr.bf16.mxu0 0
        %1156 = vmatpush2.bf16.msra.mxu0 0
        %1157 = vmatprep.subr.bf16.mxu0 0
        %1158 = vmatpush2.bf16.msra.mxu0 0
        %1159 = vmatprep.subr.bf16.mxu0 0
        %1160 = vmatpush2.bf16.msra.mxu0 0
        %1161 = vmatprep.subr.bf16.mxu0 0
        %1162 = vmatpush2.bf16.msra.mxu0 0
        %1163 = vmatprep.subr.bf16.mxu0 0
        %1164 = vmatpush2.bf16.msra.mxu0 0
        %1165 = vmatprep.mubr.bf16.mxu0 0
        %1166 = vmatmul.mubr.bf16.gmra.mxu0 %v1118
        %v1167 = vpop.f32.mrf.mxu0
        %v1168 = vadd.f32 0.0, %v1167
        %v1169 = vpop.f32.mrf.mxu0
        %v1170 = vpop.f32.mrf.mxu0
        %v1171 = vadd.f32 0.0, %v1170
        %v1172 = vpop.f32.mrf.mxu0
        %1173 = vmatprep.mubr.bf16.mxu0 0
        %1174 = vmatmul.mubr.bf16.gmra.mxu0 %v1121
        %v1175 = vpop.f32.mrf.mxu0
        %v1176 = vadd.f32 0.0, %v1175
        %v1177 = vpop.f32.mrf.mxu0
        %v1178 = vpop.f32.mrf.mxu0
        %v1179 = vadd.f32 0.0, %v1178
        %v1180 = vpop.f32.mrf.mxu0
        %1181 = vmatprep.mubr.bf16.mxu0 0
        %1182 = vmatmul.mubr.bf16.gmra.mxu0 %v1124
        %v1183 = vpop.f32.mrf.mxu0
        %v1184 = vadd.f32 0.0, %v1183
        %v1185 = vpop.f32.mrf.mxu0
        %v1186 = vpop.f32.mrf.mxu0
        %v1187 = vadd.f32 0.0, %v1186
        %v1188 = vpop.f32.mrf.mxu0
        %1189 = vmatprep.mubr.bf16.mxu0 0
        %1190 = vmatmul.mubr.bf16.gmra.mxu0 %v1127
        %v1191 = vpop.f32.mrf.mxu0
        %v1192 = vadd.f32 0.0, %v1191
        %v1193 = vpop.f32.mrf.mxu0
        %v1194 = vpop.f32.mrf.mxu0
        %v1195 = vadd.f32 0.0, %v1194
        %v1196 = vpop.f32.mrf.mxu0
        %1197 = vdwg.mxu0
        %v1199 = vsel %vm532, %v804, 0
        %v1202 = vsel %vm532, %v805, 0
        %v1205 = vsel %vm532, %v806, 0
        %v1208 = vsel %vm532, %v807, 0
        %v1211 = vsel %vm1129, %v808, 0
        %1213 = vmatprep.subr.bf16.mxu0 0
        %1214 = vmatpush1.bf16.msra.mxu0 0
        %1215 = vmatprep.subr.bf16.mxu0 0
        %1216 = vmatpush1.bf16.msra.mxu0 0
        %1217 = vmatprep.subr.bf16.mxu0 0
        %1218 = vmatpush1.bf16.msra.mxu0 0
        %1219 = vmatprep.subr.bf16.mxu0 0
        %1220 = vmatpush1.bf16.msra.mxu0 0
        %1221 = vmatprep.subr.bf16.mxu0 0
        %1222 = vmatpush1.bf16.msra.mxu0 0
        %1223 = vmatprep.subr.bf16.mxu0 0
        %1224 = vmatpush1.bf16.msra.mxu0 0
        %1225 = vmatprep.subr.bf16.mxu0 0
        %1226 = vmatpush1.bf16.msra.mxu0 0
        %1227 = vmatprep.subr.bf16.mxu0 0
        %1228 = vmatpush1.bf16.msra.mxu0 %v1211
        %1229 = vmatprep.subr.bf16.mxu0 0
        %1230 = vmatpush2.bf16.msra.mxu0 0
        %1231 = vmatprep.subr.bf16.mxu0 0
        %1232 = vmatpush2.bf16.msra.mxu0 0
        %1233 = vmatprep.subr.bf16.mxu0 0
        %1234 = vmatpush2.bf16.msra.mxu0 0
        %1235 = vmatprep.subr.bf16.mxu0 0
        %1236 = vmatpush2.bf16.msra.mxu0 0
        %1237 = vmatprep.subr.bf16.mxu0 0
        %1238 = vmatpush2.bf16.msra.mxu0 0
        %1239 = vmatprep.subr.bf16.mxu0 0
        %1240 = vmatpush2.bf16.msra.mxu0 0
        %1241 = vmatprep.subr.bf16.mxu0 0
        %1242 = vmatpush2.bf16.msra.mxu0 0
        %1243 = vmatprep.subr.bf16.mxu0 0
        %1244 = vmatpush2.bf16.msra.mxu0 0
        %1245 = vmatprep.mubr.bf16.mxu0 0
        %1246 = vmatmul.mubr.bf16.gmra.mxu0 %v1199
        %v1247 = vpop.f32.mrf.mxu0
        %v1248 = vadd.f32 %v1168, %v1247
        %v1249 = vpop.f32.mrf.mxu0
        %v1250 = vpop.f32.mrf.mxu0
        %v1251 = vadd.f32 %v1171, %v1250
        %v1252 = vpop.f32.mrf.mxu0
        %1253 = vmatprep.mubr.bf16.mxu0 0
        %1254 = vmatmul.mubr.bf16.gmra.mxu0 %v1202
        %v1255 = vpop.f32.mrf.mxu0
        %v1256 = vadd.f32 %v1176, %v1255
        %v1257 = vpop.f32.mrf.mxu0
        %v1258 = vpop.f32.mrf.mxu0
        %v1259 = vadd.f32 %v1179, %v1258
        %v1260 = vpop.f32.mrf.mxu0
        %1261 = vmatprep.mubr.bf16.mxu0 0
        %1262 = vmatmul.mubr.bf16.gmra.mxu0 %v1205
        %v1263 = vpop.f32.mrf.mxu0
        %v1264 = vadd.f32 %v1184, %v1263
        %v1265 = vpop.f32.mrf.mxu0
        %v1266 = vpop.f32.mrf.mxu0
        %v1267 = vadd.f32 %v1187, %v1266
        %v1268 = vpop.f32.mrf.mxu0
        %1269 = vmatprep.mubr.bf16.mxu0 0
        %1270 = vmatmul.mubr.bf16.gmra.mxu0 %v1208
        %v1271 = vpop.f32.mrf.mxu0
        %v1272 = vadd.f32 %v1192, %v1271
        %v1273 = vpop.f32.mrf.mxu0
        %v1274 = vpop.f32.mrf.mxu0
        %v1275 = vadd.f32 %v1195, %v1274
        %v1276 = vpop.f32.mrf.mxu0
        %1277 = vdwg.mxu0
        %s1278 = scalar_lea.vmem [#allocation3], 64
        %v1279 = vld [vmem:[%s1278] sm:$0xf]
        %v1280 = vld [vmem:[%s1278 + $0x4] sm:$0xf]
        %v1281 = vld [vmem:[%s1278 + $0x8] sm:$0xf]
        %v1282 = vld [vmem:[%s1278 + $0xc] sm:$0xf]
        %v1283 = vld [vmem:[%s1278 + $0x10] sm:$0xf]
        %v1284 = vld [vmem:[%s1278 + $0x14] sm:$0xf]
        %v1285 = vld [vmem:[%s1278 + $0x18] sm:$0xf]
        %v1286 = vld [vmem:[%s1278 + $0x1c] sm:$0xf]
        %v1287 = vunpack.c.l.bf16 %v1279
        %v1288 = vunpack.c.l.bf16 %v1280
        %v1289 = vunpack.c.l.bf16 %v1281
        %v1290 = vunpack.c.l.bf16 %v1282
        %v1291 = vunpack.c.l.bf16 %v1283
        %v1292 = vunpack.c.l.bf16 %v1284
        %v1293 = vunpack.c.l.bf16 %v1285
        %v1294 = vunpack.c.l.bf16 %v1286
        %1295 = vrot.lane.b32.xlu0 %v520, 112
        %v1296 = vpop.permute.xlu0 %1295
        %1297 = vrot.lane.b32.xlu0 %v521, 112
        %v1298 = vpop.permute.xlu0 %1297
        %1299 = vrot.lane.b32.xlu0 %v522, 112
        %v1300 = vpop.permute.xlu0 %1299
        %1301 = vrot.lane.b32.xlu0 %v523, 112
        %v1302 = vpop.permute.xlu0 %1301
        %1303 = vrot.lane.b32.xlu0 %v520, 80
        %v1304 = vpop.permute.xlu0 %1303
        %1305 = vrot.lane.b32.xlu0 %v521, 80
        %v1306 = vpop.permute.xlu0 %1305
        %1307 = vrot.lane.b32.xlu0 %v522, 80
        %v1308 = vpop.permute.xlu0 %1307
        %1309 = vrot.lane.b32.xlu0 %v523, 80
        %v1310 = vpop.permute.xlu0 %1309
        %v1312 = vsel %vm532, %v1296, 0
        %v1315 = vsel %vm532, %v1298, 0
        %v1318 = vsel %vm532, %v1300, 0
        %v1321 = vsel %vm532, %v1302, 0
        %v1324 = vsel %vm532, %v1304, 0
        %v1327 = vsel %vm532, %v1306, 0
        %v1330 = vsel %vm532, %v1308, 0
        %v1333 = vsel %vm532, %v1310, 0
        %1335 = vmatprep.subr.bf16.mxu0 0
        %1336 = vmatpush1.bf16.xpose.msra.mxu0 0
        %1337 = vmatprep.subr.bf16.mxu0 0
        %1338 = vmatpush1.bf16.xpose.msra.mxu0 0
        %1339 = vmatprep.subr.bf16.mxu0 0
        %1340 = vmatpush1.bf16.xpose.msra.mxu0 0
        %1341 = vmatprep.subr.bf16.mxu0 0
        %1342 = vmatpush1.bf16.xpose.msra.mxu0 0
        %1343 = vmatprep.subr.bf16.mxu0 0
        %1344 = vmatpush1.bf16.xpose.msra.mxu0 %v1333
        %1345 = vmatprep.subr.bf16.mxu0 0
        %1346 = vmatpush1.bf16.xpose.msra.mxu0 %v1330
        %1347 = vmatprep.subr.bf16.mxu0 0
        %1348 = vmatpush1.bf16.xpose.msra.mxu0 %v1327
        %1349 = vmatprep.subr.bf16.mxu0 0
        %1350 = vmatpush1.bf16.xpose.msra.mxu0 %v1324
        %1351 = vmatprep.subr.bf16.mxu0 0
        %1352 = vmatpush2.bf16.xpose.msra.mxu0 0
        %1353 = vmatprep.subr.bf16.mxu0 0
        %1354 = vmatpush2.bf16.xpose.msra.mxu0 0
        %1355 = vmatprep.subr.bf16.mxu0 0
        %1356 = vmatpush2.bf16.xpose.msra.mxu0 0
        %1357 = vmatprep.subr.bf16.mxu0 0
        %1358 = vmatpush2.bf16.xpose.msra.mxu0 0
        %1359 = vmatprep.subr.bf16.mxu0 0
        %1360 = vmatpush2.bf16.xpose.msra.mxu0 0
        %1361 = vmatprep.subr.bf16.mxu0 0
        %1362 = vmatpush2.bf16.xpose.msra.mxu0 0
        %1363 = vmatprep.subr.bf16.mxu0 0
        %1364 = vmatpush2.bf16.xpose.msra.mxu0 0
        %1365 = vmatprep.subr.bf16.mxu0 0
        %1366 = vmatpush2.bf16.xpose.msra.mxu0 0
        %1367 = vmatprep.mubr.bf16.mxu0 0
        %1368 = vmatmul.mubr.bf16.gmra.mxu0 %v1312
        %v1369 = vpop.f32.mrf.mxu0
        %v1370 = vadd.f32 %v1287, %v1369
        %v1371 = vpop.f32.mrf.mxu0
        %v1372 = vpop.f32.mrf.mxu0
        %v1373 = vadd.f32 %v1288, %v1372
        %v1374 = vpop.f32.mrf.mxu0
        %1375 = vmatprep.mubr.bf16.mxu0 0
        %1376 = vmatmul.mubr.bf16.gmra.mxu0 %v1315
        %v1377 = vpop.f32.mrf.mxu0
        %v1378 = vadd.f32 %v1289, %v1377
        %v1379 = vpop.f32.mrf.mxu0
        %v1380 = vpop.f32.mrf.mxu0
        %v1381 = vadd.f32 %v1290, %v1380
        %v1382 = vpop.f32.mrf.mxu0
        %1383 = vmatprep.mubr.bf16.mxu0 0
        %1384 = vmatmul.mubr.bf16.gmra.mxu0 %v1318
        %v1385 = vpop.f32.mrf.mxu0
        %v1386 = vadd.f32 %v1291, %v1385
        %v1387 = vpop.f32.mrf.mxu0
        %v1388 = vpop.f32.mrf.mxu0
        %v1389 = vadd.f32 %v1292, %v1388
        %v1390 = vpop.f32.mrf.mxu0
        %1391 = vmatprep.mubr.bf16.mxu0 0
        %1392 = vmatmul.mubr.bf16.gmra.mxu0 %v1321
        %v1393 = vpop.f32.mrf.mxu0
        %v1394 = vadd.f32 %v1293, %v1393
        %v1395 = vpop.f32.mrf.mxu0
        %v1396 = vpop.f32.mrf.mxu0
        %v1397 = vadd.f32 %v1294, %v1396
        %v1398 = vpop.f32.mrf.mxu0
        %1399 = vdwg.mxu0
        %v1400 = vsel %vm622, %v1370, -inf
        %1401 = vmax.xlane.f32.xlu0 %v1400
        %v1402 = vpop.xlane.xlu0 %1401
        %v1403 = vsel %vm622, %v1373, -inf
        %1404 = vmax.xlane.f32.xlu0 %v1403
        %v1405 = vpop.xlane.xlu0 %1404
        %v1406 = vsel %vm622, %v1378, -inf
        %1407 = vmax.xlane.f32.xlu0 %v1406
        %v1408 = vpop.xlane.xlu0 %1407
        %v1409 = vsel %vm622, %v1381, -inf
        %1410 = vmax.xlane.f32.xlu0 %v1409
        %v1411 = vpop.xlane.xlu0 %1410
        %v1412 = vsel %vm622, %v1386, -inf
        %1413 = vmax.xlane.f32.xlu0 %v1412
        %v1414 = vpop.xlane.xlu0 %1413
        %v1415 = vsel %vm622, %v1389, -inf
        %1416 = vmax.xlane.f32.xlu0 %v1415
        %v1417 = vpop.xlane.xlu0 %1416
        %v1418 = vsel %vm622, %v1394, -inf
        %1419 = vmax.xlane.f32.xlu0 %v1418
        %v1420 = vpop.xlane.xlu0 %1419
        %v1421 = vsel %vm622, %v1397, -inf
        %1422 = vmax.xlane.f32.xlu0 %v1421
        %v1423 = vpop.xlane.xlu0 %1422
        %v1424 = vsub.f32 %v1370, %v1402
        %v1425 = vsub.f32 %v1373, %v1405
        %v1426 = vsub.f32 %v1378, %v1408
        %v1427 = vsub.f32 %v1381, %v1411
        %v1428 = vsub.f32 %v1386, %v1414
        %v1429 = vsub.f32 %v1389, %v1417
        %v1430 = vsub.f32 %v1394, %v1420
        %v1431 = vsub.f32 %v1397, %v1423
        %v1432 = vmul.f32 %v1424, 1.442695
        %v1433 = vpow.pop %v1432
        %v1434 = vmul.f32 %v1425, 1.442695
        %v1435 = vpow.pop %v1434
        %v1436 = vmul.f32 %v1426, 1.442695
        %v1437 = vpow.pop %v1436
        %v1438 = vmul.f32 %v1427, 1.442695
        %v1439 = vpow.pop %v1438
        %v1440 = vmul.f32 %v1428, 1.442695
        %v1441 = vpow.pop %v1440
        %v1442 = vmul.f32 %v1429, 1.442695
        %v1443 = vpow.pop %v1442
        %v1444 = vmul.f32 %v1430, 1.442695
        %v1445 = vpow.pop %v1444
        %v1446 = vmul.f32 %v1431, 1.442695
        %v1447 = vpow.pop %v1446
        %v1448 = vsel %vm622, %v1433, 0.0
        %1449 = vadd.xlane.f32.xlu0 %v1448
        %v1450 = vpop.xlane.xlu0 %1449
        %v1451 = vsel %vm622, %v1435, 0.0
        %1452 = vadd.xlane.f32.xlu0 %v1451
        %v1453 = vpop.xlane.xlu0 %1452
        %v1454 = vsel %vm622, %v1437, 0.0
        %1455 = vadd.xlane.f32.xlu0 %v1454
        %v1456 = vpop.xlane.xlu0 %1455
        %v1457 = vsel %vm622, %v1439, 0.0
        %1458 = vadd.xlane.f32.xlu0 %v1457
        %v1459 = vpop.xlane.xlu0 %1458
        %v1460 = vsel %vm622, %v1441, 0.0
        %1461 = vadd.xlane.f32.xlu0 %v1460
        %v1462 = vpop.xlane.xlu0 %1461
        %v1463 = vsel %vm622, %v1443, 0.0
        %1464 = vadd.xlane.f32.xlu0 %v1463
        %v1465 = vpop.xlane.xlu0 %1464
        %v1466 = vsel %vm622, %v1445, 0.0
        %1467 = vadd.xlane.f32.xlu0 %v1466
        %v1468 = vpop.xlane.xlu0 %1467
        %v1469 = vsel %vm622, %v1447, 0.0
        %1470 = vadd.xlane.f32.xlu0 %v1469
        %v1471 = vpop.xlane.xlu0 %1470
        %v1472 = vrcp.pop %v1450
        %v1473 = vrcp.pop %v1453
        %v1474 = vrcp.pop %v1456
        %v1475 = vrcp.pop %v1459
        %v1476 = vrcp.pop %v1462
        %v1477 = vrcp.pop %v1465
        %v1478 = vrcp.pop %v1468
        %v1479 = vrcp.pop %v1471
        %v1480 = vmul.f32 %v1433, %v1472
        %v1481 = vmul.f32 %v1435, %v1473
        %v1482 = vmul.f32 %v1437, %v1474
        %v1483 = vmul.f32 %v1439, %v1475
        %v1484 = vmul.f32 %v1441, %v1476
        %v1485 = vmul.f32 %v1443, %v1477
        %v1486 = vmul.f32 %v1445, %v1478
        %v1487 = vmul.f32 %v1447, %v1479
        %v1488 = vpack.c.bf16 %v1481, %v1480
        %v1489 = vpack.c.bf16 %v1483, %v1482
        %v1490 = vpack.c.bf16 %v1485, %v1484
        %v1491 = vpack.c.bf16 %v1487, %v1486
        %1492 = vrot.lane.b32.xlu0 %v520, 48
        %v1493 = vpop.permute.xlu0 %1492
        %1494 = vrot.lane.b32.xlu0 %v521, 48
        %v1495 = vpop.permute.xlu0 %1494
        %1496 = vrot.lane.b32.xlu0 %v522, 48
        %v1497 = vpop.permute.xlu0 %1496
        %1498 = vrot.lane.b32.xlu0 %v523, 48
        %v1499 = vpop.permute.xlu0 %1498
        %v1505 = vsel %vm622, %v1488, 0
        %v1508 = vsel %vm622, %v1489, 0
        %v1511 = vsel %vm622, %v1490, 0
        %v1514 = vsel %vm622, %v1491, 0
        %1516 = vmatprep.subr.bf16.mxu0 0
        %1517 = vmatpush1.bf16.msra.mxu0 0
        %1518 = vmatprep.subr.bf16.mxu0 0
        %1519 = vmatpush1.bf16.msra.mxu0 0
        %1520 = vmatprep.subr.bf16.mxu0 0
        %1521 = vmatpush1.bf16.msra.mxu0 0
        %1522 = vmatprep.subr.bf16.mxu0 0
        %1523 = vmatpush1.bf16.msra.mxu0 0
        %1524 = vmatprep.subr.bf16.mxu0 0
        %1525 = vmatpush1.bf16.msra.mxu0 %v1499
        %1526 = vmatprep.subr.bf16.mxu0 0
        %1527 = vmatpush1.bf16.msra.mxu0 %v1497
        %1528 = vmatprep.subr.bf16.mxu0 0
        %1529 = vmatpush1.bf16.msra.mxu0 %v1495
        %1530 = vmatprep.subr.bf16.mxu0 0
        %1531 = vmatpush1.bf16.msra.mxu0 %v1493
        %1532 = vmatprep.subr.bf16.mxu0 0
        %1533 = vmatpush2.bf16.msra.mxu0 0
        %1534 = vmatprep.subr.bf16.mxu0 0
        %1535 = vmatpush2.bf16.msra.mxu0 0
        %1536 = vmatprep.subr.bf16.mxu0 0
        %1537 = vmatpush2.bf16.msra.mxu0 0
        %1538 = vmatprep.subr.bf16.mxu0 0
        %1539 = vmatpush2.bf16.msra.mxu0 0
        %1540 = vmatprep.subr.bf16.mxu0 0
        %1541 = vmatpush2.bf16.msra.mxu0 0
        %1542 = vmatprep.subr.bf16.mxu0 0
        %1543 = vmatpush2.bf16.msra.mxu0 0
        %1544 = vmatprep.subr.bf16.mxu0 0
        %1545 = vmatpush2.bf16.msra.mxu0 0
        %1546 = vmatprep.subr.bf16.mxu0 0
        %1547 = vmatpush2.bf16.msra.mxu0 0
        %1548 = vmatprep.mubr.bf16.mxu0 0
        %1549 = vmatmul.mubr.bf16.gmra.mxu0 %v1505
        %v1550 = vpop.f32.mrf.mxu0
        %v1551 = vadd.f32 0.0, %v1550
        %v1552 = vpop.f32.mrf.mxu0
        %v1553 = vpop.f32.mrf.mxu0
        %v1554 = vadd.f32 0.0, %v1553
        %v1555 = vpop.f32.mrf.mxu0
        %1556 = vmatprep.mubr.bf16.mxu0 0
        %1557 = vmatmul.mubr.bf16.gmra.mxu0 %v1508
        %v1558 = vpop.f32.mrf.mxu0
        %v1559 = vadd.f32 0.0, %v1558
        %v1560 = vpop.f32.mrf.mxu0
        %v1561 = vpop.f32.mrf.mxu0
        %v1562 = vadd.f32 0.0, %v1561
        %v1563 = vpop.f32.mrf.mxu0
        %1564 = vmatprep.mubr.bf16.mxu0 0
        %1565 = vmatmul.mubr.bf16.gmra.mxu0 %v1511
        %v1566 = vpop.f32.mrf.mxu0
        %v1567 = vadd.f32 0.0, %v1566
        %v1568 = vpop.f32.mrf.mxu0
        %v1569 = vpop.f32.mrf.mxu0
        %v1570 = vadd.f32 0.0, %v1569
        %v1571 = vpop.f32.mrf.mxu0
        %1572 = vmatprep.mubr.bf16.mxu0 0
        %1573 = vmatmul.mubr.bf16.gmra.mxu0 %v1514
        %v1574 = vpop.f32.mrf.mxu0
        %v1575 = vadd.f32 0.0, %v1574
        %v1576 = vpop.f32.mrf.mxu0
        %v1577 = vpop.f32.mrf.mxu0
        %v1578 = vadd.f32 0.0, %v1577
        %v1579 = vpop.f32.mrf.mxu0
        %1580 = vdwg.mxu0
        %v1581 = vpack.c.bf16 %v1554, %v1551
        %v1582 = vpack.c.bf16 %v1562, %v1559
        %v1583 = vpack.c.bf16 %v1570, %v1567
        %v1584 = vpack.c.bf16 %v1578, %v1575
        %v1585 = vld [vmem:[%s3 + $0x8] sm:$0xf]
        %v1587 = vsel %vm532, %v1581, 0
        %v1590 = vsel %vm532, %v1582, 0
        %v1593 = vsel %vm532, %v1583, 0
        %v1596 = vsel %vm532, %v1584, 0
        %v1599 = vsel %vm1129, %v1585, 0
        %1601 = vmatprep.subr.bf16.mxu0 0
        %1602 = vmatpush1.bf16.msra.mxu0 0
        %1603 = vmatprep.subr.bf16.mxu0 0
        %1604 = vmatpush1.bf16.msra.mxu0 0
        %1605 = vmatprep.subr.bf16.mxu0 0
        %1606 = vmatpush1.bf16.msra.mxu0 0
        %1607 = vmatprep.subr.bf16.mxu0 0
        %1608 = vmatpush1.bf16.msra.mxu0 0
        %1609 = vmatprep.subr.bf16.mxu0 0
        %1610 = vmatpush1.bf16.msra.mxu0 0
        %1611 = vmatprep.subr.bf16.mxu0 0
        %1612 = vmatpush1.bf16.msra.mxu0 0
        %1613 = vmatprep.subr.bf16.mxu0 0
        %1614 = vmatpush1.bf16.msra.mxu0 0
        %1615 = vmatprep.subr.bf16.mxu0 0
        %1616 = vmatpush1.bf16.msra.mxu0 %v1599
        %1617 = vmatprep.subr.bf16.mxu0 0
        %1618 = vmatpush2.bf16.msra.mxu0 0
        %1619 = vmatprep.subr.bf16.mxu0 0
        %1620 = vmatpush2.bf16.msra.mxu0 0
        %1621 = vmatprep.subr.bf16.mxu0 0
        %1622 = vmatpush2.bf16.msra.mxu0 0
        %1623 = vmatprep.subr.bf16.mxu0 0
        %1624 = vmatpush2.bf16.msra.mxu0 0
        %1625 = vmatprep.subr.bf16.mxu0 0
        %1626 = vmatpush2.bf16.msra.mxu0 0
        %1627 = vmatprep.subr.bf16.mxu0 0
        %1628 = vmatpush2.bf16.msra.mxu0 0
        %1629 = vmatprep.subr.bf16.mxu0 0
        %1630 = vmatpush2.bf16.msra.mxu0 0
        %1631 = vmatprep.subr.bf16.mxu0 0
        %1632 = vmatpush2.bf16.msra.mxu0 0
        %1633 = vmatprep.mubr.bf16.mxu0 0
        %1634 = vmatmul.mubr.bf16.gmra.mxu0 %v1587
        %v1635 = vpop.f32.mrf.mxu0
        %v1636 = vadd.f32 0.0, %v1635
        %v1637 = vpop.f32.mrf.mxu0
        %v1638 = vpop.f32.mrf.mxu0
        %v1639 = vadd.f32 0.0, %v1638
        %v1640 = vpop.f32.mrf.mxu0
        %1641 = vmatprep.mubr.bf16.mxu0 0
        %1642 = vmatmul.mubr.bf16.gmra.mxu0 %v1590
        %v1643 = vpop.f32.mrf.mxu0
        %v1644 = vadd.f32 0.0, %v1643
        %v1645 = vpop.f32.mrf.mxu0
        %v1646 = vpop.f32.mrf.mxu0
        %v1647 = vadd.f32 0.0, %v1646
        %v1648 = vpop.f32.mrf.mxu0
        %1649 = vmatprep.mubr.bf16.mxu0 0
        %1650 = vmatmul.mubr.bf16.gmra.mxu0 %v1593
        %v1651 = vpop.f32.mrf.mxu0
        %v1652 = vadd.f32 0.0, %v1651
        %v1653 = vpop.f32.mrf.mxu0
        %v1654 = vpop.f32.mrf.mxu0
        %v1655 = vadd.f32 0.0, %v1654
        %v1656 = vpop.f32.mrf.mxu0
        %1657 = vmatprep.mubr.bf16.mxu0 0
        %1658 = vmatmul.mubr.bf16.gmra.mxu0 %v1596
        %v1659 = vpop.f32.mrf.mxu0
        %v1660 = vadd.f32 0.0, %v1659
        %v1661 = vpop.f32.mrf.mxu0
        %v1662 = vpop.f32.mrf.mxu0
        %v1663 = vadd.f32 0.0, %v1662
        %v1664 = vpop.f32.mrf.mxu0
        %1665 = vdwg.mxu0
        %v1666 = vadd.f32 %v1248, %v1636
        %v1667 = vadd.f32 %v1251, %v1639
        %v1668 = vadd.f32 %v1256, %v1644
        %v1669 = vadd.f32 %v1259, %v1647
        %v1670 = vadd.f32 %v1264, %v1652
        %v1671 = vadd.f32 %v1267, %v1655
        %v1672 = vadd.f32 %v1272, %v1660
        %v1673 = vadd.f32 %v1275, %v1663
        %s1674 = scalar_lea.vmem [#allocation3], 96
        %v1675 = vld [vmem:[%s1674] sm:$0xf]
        %v1676 = vld [vmem:[%s1674 + $0x4] sm:$0xf]
        %v1677 = vld [vmem:[%s1674 + $0x8] sm:$0xf]
        %v1678 = vld [vmem:[%s1674 + $0xc] sm:$0xf]
        %v1679 = vld [vmem:[%s1674 + $0x10] sm:$0xf]
        %v1680 = vld [vmem:[%s1674 + $0x14] sm:$0xf]
        %v1681 = vld [vmem:[%s1674 + $0x18] sm:$0xf]
        %v1682 = vld [vmem:[%s1674 + $0x1c] sm:$0xf]
        %v1683 = vunpack.c.l.bf16 %v1675
        %v1684 = vunpack.c.l.bf16 %v1676
        %v1685 = vunpack.c.l.bf16 %v1677
        %v1686 = vunpack.c.l.bf16 %v1678
        %v1687 = vunpack.c.l.bf16 %v1679
        %v1688 = vunpack.c.l.bf16 %v1680
        %v1689 = vunpack.c.l.bf16 %v1681
        %v1690 = vunpack.c.l.bf16 %v1682
        %1691 = vrot.lane.b32.xlu0 %v520, 104
        %v1692 = vpop.permute.xlu0 %1691
        %1693 = vrot.lane.b32.xlu0 %v521, 104
        %v1694 = vpop.permute.xlu0 %1693
        %1695 = vrot.lane.b32.xlu0 %v522, 104
        %v1696 = vpop.permute.xlu0 %1695
        %1697 = vrot.lane.b32.xlu0 %v523, 104
        %v1698 = vpop.permute.xlu0 %1697
        %1699 = vrot.lane.b32.xlu0 %v520, 72
        %v1700 = vpop.permute.xlu0 %1699
        %1701 = vrot.lane.b32.xlu0 %v521, 72
        %v1702 = vpop.permute.xlu0 %1701
        %1703 = vrot.lane.b32.xlu0 %v522, 72
        %v1704 = vpop.permute.xlu0 %1703
        %1705 = vrot.lane.b32.xlu0 %v523, 72
        %v1706 = vpop.permute.xlu0 %1705
        %v1708 = vsel %vm532, %v1692, 0
        %v1711 = vsel %vm532, %v1694, 0
        %v1714 = vsel %vm532, %v1696, 0
        %v1717 = vsel %vm532, %v1698, 0
        %v1720 = vsel %vm532, %v1700, 0
        %v1723 = vsel %vm532, %v1702, 0
        %v1726 = vsel %vm532, %v1704, 0
        %v1729 = vsel %vm532, %v1706, 0
        %1731 = vmatprep.subr.bf16.mxu0 0
        %1732 = vmatpush1.bf16.xpose.msra.mxu0 0
        %1733 = vmatprep.subr.bf16.mxu0 0
        %1734 = vmatpush1.bf16.xpose.msra.mxu0 0
        %1735 = vmatprep.subr.bf16.mxu0 0
        %1736 = vmatpush1.bf16.xpose.msra.mxu0 0
        %1737 = vmatprep.subr.bf16.mxu0 0
        %1738 = vmatpush1.bf16.xpose.msra.mxu0 0
        %1739 = vmatprep.subr.bf16.mxu0 0
        %1740 = vmatpush1.bf16.xpose.msra.mxu0 %v1729
        %1741 = vmatprep.subr.bf16.mxu0 0
        %1742 = vmatpush1.bf16.xpose.msra.mxu0 %v1726
        %1743 = vmatprep.subr.bf16.mxu0 0
        %1744 = vmatpush1.bf16.xpose.msra.mxu0 %v1723
        %1745 = vmatprep.subr.bf16.mxu0 0
        %1746 = vmatpush1.bf16.xpose.msra.mxu0 %v1720
        %1747 = vmatprep.subr.bf16.mxu0 0
        %1748 = vmatpush2.bf16.xpose.msra.mxu0 0
        %1749 = vmatprep.subr.bf16.mxu0 0
        %1750 = vmatpush2.bf16.xpose.msra.mxu0 0
        %1751 = vmatprep.subr.bf16.mxu0 0
        %1752 = vmatpush2.bf16.xpose.msra.mxu0 0
        %1753 = vmatprep.subr.bf16.mxu0 0
        %1754 = vmatpush2.bf16.xpose.msra.mxu0 0
        %1755 = vmatprep.subr.bf16.mxu0 0
        %1756 = vmatpush2.bf16.xpose.msra.mxu0 0
        %1757 = vmatprep.subr.bf16.mxu0 0
        %1758 = vmatpush2.bf16.xpose.msra.mxu0 0
        %1759 = vmatprep.subr.bf16.mxu0 0
        %1760 = vmatpush2.bf16.xpose.msra.mxu0 0
        %1761 = vmatprep.subr.bf16.mxu0 0
        %1762 = vmatpush2.bf16.xpose.msra.mxu0 0
        %1763 = vmatprep.mubr.bf16.mxu0 0
        %1764 = vmatmul.mubr.bf16.gmra.mxu0 %v1708
        %v1765 = vpop.f32.mrf.mxu0
        %v1766 = vadd.f32 %v1683, %v1765
        %v1767 = vpop.f32.mrf.mxu0
        %v1768 = vpop.f32.mrf.mxu0
        %v1769 = vadd.f32 %v1684, %v1768
        %v1770 = vpop.f32.mrf.mxu0
        %1771 = vmatprep.mubr.bf16.mxu0 0
        %1772 = vmatmul.mubr.bf16.gmra.mxu0 %v1711
        %v1773 = vpop.f32.mrf.mxu0
        %v1774 = vadd.f32 %v1685, %v1773
        %v1775 = vpop.f32.mrf.mxu0
        %v1776 = vpop.f32.mrf.mxu0
        %v1777 = vadd.f32 %v1686, %v1776
        %v1778 = vpop.f32.mrf.mxu0
        %1779 = vmatprep.mubr.bf16.mxu0 0
        %1780 = vmatmul.mubr.bf16.gmra.mxu0 %v1714
        %v1781 = vpop.f32.mrf.mxu0
        %v1782 = vadd.f32 %v1687, %v1781
        %v1783 = vpop.f32.mrf.mxu0
        %v1784 = vpop.f32.mrf.mxu0
        %v1785 = vadd.f32 %v1688, %v1784
        %v1786 = vpop.f32.mrf.mxu0
        %1787 = vmatprep.mubr.bf16.mxu0 0
        %1788 = vmatmul.mubr.bf16.gmra.mxu0 %v1717
        %v1789 = vpop.f32.mrf.mxu0
        %v1790 = vadd.f32 %v1689, %v1789
        %v1791 = vpop.f32.mrf.mxu0
        %v1792 = vpop.f32.mrf.mxu0
        %v1793 = vadd.f32 %v1690, %v1792
        %v1794 = vpop.f32.mrf.mxu0
        %1795 = vdwg.mxu0
        %v1796 = vsel %vm622, %v1766, -inf
        %1797 = vmax.xlane.f32.xlu0 %v1796
        %v1798 = vpop.xlane.xlu0 %1797
        %v1799 = vsel %vm622, %v1769, -inf
        %1800 = vmax.xlane.f32.xlu0 %v1799
        %v1801 = vpop.xlane.xlu0 %1800
        %v1802 = vsel %vm622, %v1774, -inf
        %1803 = vmax.xlane.f32.xlu0 %v1802
        %v1804 = vpop.xlane.xlu0 %1803
        %v1805 = vsel %vm622, %v1777, -inf
        %1806 = vmax.xlane.f32.xlu0 %v1805
        %v1807 = vpop.xlane.xlu0 %1806
        %v1808 = vsel %vm622, %v1782, -inf
        %1809 = vmax.xlane.f32.xlu0 %v1808
        %v1810 = vpop.xlane.xlu0 %1809
        %v1811 = vsel %vm622, %v1785, -inf
        %1812 = vmax.xlane.f32.xlu0 %v1811
        %v1813 = vpop.xlane.xlu0 %1812
        %v1814 = vsel %vm622, %v1790, -inf
        %1815 = vmax.xlane.f32.xlu0 %v1814
        %v1816 = vpop.xlane.xlu0 %1815
        %v1817 = vsel %vm622, %v1793, -inf
        %1818 = vmax.xlane.f32.xlu0 %v1817
        %v1819 = vpop.xlane.xlu0 %1818
        %v1820 = vsub.f32 %v1766, %v1798
        %v1821 = vsub.f32 %v1769, %v1801
        %v1822 = vsub.f32 %v1774, %v1804
        %v1823 = vsub.f32 %v1777, %v1807
        %v1824 = vsub.f32 %v1782, %v1810
        %v1825 = vsub.f32 %v1785, %v1813
        %v1826 = vsub.f32 %v1790, %v1816
        %v1827 = vsub.f32 %v1793, %v1819
        %v1828 = vmul.f32 %v1820, 1.442695
        %v1829 = vpow.pop %v1828
        %v1830 = vmul.f32 %v1821, 1.442695
        %v1831 = vpow.pop %v1830
        %v1832 = vmul.f32 %v1822, 1.442695
        %v1833 = vpow.pop %v1832
        %v1834 = vmul.f32 %v1823, 1.442695
        %v1835 = vpow.pop %v1834
        %v1836 = vmul.f32 %v1824, 1.442695
        %v1837 = vpow.pop %v1836
        %v1838 = vmul.f32 %v1825, 1.442695
        %v1839 = vpow.pop %v1838
        %v1840 = vmul.f32 %v1826, 1.442695
        %v1841 = vpow.pop %v1840
        %v1842 = vmul.f32 %v1827, 1.442695
        %v1843 = vpow.pop %v1842
        %v1844 = vsel %vm622, %v1829, 0.0
        %1845 = vadd.xlane.f32.xlu0 %v1844
        %v1846 = vpop.xlane.xlu0 %1845
        %v1847 = vsel %vm622, %v1831, 0.0
        %1848 = vadd.xlane.f32.xlu0 %v1847
        %v1849 = vpop.xlane.xlu0 %1848
        %v1850 = vsel %vm622, %v1833, 0.0
        %1851 = vadd.xlane.f32.xlu0 %v1850
        %v1852 = vpop.xlane.xlu0 %1851
        %v1853 = vsel %vm622, %v1835, 0.0
        %1854 = vadd.xlane.f32.xlu0 %v1853
        %v1855 = vpop.xlane.xlu0 %1854
        %v1856 = vsel %vm622, %v1837, 0.0
        %1857 = vadd.xlane.f32.xlu0 %v1856
        %v1858 = vpop.xlane.xlu0 %1857
        %v1859 = vsel %vm622, %v1839, 0.0
        %1860 = vadd.xlane.f32.xlu0 %v1859
        %v1861 = vpop.xlane.xlu0 %1860
        %v1862 = vsel %vm622, %v1841, 0.0
        %1863 = vadd.xlane.f32.xlu0 %v1862
        %v1864 = vpop.xlane.xlu0 %1863
        %v1865 = vsel %vm622, %v1843, 0.0
        %1866 = vadd.xlane.f32.xlu0 %v1865
        %v1867 = vpop.xlane.xlu0 %1866
        %v1868 = vrcp.pop %v1846
        %v1869 = vrcp.pop %v1849
        %v1870 = vrcp.pop %v1852
        %v1871 = vrcp.pop %v1855
        %v1872 = vrcp.pop %v1858
        %v1873 = vrcp.pop %v1861
        %v1874 = vrcp.pop %v1864
        %v1875 = vrcp.pop %v1867
        %v1876 = vmul.f32 %v1829, %v1868
        %v1877 = vmul.f32 %v1831, %v1869
        %v1878 = vmul.f32 %v1833, %v1870
        %v1879 = vmul.f32 %v1835, %v1871
        %v1880 = vmul.f32 %v1837, %v1872
        %v1881 = vmul.f32 %v1839, %v1873
        %v1882 = vmul.f32 %v1841, %v1874
        %v1883 = vmul.f32 %v1843, %v1875
        %v1884 = vpack.c.bf16 %v1877, %v1876
        %v1885 = vpack.c.bf16 %v1879, %v1878
        %v1886 = vpack.c.bf16 %v1881, %v1880
        %v1887 = vpack.c.bf16 %v1883, %v1882
        %1888 = vrot.lane.b32.xlu0 %v520, 40
        %v1889 = vpop.permute.xlu0 %1888
        %1890 = vrot.lane.b32.xlu0 %v521, 40
        %v1891 = vpop.permute.xlu0 %1890
        %1892 = vrot.lane.b32.xlu0 %v522, 40
        %v1893 = vpop.permute.xlu0 %1892
        %1894 = vrot.lane.b32.xlu0 %v523, 40
        %v1895 = vpop.permute.xlu0 %1894
        %v1901 = vsel %vm622, %v1884, 0
        %v1904 = vsel %vm622, %v1885, 0
        %v1907 = vsel %vm622, %v1886, 0
        %v1910 = vsel %vm622, %v1887, 0
        %1912 = vmatprep.subr.bf16.mxu0 0
        %1913 = vmatpush1.bf16.msra.mxu0 0
        %1914 = vmatprep.subr.bf16.mxu0 0
        %1915 = vmatpush1.bf16.msra.mxu0 0
        %1916 = vmatprep.subr.bf16.mxu0 0
        %1917 = vmatpush1.bf16.msra.mxu0 0
        %1918 = vmatprep.subr.bf16.mxu0 0
        %1919 = vmatpush1.bf16.msra.mxu0 0
        %1920 = vmatprep.subr.bf16.mxu0 0
        %1921 = vmatpush1.bf16.msra.mxu0 %v1895
        %1922 = vmatprep.subr.bf16.mxu0 0
        %1923 = vmatpush1.bf16.msra.mxu0 %v1893
        %1924 = vmatprep.subr.bf16.mxu0 0
        %1925 = vmatpush1.bf16.msra.mxu0 %v1891
        %1926 = vmatprep.subr.bf16.mxu0 0
        %1927 = vmatpush1.bf16.msra.mxu0 %v1889
        %1928 = vmatprep.subr.bf16.mxu0 0
        %1929 = vmatpush2.bf16.msra.mxu0 0
        %1930 = vmatprep.subr.bf16.mxu0 0
        %1931 = vmatpush2.bf16.msra.mxu0 0
        %1932 = vmatprep.subr.bf16.mxu0 0
        %1933 = vmatpush2.bf16.msra.mxu0 0
        %1934 = vmatprep.subr.bf16.mxu0 0
        %1935 = vmatpush2.bf16.msra.mxu0 0
        %1936 = vmatprep.subr.bf16.mxu0 0
        %1937 = vmatpush2.bf16.msra.mxu0 0
        %1938 = vmatprep.subr.bf16.mxu0 0
        %1939 = vmatpush2.bf16.msra.mxu0 0
        %1940 = vmatprep.subr.bf16.mxu0 0
        %1941 = vmatpush2.bf16.msra.mxu0 0
        %1942 = vmatprep.subr.bf16.mxu0 0
        %1943 = vmatpush2.bf16.msra.mxu0 0
        %1944 = vmatprep.mubr.bf16.mxu0 0
        %1945 = vmatmul.mubr.bf16.gmra.mxu0 %v1901
        %v1946 = vpop.f32.mrf.mxu0
        %v1947 = vadd.f32 0.0, %v1946
        %v1948 = vpop.f32.mrf.mxu0
        %v1949 = vpop.f32.mrf.mxu0
        %v1950 = vadd.f32 0.0, %v1949
        %v1951 = vpop.f32.mrf.mxu0
        %1952 = vmatprep.mubr.bf16.mxu0 0
        %1953 = vmatmul.mubr.bf16.gmra.mxu0 %v1904
        %v1954 = vpop.f32.mrf.mxu0
        %v1955 = vadd.f32 0.0, %v1954
        %v1956 = vpop.f32.mrf.mxu0
        %v1957 = vpop.f32.mrf.mxu0
        %v1958 = vadd.f32 0.0, %v1957
        %v1959 = vpop.f32.mrf.mxu0
        %1960 = vmatprep.mubr.bf16.mxu0 0
        %1961 = vmatmul.mubr.bf16.gmra.mxu0 %v1907
        %v1962 = vpop.f32.mrf.mxu0
        %v1963 = vadd.f32 0.0, %v1962
        %v1964 = vpop.f32.mrf.mxu0
        %v1965 = vpop.f32.mrf.mxu0
        %v1966 = vadd.f32 0.0, %v1965
        %v1967 = vpop.f32.mrf.mxu0
        %1968 = vmatprep.mubr.bf16.mxu0 0
        %1969 = vmatmul.mubr.bf16.gmra.mxu0 %v1910
        %v1970 = vpop.f32.mrf.mxu0
        %v1971 = vadd.f32 0.0, %v1970
        %v1972 = vpop.f32.mrf.mxu0
        %v1973 = vpop.f32.mrf.mxu0
        %v1974 = vadd.f32 0.0, %v1973
        %v1975 = vpop.f32.mrf.mxu0
        %1976 = vdwg.mxu0
        %v1977 = vpack.c.bf16 %v1950, %v1947
        %v1978 = vpack.c.bf16 %v1958, %v1955
        %v1979 = vpack.c.bf16 %v1966, %v1963
        %v1980 = vpack.c.bf16 %v1974, %v1971
        %v1981 = vld [vmem:[%s3 + $0xc] sm:$0xf]
        %v1983 = vsel %vm532, %v1977, 0
        %v1986 = vsel %vm532, %v1978, 0
        %v1989 = vsel %vm532, %v1979, 0
        %v1992 = vsel %vm532, %v1980, 0
        %v1995 = vsel %vm1129, %v1981, 0
        %1997 = vmatprep.subr.bf16.mxu0 0
        %1998 = vmatpush1.bf16.msra.mxu0 0
        %1999 = vmatprep.subr.bf16.mxu0 0
        %2000 = vmatpush1.bf16.msra.mxu0 0
        %2001 = vmatprep.subr.bf16.mxu0 0
        %2002 = vmatpush1.bf16.msra.mxu0 0
        %2003 = vmatprep.subr.bf16.mxu0 0
        %2004 = vmatpush1.bf16.msra.mxu0 0
        %2005 = vmatprep.subr.bf16.mxu0 0
        %2006 = vmatpush1.bf16.msra.mxu0 0
        %2007 = vmatprep.subr.bf16.mxu0 0
        %2008 = vmatpush1.bf16.msra.mxu0 0
        %2009 = vmatprep.subr.bf16.mxu0 0
        %2010 = vmatpush1.bf16.msra.mxu0 0
        %2011 = vmatprep.subr.bf16.mxu0 0
        %2012 = vmatpush1.bf16.msra.mxu0 %v1995
        %2013 = vmatprep.subr.bf16.mxu0 0
        %2014 = vmatpush2.bf16.msra.mxu0 0
        %2015 = vmatprep.subr.bf16.mxu0 0
        %2016 = vmatpush2.bf16.msra.mxu0 0
        %2017 = vmatprep.subr.bf16.mxu0 0
        %2018 = vmatpush2.bf16.msra.mxu0 0
        %2019 = vmatprep.subr.bf16.mxu0 0
        %2020 = vmatpush2.bf16.msra.mxu0 0
        %2021 = vmatprep.subr.bf16.mxu0 0
        %2022 = vmatpush2.bf16.msra.mxu0 0
        %2023 = vmatprep.subr.bf16.mxu0 0
        %2024 = vmatpush2.bf16.msra.mxu0 0
        %2025 = vmatprep.subr.bf16.mxu0 0
        %2026 = vmatpush2.bf16.msra.mxu0 0
        %2027 = vmatprep.subr.bf16.mxu0 0
        %2028 = vmatpush2.bf16.msra.mxu0 0
        %2029 = vmatprep.mubr.bf16.mxu0 0
        %2030 = vmatmul.mubr.bf16.gmra.mxu0 %v1983
        %v2031 = vpop.f32.mrf.mxu0
        %v2032 = vadd.f32 0.0, %v2031
        %v2033 = vpop.f32.mrf.mxu0
        %v2034 = vpop.f32.mrf.mxu0
        %v2035 = vadd.f32 0.0, %v2034
        %v2036 = vpop.f32.mrf.mxu0
        %2037 = vmatprep.mubr.bf16.mxu0 0
        %2038 = vmatmul.mubr.bf16.gmra.mxu0 %v1986
        %v2039 = vpop.f32.mrf.mxu0
        %v2040 = vadd.f32 0.0, %v2039
        %v2041 = vpop.f32.mrf.mxu0
        %v2042 = vpop.f32.mrf.mxu0
        %v2043 = vadd.f32 0.0, %v2042
        %v2044 = vpop.f32.mrf.mxu0
        %2045 = vmatprep.mubr.bf16.mxu0 0
        %2046 = vmatmul.mubr.bf16.gmra.mxu0 %v1989
        %v2047 = vpop.f32.mrf.mxu0
        %v2048 = vadd.f32 0.0, %v2047
        %v2049 = vpop.f32.mrf.mxu0
        %v2050 = vpop.f32.mrf.mxu0
        %v2051 = vadd.f32 0.0, %v2050
        %v2052 = vpop.f32.mrf.mxu0
        %2053 = vmatprep.mubr.bf16.mxu0 0
        %2054 = vmatmul.mubr.bf16.gmra.mxu0 %v1992
        %v2055 = vpop.f32.mrf.mxu0
        %v2056 = vadd.f32 0.0, %v2055
        %v2057 = vpop.f32.mrf.mxu0
        %v2058 = vpop.f32.mrf.mxu0
        %v2059 = vadd.f32 0.0, %v2058
        %v2060 = vpop.f32.mrf.mxu0
        %2061 = vdwg.mxu0
        %v2062 = vadd.f32 %v1666, %v2032
        %v2063 = vadd.f32 %v1667, %v2035
        %v2064 = vadd.f32 %v1668, %v2040
        %v2065 = vadd.f32 %v1669, %v2043
        %v2066 = vadd.f32 %v1670, %v2048
        %v2067 = vadd.f32 %v1671, %v2051
        %v2068 = vadd.f32 %v1672, %v2056
        %v2069 = vadd.f32 %v1673, %v2059
        %2074 = vrot.lane.b32.xlu0 %v1019, 64
        %v2075 = vpop.permute.xlu0 %2074
        %2076 = vrot.lane.b32.xlu0 %v1020, 64
        %v2077 = vpop.permute.xlu0 %2076
        %2078 = vrot.lane.b32.xlu0 %v1021, 64
        %v2079 = vpop.permute.xlu0 %2078
        %2080 = vrot.lane.b32.xlu0 %v1022, 64
        %v2081 = vpop.permute.xlu0 %2080
        %2086 = vrot.lane.b32.xlu0 %v1884, 64
        %v2087 = vpop.permute.xlu0 %2086
        %2088 = vrot.lane.b32.xlu0 %v1885, 64
        %v2089 = vpop.permute.xlu0 %2088
        %2090 = vrot.lane.b32.xlu0 %v1886, 64
        %v2091 = vpop.permute.xlu0 %2090
        %2092 = vrot.lane.b32.xlu0 %v1887, 64
        %v2093 = vpop.permute.xlu0 %2092
        %v2095 = vsel %vm622, %v711, %v2075
        %v2097 = vsel %vm622, %v712, %v2077
        %v2099 = vsel %vm622, %v713, %v2079
        %v2101 = vsel %vm622, %v714, %v2081
        %v2103 = vsel %vm622, %v1488, %v2087
        %v2105 = vsel %vm622, %v1489, %v2089
        %v2107 = vsel %vm622, %v1490, %v2091
        %v2109 = vsel %vm622, %v1491, %v2093
        %v2118 = vunpack.c.l.b16 %v2095
        %v2119 = vunpack.c.l.b16 %v2103
        %v2120 = vunpack.c.h.b16 %v2095
        %v2121 = vunpack.c.h.b16 %v2103
        %v2122 = vunpack.c.l.b16 %v2097
        %v2123 = vunpack.c.l.b16 %v2105
        %v2124 = vunpack.c.h.b16 %v2097
        %v2125 = vunpack.c.h.b16 %v2105
        %v2126 = vunpack.c.l.b16 %v2099
        %v2127 = vunpack.c.l.b16 %v2107
        %v2128 = vunpack.c.h.b16 %v2099
        %v2129 = vunpack.c.h.b16 %v2107
        %v2130 = vunpack.c.l.b16 %v2101
        %v2131 = vunpack.c.l.b16 %v2109
        %v2132 = vunpack.c.h.b16 %v2101
        %v2133 = vunpack.c.h.b16 %v2109
        %v2134 = vpack.c.b16 %v2119, %v2118
        %v2135 = vpack.c.b16 %v2121, %v2120
        %v2136 = vpack.c.b16 %v2123, %v2122
        %v2137 = vpack.c.b16 %v2125, %v2124
        %v2138 = vpack.c.b16 %v2127, %v2126
        %v2139 = vpack.c.b16 %v2129, %v2128
        %v2140 = vpack.c.b16 %v2131, %v2130
        %v2141 = vpack.c.b16 %v2133, %v2132
        %s2150 = smul.u32 0, 2
        %s2151 = smul.addr %s2150, 4
        %s2152 = scalar_lea.vmem %s295, %s2151 [#allocation6]
        %2153 = vst [vmem:[%s2152] sm:$0xff] %v2134
        %2154 = vst [vmem:[%s2152 + $0x8] sm:$0xff] %v2135
        %2155 = vst [vmem:[%s2152 + $0x10] sm:$0xff] %v2136
        %2156 = vst [vmem:[%s2152 + $0x18] sm:$0xff] %v2137
        %2157 = vst [vmem:[%s2152 + $0x20] sm:$0xff] %v2138
        %2158 = vst [vmem:[%s2152 + $0x28] sm:$0xff] %v2139
        %2159 = vst [vmem:[%s2152 + $0x30] sm:$0xff] %v2140
        %2160 = vst [vmem:[%s2152 + $0x38] sm:$0xff] %v2141
        %v2161 = vld [vmem:[%s4] sm:$0x1]
        %v2163 = vlaneseq
        %v2164 = vshrl.u32 %v2163, 7
        %v2165 = vsub.s32 0, %v2164
        %v2166 = vrot.slane %v2161, %v2165
        %v2168 = vadd.f32 %v2062, %v2166
        %v2169 = vadd.f32 %v2063, %v2166
        %v2170 = vadd.f32 %v2064, %v2166
        %v2171 = vadd.f32 %v2065, %v2166
        %v2172 = vadd.f32 %v2066, %v2166
        %v2173 = vadd.f32 %v2067, %v2166
        %v2174 = vadd.f32 %v2068, %v2166
        %v2175 = vadd.f32 %v2069, %v2166
        %2176 = vst.msk [vmem:[%s306] sm:$0xff] %vm361, %v2168
        %2177 = vst.msk [vmem:[%s306 + $0x8] sm:$0xff] %vm361, %v2169
        %2178 = vst.msk [vmem:[%s306 + $0x10] sm:$0xff] %vm361, %v2170
        %2179 = vst.msk [vmem:[%s306 + $0x18] sm:$0xff] %vm361, %v2171
        %2180 = vst.msk [vmem:[%s306 + $0x20] sm:$0xff] %vm361, %v2172
        %2181 = vst.msk [vmem:[%s306 + $0x28] sm:$0xff] %vm361, %v2173
        %2182 = vst.msk [vmem:[%s306 + $0x30] sm:$0xff] %vm361, %v2174
        %2183 = vst.msk [vmem:[%s306 + $0x38] sm:$0xff] %vm361, %v2175
        %s2184 = smul.u32 8, %s23
        %p2185 = scmp.lt.s32.totalorder %s2184, 15
        %s2186 = scalar_select %p2185, %s2184, 15
        %s2187 = smul.addr %s2186, 8
        %s2188 = scalar_lea.vmem %s6, %s2187
        %s2189 = sand.u32 %s188, 1
        %s2190 = scalar_lea.sflag [#allocation5], %s2189
        %s2191 = sand.u32 %s188, 1
        %s2192 = smul.addr %s2191, 64
        %s2193 = scalar_lea.vmem [#allocation6], %s2192
        // Predicated region
        $region49: #{tpu_custom_call.1} parent=43 // pred_check
          %p2194 = pneg %p172
        $region50: #{tpu_custom_call.1} parent=43 // pred_check_branch
          %2196 = sbr.rel (%p2194) target = $region52
        $region51: #{tpu_custom_call.1} parent=43 // pred_region
          %s2197 = smul.u32 8, %s23
        $region52: #{tpu_custom_call.1} parent=43 // pred_fallthru
          _
        // Predicated region
        $region53: #{tpu_custom_call.1} parent=43 // pred_check
          %p2198 = pneg %p198
        $region54: #{tpu_custom_call.1} parent=43 // pred_check_branch
          %2200 = sbr.rel (%p2198) target = $region56
        $region55: #{tpu_custom_call.1} parent=43 // pred_region
          %s2201 = smul.u32 8, %s23
          %s2203 = ssub.s32 1024, 1024
          %2204 = vsyncadd %s2190, %s2203
          %s2205 = smul.addr %s2201, 2
          %s2206 = smul.addr %s2205, 64
          %s2207 = scalar_lea.hbm %s7, %s2206
          %s2208 = sshll.u32 %s2193, 4
          %s2209 = int_to_ptr.vmem [resolvable:$true] %s2208
          %2214 = dma.vmem_to_hbm [thread:$0]  %s2209, 1024, %s2207, %s2190, 128, 128, 8
        $region56: #{tpu_custom_call.1} parent=43 // pred_fallthru
          _
      $region44: #{tpu_custom_call.1} parent=5 // pred_fallthru
        _
      %p2215 = scmp.le.s32.totalorder 2, %s18
      // Predicated region
      $region57: #{tpu_custom_call.1} parent=5 // pred_check
        %p2216 = pneg %p2215
      $region58: #{tpu_custom_call.1} parent=5 // pred_check_branch
        %2218 = sbr.rel (%p2216) target = $region60
      $region59: #{tpu_custom_call.1} parent=5 // pred_region
        %s2219 = ssub.s32 %s18, 2
        // Predicated region
        $region61: #{tpu_custom_call.1} parent=59 // pred_check
          %p2220 = pneg %p178
        $region62: #{tpu_custom_call.1} parent=59 // pred_check_branch
          %2222 = sbr.rel (%p2220) target = $region64
        $region63: #{tpu_custom_call.1} parent=59 // pred_region
          %s2223 = smul.u32 8, %s24
          %p2224 = scmp.lt.s32.totalorder %s2223, 15
          %s2225 = scalar_select %p2224, %s2223, 15
          %s2226 = smul.addr %s2225, 8
          %s2227 = scalar_lea.vmem %s6, %s2226
        $region64: #{tpu_custom_call.1} parent=59 // pred_fallthru
          _
        // Predicated region
        $region65: #{tpu_custom_call.1} parent=59 // pred_check
          %p2228 = pneg %p204
        $region66: #{tpu_custom_call.1} parent=59 // pred_check_branch
          %2230 = sbr.rel (%p2228) target = $region68
        $region67: #{tpu_custom_call.1} parent=59 // pred_region
          %s2231 = sand.u32 %s189, 1
          %s2232 = scalar_lea.sflag [#allocation5], %s2231
          %s2233 = sand.u32 %s189, 1
          %s2234 = smul.addr %s2233, 64
          %s2235 = scalar_lea.vmem [#allocation6], %s2234
          %2236 = dma.done %s2232, 1024
        $region68: #{tpu_custom_call.1} parent=59 // pred_fallthru
          _
      $region60: #{tpu_custom_call.1} parent=5 // pred_fallthru
        _
    $region6: #{tpu_custom_call.1} parent=1 // loop_footer
      %s22 = sadd.s32 1, %s18
    $region7: #{tpu_custom_call.1} parent=1 // loop_footer_branch
      %17 = sbr.rel target = $region3
    $region8: #{tpu_custom_call.1} parent=1 // loop_exit
      _
    %2237 = vsyncpa [#allocation4], 1
    %s2238 = scalar_lea.sflag [#allocation4], 1
    %2239 = vsyncpa %s2238, 1
    %2240 = vsyncpa [#allocation5], 1
    %s2241 = scalar_lea.sflag [#allocation5], 1
    %2242 = vsyncpa %s2241, 1

</llo_original>
